<compile_context>
chip_gen: v7x
topology: tpu7x:2x2x1
jax: 0.10.0
libtpu: 0.0.40
codegen_flags: <defaults>
</compile_context>

<pallas_src>
import functools

import jax
import jax.numpy as jnp
from jax.experimental import pallas as pl
from jax.experimental.pallas import tpu as pltpu


def mha_kernel(q_ref, k_ref, v_ref,
               wqkv_ref, bqkv_ref,
               wo_ref, bo_ref,
               o_ref,
               *, n_head, head_dim):
    # q_ref: (Bt, Lq, D) bf16   k_ref/v_ref: (Bt, Lkv, D) bf16
    # wqkv_ref: (3, D, D) bf16  bqkv_ref: (3, 1, D) f32
    # wo_ref:   (D, D)    bf16  bo_ref:   (1, D)    f32
    Bt, Lq, D = q_ref.shape
    Lkv = k_ref.shape[1]
    Mq = Bt * Lq
    Mk = Bt * Lkv
    cdt = wqkv_ref.dtype                      # MXU compute dtype (bf16)

    # Flatten (batch-tile, seq) onto the sublane axis -> tall MXU matmuls.
    q2 = q_ref[...].reshape(Mq, D)
    k2 = k_ref[...].reshape(Mk, D)
    v2 = v_ref[...].reshape(Mk, D)

    # Projections: bf16 MXU operands (already pre-cast), f32 accumulation;
    # bias add in f32.
    Q = jnp.dot(q2, wqkv_ref[0], preferred_element_type=jnp.float32) + bqkv_ref[0]
    K = jnp.dot(k2, wqkv_ref[1], preferred_element_type=jnp.float32) + bqkv_ref[1]
    V = jnp.dot(v2, wqkv_ref[2], preferred_element_type=jnp.float32) + bqkv_ref[2]

    # Fold the 1/sqrt(head_dim) score scale into Q once (identical math to
    # scaling every (Lq, Lkv) score tile).
    Q = (Q * (1.0 / float(head_dim) ** 0.5)).astype(cdt)
    K = K.astype(cdt)
    V = V.astype(cdt)

    # Per-head attention, batched over the batch tile with 3-D einsums (single
    # leading batch dim -> MXU-friendly dot_general).  Heads are independent:
    # contexts are collected and concatenated once, then fed through ONE
    # full-D output-projection matmul — no serial (Mq, D) f32 accumulator held
    # live across the unrolled head loop, no n_head partial dots + VPU adds.
    ctxs = []
    for h in range(n_head):
        lo = h * head_dim
        hi = lo + head_dim
        Qh = Q[:, lo:hi].reshape(Bt, Lq, head_dim)
        Kh = K[:, lo:hi].reshape(Bt, Lkv, head_dim)
        Vh = V[:, lo:hi].reshape(Bt, Lkv, head_dim)

        # Batched scores; contraction on the last axis of both operands ->
        # no explicit transpose of Kh.
        s = jnp.einsum("bqd,bkd->bqk", Qh, Kh,
                       preferred_element_type=jnp.float32)        # (Bt, Lq, Lkv)

        # Numerically-stable softmax along the kv axis (f32 on VPU/EUP).
        s = s - jnp.max(s, axis=-1, keepdims=True)
        p = jnp.exp(s)
        p = p * pl.reciprocal(jnp.sum(p, axis=-1, keepdims=True), approx=True)

        ctx = jnp.einsum("bqk,bkd->bqd", p.astype(cdt), Vh,
                         preferred_element_type=jnp.float32)       # (Bt, Lq, hd)
        ctxs.append(ctx.reshape(Mq, head_dim).astype(cdt))

    ctx_all = jnp.concatenate(ctxs, axis=-1)                       # (Mq, D) bf16
    out = jnp.dot(ctx_all, wo_ref[...],
                  preferred_element_type=jnp.float32) + bo_ref[...]
    o_ref[...] = out.reshape(Bt, Lq, D).astype(o_ref.dtype)


def prepare_params(params, *, compute_dtype=jnp.bfloat16):
    """One-time parameter packing (hoisted out of the per-call forward path).

    Stacks the QKV projection weights/biases into single pipelined operands and
    pre-casts weights to the MXU compute dtype (half the HBM->VMEM weight
    traffic, no per-step casts in the kernel).  Biases stay f32.
    """
    wqkv = jnp.stack([params["wq"], params["wk"], params["wv"]]).astype(compute_dtype)
    bqkv = jnp.stack([params["bq"], params["bk"], params["bv"]]).astype(jnp.float32)
    return {
        "wqkv": wqkv,                               # (3, D, D) bf16
        "bqkv": bqkv,                               # (3, 1, D) f32
        "wo": params["wo"].astype(compute_dtype),   # (D, D)    bf16
        "bo": params["bo"].astype(jnp.float32),     # (1, D)    f32
    }


def _choose_batch_tile(B, Lq, Lkv, D, *, vmem_budget_bytes=24 << 20):
    """Pick the batch tile bt (a divisor of B) such that:
       * the per-step working set fits a conservative VMEM budget (safe for
         v5e's 16 MiB and v7x's 32 MiB scoped defaults, with headroom),
       * bt*Lq lands in the 256-512 row MXU sweet spot when possible,
       * the grid keeps >= 2 steps when B allows it (two v7x TensorCores /
         v6e megacore parallel sharding)."""
    def per_step_bytes(bt):
        mq, mk = bt * Lq, bt * Lkv
        act_in = 2 * 2 * (mq + 2 * mk) * D        # bf16 in-tiles, double-buffered
        act_out = 2 * 2 * mq * D                  # out tile, double-buffered
        weights = 2 * 4 * D * D                   # bf16 wqkv + wo (single-buffered)
        proj = 4 * (mq + 2 * mk) * D              # f32 Q/K/V intermediates
        scores = 2 * 4 * mq * Lkv                 # one head's f32 scores (+exp)
        ctx = 2 * mq * D + 4 * mq * D             # bf16 ctx concat + f32 out slab
        return act_in + act_out + weights + proj + scores + ctx

    divisors = [d for d in range(1, B + 1) if B % d == 0]
    fitting = [d for d in divisors if per_step_bytes(d) <= vmem_budget_bytes] or [1]

    best = None
    for bt in fitting:                            # smallest bt reaching ~512 rows
        if bt * Lq >= 512:
            best = bt
            break
    if best is None:
        best = fitting[-1]                        # otherwise biggest that fits
    if best == B and B >= 2:                      # keep >= 2 grid steps if possible
        smaller = [d for d in fitting if d < B]
        if smaller:
            best = smaller[-1]
    return best


def multi_head_attention(q, k, v, packed, *, n_head,
                         compute_dtype=jnp.bfloat16, batch_tile=None):
    """q: (B, Lq, D), k/v: (B, Lkv, D); `packed` from prepare_params(). mask=None."""
    B, Lq, D = q.shape
    Lkv = k.shape[1]
    assert D % n_head == 0, "d_model must be divisible by n_head"
    assert k.shape == (B, Lkv, D) and v.shape == (B, Lkv, D)
    head_dim = D // n_head
    out_dtype = q.dtype

    # Stream activations in the MXU compute dtype (halves activation DMA).
    q_c = q.astype(compute_dtype)
    k_c = k.astype(compute_dtype)
    v_c = v.astype(compute_dtype)

    wqkv, bqkv, wo, bo = packed["wqkv"], packed["bqkv"], packed["wo"], packed["bo"]

    if batch_tile is None:
        bt = _choose_batch_tile(B, Lq, Lkv, D)
    else:
        bt = batch_tile
        assert B % bt == 0

    kernel = functools.partial(mha_kernel, n_head=n_head, head_dim=head_dim)

    # Advisory cost estimate so XLA can schedule neighbours to overlap with us.
    flops = 2 * D * D * (2 * B * Lq + 2 * B * Lkv) + 4 * B * Lq * Lkv * D
    transcendentals = B * n_head * Lq * Lkv
    bytes_accessed = (2 * (B * Lq * D + 2 * B * Lkv * D)   # bf16 activations in
                      + 2 * 4 * D * D                       # bf16 weights
                      + jnp.dtype(out_dtype).itemsize * B * Lq * D)
    cost = pl.CostEstimate(flops=flops, transcendentals=transcendentals,
                           bytes_accessed=bytes_accessed)

    def build(single_buffer_weights):
        if single_buffer_weights:
            # Constant-index operands are fetched once across the grid;
            # double-buffering them is pure VMEM waste -> single buffer.
            def resident(shape):
                n = len(shape)
                return pl.BlockSpec(shape, lambda b, _n=n: (0,) * _n,
                                    pipeline_mode=pl.Buffered(1))
        else:
            def resident(shape):
                n = len(shape)
                return pl.BlockSpec(shape, lambda b, _n=n: (0,) * _n)

        return pl.pallas_call(
            kernel,
            out_shape=jax.ShapeDtypeStruct((B, Lq, D), out_dtype),
            grid_spec=pltpu.PrefetchScalarGridSpec(
                num_scalar_prefetch=0,
                grid=(B // bt,),
                in_specs=[pl.BlockSpec((bt, Lq, D), lambda b: (b, 0, 0)),
                          pl.BlockSpec((bt, Lkv, D), lambda b: (b, 0, 0)),
                          pl.BlockSpec((bt, Lkv, D), lambda b: (b, 0, 0)),
                          resident((3, D, D)),
                          resident((3, 1, D)),
                          resident((D, D)),
                          resident((1, D))],
                out_specs=pl.BlockSpec((bt, Lq, D), lambda b: (b, 0, 0)),
            ),
            compiler_params=pltpu.CompilerParams(
                dimension_semantics=("parallel",),
                vmem_limit_bytes=48 << 20),
            cost_estimate=cost,
        )(q_c, k_c, v_c, wqkv, bqkv, wo, bo)

    try:
        return build(single_buffer_weights=True)
    except Exception:
        # This jax/Mosaic build rejects pipeline_mode=pl.Buffered(1); fall back
        # to default double-buffered weight blocks (correct, slightly more VMEM).
        return build(single_buffer_weights=False)


def _reference(q, k, v, params, *, n_head):
    """Pure-JAX f32 reference matching the PyTorch forward exactly (mask=None)."""
    B, Lq, D = q.shape
    Lkv = k.shape[1]
    hd = D // n_head

    def lin(x, w, b):
        return jnp.einsum("bld,df->blf", x, w) + b[0]

    Q = lin(q, params["wq"], params["bq"]).reshape(B, Lq, n_head, hd).transpose(0, 2, 1, 3)
    K = lin(k, params["wk"], params["bk"]).reshape(B, Lkv, n_head, hd).transpose(0, 2, 1, 3)
    V = lin(v, params["wv"], params["bv"]).reshape(B, Lkv, n_head, hd).transpose(0, 2, 1, 3)
    s = jnp.einsum("bhqd,bhkd->bhqk", Q, K) / (hd ** 0.5)
    attn = jax.nn.softmax(s, axis=-1)
    ctx = jnp.einsum("bhqk,bhkd->bhqd", attn, V).transpose(0, 2, 1, 3).reshape(B, Lq, D)
    return lin(ctx, params["wo"], params["bo"])


if __name__ == "__main__":
    # Small shapes consistent with the module.
    B, Lq, Lkv = 2, 8, 8
    d_model, n_head = 32, 4

    key = jax.random.PRNGKey(0)
    ks = jax.random.split(key, 11)

    def init_w(kk):
        return jax.random.normal(kk, (d_model, d_model), jnp.float32) * 0.1

    def init_b(kk):
        return jax.random.normal(kk, (1, d_model), jnp.float32) * 0.1

    params = {
        "wq": init_w(ks[0]), "bq": init_b(ks[1]),
        "wk": init_w(ks[2]), "bk": init_b(ks[3]),
        "wv": init_w(ks[4]), "bv": init_b(ks[5]),
        "wo": init_w(ks[6]), "bo": init_b(ks[7]),
    }

    q = jax.random.normal(ks[8], (B, Lq, d_model), jnp.float32)
    k = jax.random.normal(ks[9], (B, Lkv, d_model), jnp.float32)
    v = jax.random.normal(ks[10], (B, Lkv, d_model), jnp.float32)

    packed = prepare_params(params)          # one-time weight stacking + bf16 cast
    out = multi_head_attention(q, k, v, packed, n_head=n_head)
    out = jax.block_until_ready(out)

    ref = _reference(q, k, v, params, n_head=n_head)
    assert out.shape == (B, Lq, d_model)
    # bf16 MXU operands with f32 accumulation -> loosen tolerance vs. f32 ref.
    assert jnp.allclose(out, ref, atol=2e-2, rtol=2e-2), "mismatch vs reference"

    print("KERNEL_OK")
</pallas_src>

<mosaic_0001>
module attributes {stable_mosaic.version = 11 : i64} {
  func.func @mha_kernel(%arg0: i32, %arg1: memref<1x8x32xbf16, #tpu.memory_space<vmem>>, %arg2: memref<1x8x32xbf16, #tpu.memory_space<vmem>>, %arg3: memref<1x8x32xbf16, #tpu.memory_space<vmem>>, %arg4: memref<3x32x32xbf16, #tpu.memory_space<vmem>>, %arg5: memref<3x1x32xf32, #tpu.memory_space<vmem>>, %arg6: memref<32x32xbf16, #tpu.memory_space<vmem>>, %arg7: memref<1x32xf32, #tpu.memory_space<vmem>>, %arg8: memref<1x8x32xf32, #tpu.memory_space<vmem>>) attributes {dimension_semantics = [#tpu.dimension_semantics<parallel>], iteration_bounds = array<i64: 2>, scalar_prefetch = 0 : i64, scratch_operands = 0 : i64, tpu.core_type = #tpu.core_type<tc>, window_params = [{transform_indices = @transform_0, window_bounds = array<i64: 1, 8, 32>}, {transform_indices = @transform_1, window_bounds = array<i64: 1, 8, 32>}, {transform_indices = @transform_2, window_bounds = array<i64: 1, 8, 32>}, {pipeline_mode = #tpu.pipeline_mode<synchronous>, transform_indices = @transform_3, window_bounds = array<i64: 3, 32, 32>}, {pipeline_mode = #tpu.pipeline_mode<synchronous>, transform_indices = @transform_4, window_bounds = array<i64: 3, 1, 32>}, {pipeline_mode = #tpu.pipeline_mode<synchronous>, transform_indices = @transform_5, window_bounds = array<i64: 32, 32>}, {pipeline_mode = #tpu.pipeline_mode<synchronous>, transform_indices = @transform_6, window_bounds = array<i64: 1, 32>}, {transform_indices = @transform_7, window_bounds = array<i64: 1, 8, 32>}]} {
    %c0 = arith.constant 0 : index
    %c0_0 = arith.constant 0 : index
    %c0_1 = arith.constant 0 : index
    %0 = vector.load %arg1[%c0, %c0_0, %c0_1] : memref<1x8x32xbf16, #tpu.memory_space<vmem>>, vector<1x8x32xbf16>
    %1 = vector.shape_cast %0 : vector<1x8x32xbf16> to vector<8x32xbf16>
    %c0_2 = arith.constant 0 : index
    %c0_3 = arith.constant 0 : index
    %c0_4 = arith.constant 0 : index
    %2 = vector.load %arg2[%c0_2, %c0_3, %c0_4] : memref<1x8x32xbf16, #tpu.memory_space<vmem>>, vector<1x8x32xbf16>
    %3 = vector.shape_cast %2 : vector<1x8x32xbf16> to vector<8x32xbf16>
    %c0_5 = arith.constant 0 : index
    %c0_6 = arith.constant 0 : index
    %c0_7 = arith.constant 0 : index
    %4 = vector.load %arg3[%c0_5, %c0_6, %c0_7] : memref<1x8x32xbf16, #tpu.memory_space<vmem>>, vector<1x8x32xbf16>
    %5 = vector.shape_cast %4 : vector<1x8x32xbf16> to vector<8x32xbf16>
    %c0_8 = arith.constant 0 : index
    %c0_9 = arith.constant 0 : index
    %c0_10 = arith.constant 0 : index
    %6 = vector.load %arg4[%c0_8, %c0_9, %c0_10] : memref<3x32x32xbf16, #tpu.memory_space<vmem>>, vector<1x32x32xbf16>
    %7 = vector.shape_cast %6 : vector<1x32x32xbf16> to vector<32x32xbf16>
    %cst = arith.constant dense<0.000000e+00> : vector<8x32xf32>
    %8 = tpu.matmul %1, %7, %cst {dimension_numbers = #tpu.dot_dimension_numbers<[1], [0], [0], [1], [0, 0, 1, 1], [], []>} : vector<8x32xbf16>, vector<32x32xbf16>, vector<8x32xf32> -> vector<8x32xf32>
    %c0_11 = arith.constant 0 : index
    %c0_12 = arith.constant 0 : index
    %c0_13 = arith.constant 0 : index
    %9 = vector.load %arg5[%c0_11, %c0_12, %c0_13] : memref<3x1x32xf32, #tpu.memory_space<vmem>>, vector<1x1x32xf32>
    %10 = vector.shape_cast %9 : vector<1x1x32xf32> to vector<1x32xf32>
    %11 = vector.broadcast %10 : vector<1x32xf32> to vector<8x32xf32>
    %12 = arith.addf %8, %11 : vector<8x32xf32>
    %c1 = arith.constant 1 : index
    %c0_14 = arith.constant 0 : index
    %c0_15 = arith.constant 0 : index
    %13 = vector.load %arg4[%c1, %c0_14, %c0_15] : memref<3x32x32xbf16, #tpu.memory_space<vmem>>, vector<1x32x32xbf16>
    %14 = vector.shape_cast %13 : vector<1x32x32xbf16> to vector<32x32xbf16>
    %cst_16 = arith.constant dense<0.000000e+00> : vector<8x32xf32>
    %15 = tpu.matmul %3, %14, %cst_16 {dimension_numbers = #tpu.dot_dimension_numbers<[1], [0], [0], [1], [0, 0, 1, 1], [], []>} : vector<8x32xbf16>, vector<32x32xbf16>, vector<8x32xf32> -> vector<8x32xf32>
    %c1_17 = arith.constant 1 : index
    %c0_18 = arith.constant 0 : index
    %c0_19 = arith.constant 0 : index
    %16 = vector.load %arg5[%c1_17, %c0_18, %c0_19] : memref<3x1x32xf32, #tpu.memory_space<vmem>>, vector<1x1x32xf32>
    %17 = vector.shape_cast %16 : vector<1x1x32xf32> to vector<1x32xf32>
    %18 = vector.broadcast %17 : vector<1x32xf32> to vector<8x32xf32>
    %19 = arith.addf %15, %18 : vector<8x32xf32>
    %c2 = arith.constant 2 : index
    %c0_20 = arith.constant 0 : index
    %c0_21 = arith.constant 0 : index
    %20 = vector.load %arg4[%c2, %c0_20, %c0_21] : memref<3x32x32xbf16, #tpu.memory_space<vmem>>, vector<1x32x32xbf16>
    %21 = vector.shape_cast %20 : vector<1x32x32xbf16> to vector<32x32xbf16>
    %cst_22 = arith.constant dense<0.000000e+00> : vector<8x32xf32>
    %22 = tpu.matmul %5, %21, %cst_22 {dimension_numbers = #tpu.dot_dimension_numbers<[1], [0], [0], [1], [0, 0, 1, 1], [], []>} : vector<8x32xbf16>, vector<32x32xbf16>, vector<8x32xf32> -> vector<8x32xf32>
    %c2_23 = arith.constant 2 : index
    %c0_24 = arith.constant 0 : index
    %c0_25 = arith.constant 0 : index
    %23 = vector.load %arg5[%c2_23, %c0_24, %c0_25] : memref<3x1x32xf32, #tpu.memory_space<vmem>>, vector<1x1x32xf32>
    %24 = vector.shape_cast %23 : vector<1x1x32xf32> to vector<1x32xf32>
    %25 = vector.broadcast %24 : vector<1x32xf32> to vector<8x32xf32>
    %26 = arith.addf %22, %25 : vector<8x32xf32>
    %cst_26 = arith.constant 0.353553385 : f32
    %27 = vector.broadcast %cst_26 : f32 to vector<8x32xf32>
    %28 = arith.mulf %12, %27 : vector<8x32xf32>
    %29 = arith.truncf %28 : vector<8x32xf32> to vector<8x32xbf16>
    %30 = arith.truncf %19 : vector<8x32xf32> to vector<8x32xbf16>
    %31 = arith.truncf %26 : vector<8x32xf32> to vector<8x32xbf16>
    %32 = vector.extract_strided_slice %29 {offsets = [0, 0], sizes = [8, 8], strides = [1, 1]} : vector<8x32xbf16> to vector<8x8xbf16>
    %33 = vector.shape_cast %32 : vector<8x8xbf16> to vector<1x8x8xbf16>
    %34 = vector.extract_strided_slice %30 {offsets = [0, 0], sizes = [8, 8], strides = [1, 1]} : vector<8x32xbf16> to vector<8x8xbf16>
    %35 = vector.shape_cast %34 : vector<8x8xbf16> to vector<1x8x8xbf16>
    %36 = vector.extract_strided_slice %31 {offsets = [0, 0], sizes = [8, 8], strides = [1, 1]} : vector<8x32xbf16> to vector<8x8xbf16>
    %37 = vector.shape_cast %36 : vector<8x8xbf16> to vector<1x8x8xbf16>
    "tpu.trace_start"() <{level = 10 : i32, message = "bqd,bkd->bqk"}> : () -> ()
    %cst_27 = arith.constant dense<0.000000e+00> : vector<1x8x8xf32>
    %38 = tpu.matmul %33, %35, %cst_27 {dimension_numbers = #tpu.dot_dimension_numbers<[2], [2], [1], [1], [0, 0, 0, 1, 1, 1], [0], [0]>} : vector<1x8x8xbf16>, vector<1x8x8xbf16>, vector<1x8x8xf32> -> vector<1x8x8xf32>
    "tpu.trace_stop"() : () -> ()
    %cst_28 = arith.constant dense<0xFF800000> : vector<1x8xf32>
    %39 = vector.multi_reduction <maximumf>, %38, %cst_28 [2] : vector<1x8x8xf32> to vector<1x8xf32>
    %40 = vector.shape_cast %39 : vector<1x8xf32> to vector<1x8x1xf32>
    %41 = vector.broadcast %40 : vector<1x8x1xf32> to vector<1x8x8xf32>
    %42 = arith.subf %38, %41 : vector<1x8x8xf32>
    %43 = math.exp %42 : vector<1x8x8xf32>
    %cst_29 = arith.constant dense<0.000000e+00> : vector<1x8xf32>
    %44 = vector.multi_reduction <add>, %43, %cst_29 [2] : vector<1x8x8xf32> to vector<1x8xf32>
    %45 = vector.shape_cast %44 : vector<1x8xf32> to vector<1x8x1xf32>
    %46 = tpu.reciprocal %45 {approx = true} : vector<1x8x1xf32> -> vector<1x8x1xf32>
    %47 = vector.broadcast %46 : vector<1x8x1xf32> to vector<1x8x8xf32>
    %48 = arith.mulf %43, %47 : vector<1x8x8xf32>
    %49 = arith.truncf %48 : vector<1x8x8xf32> to vector<1x8x8xbf16>
    "tpu.trace_start"() <{level = 10 : i32, message = "bqk,bkd->bqd"}> : () -> ()
    %cst_30 = arith.constant dense<0.000000e+00> : vector<1x8x8xf32>
    %50 = tpu.matmul %49, %37, %cst_30 {dimension_numbers = #tpu.dot_dimension_numbers<[2], [1], [1], [2], [0, 0, 0, 1, 1, 2], [0], [0]>} : vector<1x8x8xbf16>, vector<1x8x8xbf16>, vector<1x8x8xf32> -> vector<1x8x8xf32>
    "tpu.trace_stop"() : () -> ()
    %51 = vector.shape_cast %50 : vector<1x8x8xf32> to vector<8x8xf32>
    %52 = arith.truncf %51 : vector<8x8xf32> to vector<8x8xbf16>
    %53 = vector.extract_strided_slice %29 {offsets = [0, 8], sizes = [8, 8], strides = [1, 1]} : vector<8x32xbf16> to vector<8x8xbf16>
    %54 = vector.shape_cast %53 : vector<8x8xbf16> to vector<1x8x8xbf16>
    %55 = vector.extract_strided_slice %30 {offsets = [0, 8], sizes = [8, 8], strides = [1, 1]} : vector<8x32xbf16> to vector<8x8xbf16>
    %56 = vector.shape_cast %55 : vector<8x8xbf16> to vector<1x8x8xbf16>
    %57 = vector.extract_strided_slice %31 {offsets = [0, 8], sizes = [8, 8], strides = [1, 1]} : vector<8x32xbf16> to vector<8x8xbf16>
    %58 = vector.shape_cast %57 : vector<8x8xbf16> to vector<1x8x8xbf16>
    "tpu.trace_start"() <{level = 10 : i32, message = "bqd,bkd->bqk"}> : () -> ()
    %cst_31 = arith.constant dense<0.000000e+00> : vector<1x8x8xf32>
    %59 = tpu.matmul %54, %56, %cst_31 {dimension_numbers = #tpu.dot_dimension_numbers<[2], [2], [1], [1], [0, 0, 0, 1, 1, 1], [0], [0]>} : vector<1x8x8xbf16>, vector<1x8x8xbf16>, vector<1x8x8xf32> -> vector<1x8x8xf32>
    "tpu.trace_stop"() : () -> ()
    %cst_32 = arith.constant dense<0xFF800000> : vector<1x8xf32>
    %60 = vector.multi_reduction <maximumf>, %59, %cst_32 [2] : vector<1x8x8xf32> to vector<1x8xf32>
    %61 = vector.shape_cast %60 : vector<1x8xf32> to vector<1x8x1xf32>
    %62 = vector.broadcast %61 : vector<1x8x1xf32> to vector<1x8x8xf32>
    %63 = arith.subf %59, %62 : vector<1x8x8xf32>
    %64 = math.exp %63 : vector<1x8x8xf32>
    %cst_33 = arith.constant dense<0.000000e+00> : vector<1x8xf32>
    %65 = vector.multi_reduction <add>, %64, %cst_33 [2] : vector<1x8x8xf32> to vector<1x8xf32>
    %66 = vector.shape_cast %65 : vector<1x8xf32> to vector<1x8x1xf32>
    %67 = tpu.reciprocal %66 {approx = true} : vector<1x8x1xf32> -> vector<1x8x1xf32>
    %68 = vector.broadcast %67 : vector<1x8x1xf32> to vector<1x8x8xf32>
    %69 = arith.mulf %64, %68 : vector<1x8x8xf32>
    %70 = arith.truncf %69 : vector<1x8x8xf32> to vector<1x8x8xbf16>
    "tpu.trace_start"() <{level = 10 : i32, message = "bqk,bkd->bqd"}> : () -> ()
    %cst_34 = arith.constant dense<0.000000e+00> : vector<1x8x8xf32>
    %71 = tpu.matmul %70, %58, %cst_34 {dimension_numbers = #tpu.dot_dimension_numbers<[2], [1], [1], [2], [0, 0, 0, 1, 1, 2], [0], [0]>} : vector<1x8x8xbf16>, vector<1x8x8xbf16>, vector<1x8x8xf32> -> vector<1x8x8xf32>
    "tpu.trace_stop"() : () -> ()
    %72 = vector.shape_cast %71 : vector<1x8x8xf32> to vector<8x8xf32>
    %73 = arith.truncf %72 : vector<8x8xf32> to vector<8x8xbf16>
    %74 = vector.extract_strided_slice %29 {offsets = [0, 16], sizes = [8, 8], strides = [1, 1]} : vector<8x32xbf16> to vector<8x8xbf16>
    %75 = vector.shape_cast %74 : vector<8x8xbf16> to vector<1x8x8xbf16>
    %76 = vector.extract_strided_slice %30 {offsets = [0, 16], sizes = [8, 8], strides = [1, 1]} : vector<8x32xbf16> to vector<8x8xbf16>
    %77 = vector.shape_cast %76 : vector<8x8xbf16> to vector<1x8x8xbf16>
    %78 = vector.extract_strided_slice %31 {offsets = [0, 16], sizes = [8, 8], strides = [1, 1]} : vector<8x32xbf16> to vector<8x8xbf16>
    %79 = vector.shape_cast %78 : vector<8x8xbf16> to vector<1x8x8xbf16>
    "tpu.trace_start"() <{level = 10 : i32, message = "bqd,bkd->bqk"}> : () -> ()
    %cst_35 = arith.constant dense<0.000000e+00> : vector<1x8x8xf32>
    %80 = tpu.matmul %75, %77, %cst_35 {dimension_numbers = #tpu.dot_dimension_numbers<[2], [2], [1], [1], [0, 0, 0, 1, 1, 1], [0], [0]>} : vector<1x8x8xbf16>, vector<1x8x8xbf16>, vector<1x8x8xf32> -> vector<1x8x8xf32>
    "tpu.trace_stop"() : () -> ()
    %cst_36 = arith.constant dense<0xFF800000> : vector<1x8xf32>
    %81 = vector.multi_reduction <maximumf>, %80, %cst_36 [2] : vector<1x8x8xf32> to vector<1x8xf32>
    %82 = vector.shape_cast %81 : vector<1x8xf32> to vector<1x8x1xf32>
    %83 = vector.broadcast %82 : vector<1x8x1xf32> to vector<1x8x8xf32>
    %84 = arith.subf %80, %83 : vector<1x8x8xf32>
    %85 = math.exp %84 : vector<1x8x8xf32>
    %cst_37 = arith.constant dense<0.000000e+00> : vector<1x8xf32>
    %86 = vector.multi_reduction <add>, %85, %cst_37 [2] : vector<1x8x8xf32> to vector<1x8xf32>
    %87 = vector.shape_cast %86 : vector<1x8xf32> to vector<1x8x1xf32>
    %88 = tpu.reciprocal %87 {approx = true} : vector<1x8x1xf32> -> vector<1x8x1xf32>
    %89 = vector.broadcast %88 : vector<1x8x1xf32> to vector<1x8x8xf32>
    %90 = arith.mulf %85, %89 : vector<1x8x8xf32>
    %91 = arith.truncf %90 : vector<1x8x8xf32> to vector<1x8x8xbf16>
    "tpu.trace_start"() <{level = 10 : i32, message = "bqk,bkd->bqd"}> : () -> ()
    %cst_38 = arith.constant dense<0.000000e+00> : vector<1x8x8xf32>
    %92 = tpu.matmul %91, %79, %cst_38 {dimension_numbers = #tpu.dot_dimension_numbers<[2], [1], [1], [2], [0, 0, 0, 1, 1, 2], [0], [0]>} : vector<1x8x8xbf16>, vector<1x8x8xbf16>, vector<1x8x8xf32> -> vector<1x8x8xf32>
    "tpu.trace_stop"() : () -> ()
    %93 = vector.shape_cast %92 : vector<1x8x8xf32> to vector<8x8xf32>
    %94 = arith.truncf %93 : vector<8x8xf32> to vector<8x8xbf16>
    %95 = vector.extract_strided_slice %29 {offsets = [0, 24], sizes = [8, 8], strides = [1, 1]} : vector<8x32xbf16> to vector<8x8xbf16>
    %96 = vector.shape_cast %95 : vector<8x8xbf16> to vector<1x8x8xbf16>
    %97 = vector.extract_strided_slice %30 {offsets = [0, 24], sizes = [8, 8], strides = [1, 1]} : vector<8x32xbf16> to vector<8x8xbf16>
    %98 = vector.shape_cast %97 : vector<8x8xbf16> to vector<1x8x8xbf16>
    %99 = vector.extract_strided_slice %31 {offsets = [0, 24], sizes = [8, 8], strides = [1, 1]} : vector<8x32xbf16> to vector<8x8xbf16>
    %100 = vector.shape_cast %99 : vector<8x8xbf16> to vector<1x8x8xbf16>
    "tpu.trace_start"() <{level = 10 : i32, message = "bqd,bkd->bqk"}> : () -> ()
    %cst_39 = arith.constant dense<0.000000e+00> : vector<1x8x8xf32>
    %101 = tpu.matmul %96, %98, %cst_39 {dimension_numbers = #tpu.dot_dimension_numbers<[2], [2], [1], [1], [0, 0, 0, 1, 1, 1], [0], [0]>} : vector<1x8x8xbf16>, vector<1x8x8xbf16>, vector<1x8x8xf32> -> vector<1x8x8xf32>
    "tpu.trace_stop"() : () -> ()
    %cst_40 = arith.constant dense<0xFF800000> : vector<1x8xf32>
    %102 = vector.multi_reduction <maximumf>, %101, %cst_40 [2] : vector<1x8x8xf32> to vector<1x8xf32>
    %103 = vector.shape_cast %102 : vector<1x8xf32> to vector<1x8x1xf32>
    %104 = vector.broadcast %103 : vector<1x8x1xf32> to vector<1x8x8xf32>
    %105 = arith.subf %101, %104 : vector<1x8x8xf32>
    %106 = math.exp %105 : vector<1x8x8xf32>
    %cst_41 = arith.constant dense<0.000000e+00> : vector<1x8xf32>
    %107 = vector.multi_reduction <add>, %106, %cst_41 [2] : vector<1x8x8xf32> to vector<1x8xf32>
    %108 = vector.shape_cast %107 : vector<1x8xf32> to vector<1x8x1xf32>
    %109 = tpu.reciprocal %108 {approx = true} : vector<1x8x1xf32> -> vector<1x8x1xf32>
    %110 = vector.broadcast %109 : vector<1x8x1xf32> to vector<1x8x8xf32>
    %111 = arith.mulf %106, %110 : vector<1x8x8xf32>
    %112 = arith.truncf %111 : vector<1x8x8xf32> to vector<1x8x8xbf16>
    "tpu.trace_start"() <{level = 10 : i32, message = "bqk,bkd->bqd"}> : () -> ()
    %cst_42 = arith.constant dense<0.000000e+00> : vector<1x8x8xf32>
    %113 = tpu.matmul %112, %100, %cst_42 {dimension_numbers = #tpu.dot_dimension_numbers<[2], [1], [1], [2], [0, 0, 0, 1, 1, 2], [0], [0]>} : vector<1x8x8xbf16>, vector<1x8x8xbf16>, vector<1x8x8xf32> -> vector<1x8x8xf32>
    "tpu.trace_stop"() : () -> ()
    %114 = vector.shape_cast %113 : vector<1x8x8xf32> to vector<8x8xf32>
    %115 = arith.truncf %114 : vector<8x8xf32> to vector<8x8xbf16>
    %116 = tpu.concatenate %52, %73, %94, %115 in 1 : vector<8x8xbf16>, vector<8x8xbf16>, vector<8x8xbf16>, vector<8x8xbf16> -> vector<8x32xbf16>
    %c0_43 = arith.constant 0 : index
    %c0_44 = arith.constant 0 : index
    %117 = vector.load %arg6[%c0_43, %c0_44] : memref<32x32xbf16, #tpu.memory_space<vmem>>, vector<32x32xbf16>
    %cst_45 = arith.constant dense<0.000000e+00> : vector<8x32xf32>
    %118 = tpu.matmul %116, %117, %cst_45 {dimension_numbers = #tpu.dot_dimension_numbers<[1], [0], [0], [1], [0, 0, 1, 1], [], []>} : vector<8x32xbf16>, vector<32x32xbf16>, vector<8x32xf32> -> vector<8x32xf32>
    %c0_46 = arith.constant 0 : index
    %c0_47 = arith.constant 0 : index
    %119 = vector.load %arg7[%c0_46, %c0_47] : memref<1x32xf32, #tpu.memory_space<vmem>>, vector<1x32xf32>
    %120 = vector.broadcast %119 : vector<1x32xf32> to vector<8x32xf32>
    %121 = arith.addf %118, %120 : vector<8x32xf32>
    %122 = vector.shape_cast %121 : vector<8x32xf32> to vector<1x8x32xf32>
    %c0_48 = arith.constant 0 : index
    %c0_49 = arith.constant 0 : index
    %c0_50 = arith.constant 0 : index
    %123 = vector.load %arg8[%c0_48, %c0_49, %c0_50] : memref<1x8x32xf32, #tpu.memory_space<vmem>>, vector<1x8x32xf32>
    tpu.vector_store %arg8[%c0_48, %c0_49, %c0_50], %122 {strides = array<i32>} : memref<1x8x32xf32, #tpu.memory_space<vmem>>, vector<1x8x32xf32>,
    return
  }
  func.func @transform_0(%arg0: i32) -> (i32, i32, i32) {
    %c0_i32 = arith.constant 0 : i32
    %c0_i32_0 = arith.constant 0 : i32
    %c0_i32_1 = arith.constant 0 : i32
    return %arg0, %c0_i32, %c0_i32_0 : i32, i32, i32
  }
  func.func @transform_1(%arg0: i32) -> (i32, i32, i32) {
    %c0_i32 = arith.constant 0 : i32
    %c0_i32_0 = arith.constant 0 : i32
    %c0_i32_1 = arith.constant 0 : i32
    return %arg0, %c0_i32, %c0_i32_0 : i32, i32, i32
  }
  func.func @transform_2(%arg0: i32) -> (i32, i32, i32) {
    %c0_i32 = arith.constant 0 : i32
    %c0_i32_0 = arith.constant 0 : i32
    %c0_i32_1 = arith.constant 0 : i32
    return %arg0, %c0_i32, %c0_i32_0 : i32, i32, i32
  }
  func.func @transform_3(%arg0: i32) -> (i32, i32, i32) {
    %c0_i32 = arith.constant 0 : i32
    %c0_i32_0 = arith.constant 0 : i32
    %c0_i32_1 = arith.constant 0 : i32
    %c0_i32_2 = arith.constant 0 : i32
    return %c0_i32, %c0_i32_0, %c0_i32_1 : i32, i32, i32
  }
  func.func @transform_4(%arg0: i32) -> (i32, i32, i32) {
    %c0_i32 = arith.constant 0 : i32
    %c0_i32_0 = arith.constant 0 : i32
    %c0_i32_1 = arith.constant 0 : i32
    %c0_i32_2 = arith.constant 0 : i32
    return %c0_i32, %c0_i32_0, %c0_i32_1 : i32, i32, i32
  }
  func.func @transform_5(%arg0: i32) -> (i32, i32) {
    %c0_i32 = arith.constant 0 : i32
    %c0_i32_0 = arith.constant 0 : i32
    %c0_i32_1 = arith.constant 0 : i32
    return %c0_i32, %c0_i32_0 : i32, i32
  }
  func.func @transform_6(%arg0: i32) -> (i32, i32) {
    %c0_i32 = arith.constant 0 : i32
    %c0_i32_0 = arith.constant 0 : i32
    %c0_i32_1 = arith.constant 0 : i32
    return %c0_i32, %c0_i32_0 : i32, i32
  }
  func.func @transform_7(%arg0: i32) -> (i32, i32, i32) {
    %c0_i32 = arith.constant 0 : i32
    %c0_i32_0 = arith.constant 0 : i32
    %c0_i32_1 = arith.constant 0 : i32
    return %arg0, %c0_i32, %c0_i32_0 : i32, i32, i32
  }
}

module attributes {stable_mosaic.version = 11 : i64} {
  func.func @mha_kernel(%arg0: i32, %arg1: memref<1x8x32xbf16, #tpu.memory_space<vmem>>, %arg2: memref<1x8x32xbf16, #tpu.memory_space<vmem>>, %arg3: memref<1x8x32xbf16, #tpu.memory_space<vmem>>, %arg4: memref<3x32x32xbf16, #tpu.memory_space<vmem>>, %arg5: memref<3x1x32xf32, #tpu.memory_space<vmem>>, %arg6: memref<32x32xbf16, #tpu.memory_space<vmem>>, %arg7: memref<1x32xf32, #tpu.memory_space<vmem>>, %arg8: memref<1x8x32xf32, #tpu.memory_space<vmem>>) attributes {dimension_semantics = [#tpu.dimension_semantics<parallel>], iteration_bounds = array<i64: 2>, scalar_prefetch = 0 : i64, scratch_operands = 0 : i64, tpu.core_type = #tpu.core_type<tc>, window_params = [{transform_indices = @transform_0, window_bounds = array<i64: 1, 8, 32>}, {transform_indices = @transform_1, window_bounds = array<i64: 1, 8, 32>}, {transform_indices = @transform_2, window_bounds = array<i64: 1, 8, 32>}, {pipeline_mode = #tpu.pipeline_mode<synchronous>, transform_indices = @transform_3, window_bounds = array<i64: 3, 32, 32>}, {pipeline_mode = #tpu.pipeline_mode<synchronous>, transform_indices = @transform_4, window_bounds = array<i64: 3, 1, 32>}, {pipeline_mode = #tpu.pipeline_mode<synchronous>, transform_indices = @transform_5, window_bounds = array<i64: 32, 32>}, {pipeline_mode = #tpu.pipeline_mode<synchronous>, transform_indices = @transform_6, window_bounds = array<i64: 1, 32>}, {transform_indices = @transform_7, window_bounds = array<i64: 1, 8, 32>}]} {
    %c0 = arith.constant 0 : index
    %c0_0 = arith.constant 0 : index
    %c0_1 = arith.constant 0 : index
    %0 = vector.load %arg1[%c0, %c0_0, %c0_1] : memref<1x8x32xbf16, #tpu.memory_space<vmem>>, vector<1x8x32xbf16>
    %1 = vector.shape_cast %0 : vector<1x8x32xbf16> to vector<8x32xbf16>
    %c0_2 = arith.constant 0 : index
    %c0_3 = arith.constant 0 : index
    %c0_4 = arith.constant 0 : index
    %2 = vector.load %arg2[%c0_2, %c0_3, %c0_4] : memref<1x8x32xbf16, #tpu.memory_space<vmem>>, vector<1x8x32xbf16>
    %3 = vector.shape_cast %2 : vector<1x8x32xbf16> to vector<8x32xbf16>
    %c0_5 = arith.constant 0 : index
    %c0_6 = arith.constant 0 : index
    %c0_7 = arith.constant 0 : index
    %4 = vector.load %arg3[%c0_5, %c0_6, %c0_7] : memref<1x8x32xbf16, #tpu.memory_space<vmem>>, vector<1x8x32xbf16>
    %5 = vector.shape_cast %4 : vector<1x8x32xbf16> to vector<8x32xbf16>
    %c0_8 = arith.constant 0 : index
    %c0_9 = arith.constant 0 : index
    %c0_10 = arith.constant 0 : index
    %6 = vector.load %arg4[%c0_8, %c0_9, %c0_10] : memref<3x32x32xbf16, #tpu.memory_space<vmem>>, vector<1x32x32xbf16>
    %7 = vector.shape_cast %6 : vector<1x32x32xbf16> to vector<32x32xbf16>
    %cst = arith.constant dense<0.000000e+00> : vector<8x32xf32>
    %8 = tpu.matmul %1, %7, %cst {dimension_numbers = #tpu.dot_dimension_numbers<[1], [0], [0], [1], [0, 0, 1, 1], [], []>} : vector<8x32xbf16>, vector<32x32xbf16>, vector<8x32xf32> -> vector<8x32xf32>
    %c0_11 = arith.constant 0 : index
    %c0_12 = arith.constant 0 : index
    %c0_13 = arith.constant 0 : index
    %9 = vector.load %arg5[%c0_11, %c0_12, %c0_13] : memref<3x1x32xf32, #tpu.memory_space<vmem>>, vector<1x1x32xf32>
    %10 = vector.shape_cast %9 : vector<1x1x32xf32> to vector<1x32xf32>
    %11 = vector.broadcast %10 : vector<1x32xf32> to vector<8x32xf32>
    %12 = arith.addf %8, %11 : vector<8x32xf32>
    %c1 = arith.constant 1 : index
    %c0_14 = arith.constant 0 : index
    %c0_15 = arith.constant 0 : index
    %13 = vector.load %arg4[%c1, %c0_14, %c0_15] : memref<3x32x32xbf16, #tpu.memory_space<vmem>>, vector<1x32x32xbf16>
    %14 = vector.shape_cast %13 : vector<1x32x32xbf16> to vector<32x32xbf16>
    %cst_16 = arith.constant dense<0.000000e+00> : vector<8x32xf32>
    %15 = tpu.matmul %3, %14, %cst_16 {dimension_numbers = #tpu.dot_dimension_numbers<[1], [0], [0], [1], [0, 0, 1, 1], [], []>} : vector<8x32xbf16>, vector<32x32xbf16>, vector<8x32xf32> -> vector<8x32xf32>
    %c1_17 = arith.constant 1 : index
    %c0_18 = arith.constant 0 : index
    %c0_19 = arith.constant 0 : index
    %16 = vector.load %arg5[%c1_17, %c0_18, %c0_19] : memref<3x1x32xf32, #tpu.memory_space<vmem>>, vector<1x1x32xf32>
    %17 = vector.shape_cast %16 : vector<1x1x32xf32> to vector<1x32xf32>
    %18 = vector.broadcast %17 : vector<1x32xf32> to vector<8x32xf32>
    %19 = arith.addf %15, %18 : vector<8x32xf32>
    %c2 = arith.constant 2 : index
    %c0_20 = arith.constant 0 : index
    %c0_21 = arith.constant 0 : index
    %20 = vector.load %arg4[%c2, %c0_20, %c0_21] : memref<3x32x32xbf16, #tpu.memory_space<vmem>>, vector<1x32x32xbf16>
    %21 = vector.shape_cast %20 : vector<1x32x32xbf16> to vector<32x32xbf16>
    %cst_22 = arith.constant dense<0.000000e+00> : vector<8x32xf32>
    %22 = tpu.matmul %5, %21, %cst_22 {dimension_numbers = #tpu.dot_dimension_numbers<[1], [0], [0], [1], [0, 0, 1, 1], [], []>} : vector<8x32xbf16>, vector<32x32xbf16>, vector<8x32xf32> -> vector<8x32xf32>
    %c2_23 = arith.constant 2 : index
    %c0_24 = arith.constant 0 : index
    %c0_25 = arith.constant 0 : index
    %23 = vector.load %arg5[%c2_23, %c0_24, %c0_25] : memref<3x1x32xf32, #tpu.memory_space<vmem>>, vector<1x1x32xf32>
    %24 = vector.shape_cast %23 : vector<1x1x32xf32> to vector<1x32xf32>
    %25 = vector.broadcast %24 : vector<1x32xf32> to vector<8x32xf32>
    %26 = arith.addf %22, %25 : vector<8x32xf32>
    %cst_26 = arith.constant 0.353553385 : f32
    %27 = vector.broadcast %cst_26 : f32 to vector<8x32xf32>
    %28 = arith.mulf %12, %27 : vector<8x32xf32>
    %29 = arith.truncf %28 : vector<8x32xf32> to vector<8x32xbf16>
    %30 = arith.truncf %19 : vector<8x32xf32> to vector<8x32xbf16>
    %31 = arith.truncf %26 : vector<8x32xf32> to vector<8x32xbf16>
    %32 = vector.extract_strided_slice %29 {offsets = [0, 0], sizes = [8, 8], strides = [1, 1]} : vector<8x32xbf16> to vector<8x8xbf16>
    %33 = vector.shape_cast %32 : vector<8x8xbf16> to vector<1x8x8xbf16>
    %34 = vector.extract_strided_slice %30 {offsets = [0, 0], sizes = [8, 8], strides = [1, 1]} : vector<8x32xbf16> to vector<8x8xbf16>
    %35 = vector.shape_cast %34 : vector<8x8xbf16> to vector<1x8x8xbf16>
    %36 = vector.extract_strided_slice %31 {offsets = [0, 0], sizes = [8, 8], strides = [1, 1]} : vector<8x32xbf16> to vector<8x8xbf16>
    %37 = vector.shape_cast %36 : vector<8x8xbf16> to vector<1x8x8xbf16>
    "tpu.trace_start"() <{level = 10 : i32, message = "bqd,bkd->bqk"}> : () -> ()
    %cst_27 = arith.constant dense<0.000000e+00> : vector<1x8x8xf32>
    %38 = tpu.matmul %33, %35, %cst_27 {dimension_numbers = #tpu.dot_dimension_numbers<[2], [2], [1], [1], [0, 0, 0, 1, 1, 1], [0], [0]>} : vector<1x8x8xbf16>, vector<1x8x8xbf16>, vector<1x8x8xf32> -> vector<1x8x8xf32>
    "tpu.trace_stop"() : () -> ()
    %cst_28 = arith.constant dense<0xFF800000> : vector<1x8xf32>
    %39 = vector.multi_reduction <maximumf>, %38, %cst_28 [2] : vector<1x8x8xf32> to vector<1x8xf32>
    %40 = vector.shape_cast %39 : vector<1x8xf32> to vector<1x8x1xf32>
    %41 = vector.broadcast %40 : vector<1x8x1xf32> to vector<1x8x8xf32>
    %42 = arith.subf %38, %41 : vector<1x8x8xf32>
    %43 = math.exp %42 : vector<1x8x8xf32>
    %cst_29 = arith.constant dense<0.000000e+00> : vector<1x8xf32>
    %44 = vector.multi_reduction <add>, %43, %cst_29 [2] : vector<1x8x8xf32> to vector<1x8xf32>
    %45 = vector.shape_cast %44 : vector<1x8xf32> to vector<1x8x1xf32>
    %46 = tpu.reciprocal %45 {approx = true} : vector<1x8x1xf32> -> vector<1x8x1xf32>
    %47 = vector.broadcast %46 : vector<1x8x1xf32> to vector<1x8x8xf32>
    %48 = arith.mulf %43, %47 : vector<1x8x8xf32>
    %49 = arith.truncf %48 : vector<1x8x8xf32> to vector<1x8x8xbf16>
    "tpu.trace_start"() <{level = 10 : i32, message = "bqk,bkd->bqd"}> : () -> ()
    %cst_30 = arith.constant dense<0.000000e+00> : vector<1x8x8xf32>
    %50 = tpu.matmul %49, %37, %cst_30 {dimension_numbers = #tpu.dot_dimension_numbers<[2], [1], [1], [2], [0, 0, 0, 1, 1, 2], [0], [0]>} : vector<1x8x8xbf16>, vector<1x8x8xbf16>, vector<1x8x8xf32> -> vector<1x8x8xf32>
    "tpu.trace_stop"() : () -> ()
    %51 = vector.shape_cast %50 : vector<1x8x8xf32> to vector<8x8xf32>
    %52 = arith.truncf %51 : vector<8x8xf32> to vector<8x8xbf16>
    %53 = vector.extract_strided_slice %29 {offsets = [0, 8], sizes = [8, 8], strides = [1, 1]} : vector<8x32xbf16> to vector<8x8xbf16>
    %54 = vector.shape_cast %53 : vector<8x8xbf16> to vector<1x8x8xbf16>
    %55 = vector.extract_strided_slice %30 {offsets = [0, 8], sizes = [8, 8], strides = [1, 1]} : vector<8x32xbf16> to vector<8x8xbf16>
    %56 = vector.shape_cast %55 : vector<8x8xbf16> to vector<1x8x8xbf16>
    %57 = vector.extract_strided_slice %31 {offsets = [0, 8], sizes = [8, 8], strides = [1, 1]} : vector<8x32xbf16> to vector<8x8xbf16>
    %58 = vector.shape_cast %57 : vector<8x8xbf16> to vector<1x8x8xbf16>
    "tpu.trace_start"() <{level = 10 : i32, message = "bqd,bkd->bqk"}> : () -> ()
    %cst_31 = arith.constant dense<0.000000e+00> : vector<1x8x8xf32>
    %59 = tpu.matmul %54, %56, %cst_31 {dimension_numbers = #tpu.dot_dimension_numbers<[2], [2], [1], [1], [0, 0, 0, 1, 1, 1], [0], [0]>} : vector<1x8x8xbf16>, vector<1x8x8xbf16>, vector<1x8x8xf32> -> vector<1x8x8xf32>
    "tpu.trace_stop"() : () -> ()
    %cst_32 = arith.constant dense<0xFF800000> : vector<1x8xf32>
    %60 = vector.multi_reduction <maximumf>, %59, %cst_32 [2] : vector<1x8x8xf32> to vector<1x8xf32>
    %61 = vector.shape_cast %60 : vector<1x8xf32> to vector<1x8x1xf32>
    %62 = vector.broadcast %61 : vector<1x8x1xf32> to vector<1x8x8xf32>
    %63 = arith.subf %59, %62 : vector<1x8x8xf32>
    %64 = math.exp %63 : vector<1x8x8xf32>
    %cst_33 = arith.constant dense<0.000000e+00> : vector<1x8xf32>
    %65 = vector.multi_reduction <add>, %64, %cst_33 [2] : vector<1x8x8xf32> to vector<1x8xf32>
    %66 = vector.shape_cast %65 : vector<1x8xf32> to vector<1x8x1xf32>
    %67 = tpu.reciprocal %66 {approx = true} : vector<1x8x1xf32> -> vector<1x8x1xf32>
    %68 = vector.broadcast %67 : vector<1x8x1xf32> to vector<1x8x8xf32>
    %69 = arith.mulf %64, %68 : vector<1x8x8xf32>
    %70 = arith.truncf %69 : vector<1x8x8xf32> to vector<1x8x8xbf16>
    "tpu.trace_start"() <{level = 10 : i32, message = "bqk,bkd->bqd"}> : () -> ()
    %cst_34 = arith.constant dense<0.000000e+00> : vector<1x8x8xf32>
    %71 = tpu.matmul %70, %58, %cst_34 {dimension_numbers = #tpu.dot_dimension_numbers<[2], [1], [1], [2], [0, 0, 0, 1, 1, 2], [0], [0]>} : vector<1x8x8xbf16>, vector<1x8x8xbf16>, vector<1x8x8xf32> -> vector<1x8x8xf32>
    "tpu.trace_stop"() : () -> ()
    %72 = vector.shape_cast %71 : vector<1x8x8xf32> to vector<8x8xf32>
    %73 = arith.truncf %72 : vector<8x8xf32> to vector<8x8xbf16>
    %74 = vector.extract_strided_slice %29 {offsets = [0, 16], sizes = [8, 8], strides = [1, 1]} : vector<8x32xbf16> to vector<8x8xbf16>
    %75 = vector.shape_cast %74 : vector<8x8xbf16> to vector<1x8x8xbf16>
    %76 = vector.extract_strided_slice %30 {offsets = [0, 16], sizes = [8, 8], strides = [1, 1]} : vector<8x32xbf16> to vector<8x8xbf16>
    %77 = vector.shape_cast %76 : vector<8x8xbf16> to vector<1x8x8xbf16>
    %78 = vector.extract_strided_slice %31 {offsets = [0, 16], sizes = [8, 8], strides = [1, 1]} : vector<8x32xbf16> to vector<8x8xbf16>
    %79 = vector.shape_cast %78 : vector<8x8xbf16> to vector<1x8x8xbf16>
    "tpu.trace_start"() <{level = 10 : i32, message = "bqd,bkd->bqk"}> : () -> ()
    %cst_35 = arith.constant dense<0.000000e+00> : vector<1x8x8xf32>
    %80 = tpu.matmul %75, %77, %cst_35 {dimension_numbers = #tpu.dot_dimension_numbers<[2], [2], [1], [1], [0, 0, 0, 1, 1, 1], [0], [0]>} : vector<1x8x8xbf16>, vector<1x8x8xbf16>, vector<1x8x8xf32> -> vector<1x8x8xf32>
    "tpu.trace_stop"() : () -> ()
    %cst_36 = arith.constant dense<0xFF800000> : vector<1x8xf32>
    %81 = vector.multi_reduction <maximumf>, %80, %cst_36 [2] : vector<1x8x8xf32> to vector<1x8xf32>
    %82 = vector.shape_cast %81 : vector<1x8xf32> to vector<1x8x1xf32>
    %83 = vector.broadcast %82 : vector<1x8x1xf32> to vector<1x8x8xf32>
    %84 = arith.subf %80, %83 : vector<1x8x8xf32>
    %85 = math.exp %84 : vector<1x8x8xf32>
    %cst_37 = arith.constant dense<0.000000e+00> : vector<1x8xf32>
    %86 = vector.multi_reduction <add>, %85, %cst_37 [2] : vector<1x8x8xf32> to vector<1x8xf32>
    %87 = vector.shape_cast %86 : vector<1x8xf32> to vector<1x8x1xf32>
    %88 = tpu.reciprocal %87 {approx = true} : vector<1x8x1xf32> -> vector<1x8x1xf32>
    %89 = vector.broadcast %88 : vector<1x8x1xf32> to vector<1x8x8xf32>
    %90 = arith.mulf %85, %89 : vector<1x8x8xf32>
    %91 = arith.truncf %90 : vector<1x8x8xf32> to vector<1x8x8xbf16>
    "tpu.trace_start"() <{level = 10 : i32, message = "bqk,bkd->bqd"}> : () -> ()
    %cst_38 = arith.constant dense<0.000000e+00> : vector<1x8x8xf32>
    %92 = tpu.matmul %91, %79, %cst_38 {dimension_numbers = #tpu.dot_dimension_numbers<[2], [1], [1], [2], [0, 0, 0, 1, 1, 2], [0], [0]>} : vector<1x8x8xbf16>, vector<1x8x8xbf16>, vector<1x8x8xf32> -> vector<1x8x8xf32>
    "tpu.trace_stop"() : () -> ()
    %93 = vector.shape_cast %92 : vector<1x8x8xf32> to vector<8x8xf32>
    %94 = arith.truncf %93 : vector<8x8xf32> to vector<8x8xbf16>
    %95 = vector.extract_strided_slice %29 {offsets = [0, 24], sizes = [8, 8], strides = [1, 1]} : vector<8x32xbf16> to vector<8x8xbf16>
    %96 = vector.shape_cast %95 : vector<8x8xbf16> to vector<1x8x8xbf16>
    %97 = vector.extract_strided_slice %30 {offsets = [0, 24], sizes = [8, 8], strides = [1, 1]} : vector<8x32xbf16> to vector<8x8xbf16>
    %98 = vector.shape_cast %97 : vector<8x8xbf16> to vector<1x8x8xbf16>
    %99 = vector.extract_strided_slice %31 {offsets = [0, 24], sizes = [8, 8], strides = [1, 1]} : vector<8x32xbf16> to vector<8x8xbf16>
    %100 = vector.shape_cast %99 : vector<8x8xbf16> to vector<1x8x8xbf16>
    "tpu.trace_start"() <{level = 10 : i32, message = "bqd,bkd->bqk"}> : () -> ()
    %cst_39 = arith.constant dense<0.000000e+00> : vector<1x8x8xf32>
    %101 = tpu.matmul %96, %98, %cst_39 {dimension_numbers = #tpu.dot_dimension_numbers<[2], [2], [1], [1], [0, 0, 0, 1, 1, 1], [0], [0]>} : vector<1x8x8xbf16>, vector<1x8x8xbf16>, vector<1x8x8xf32> -> vector<1x8x8xf32>
    "tpu.trace_stop"() : () -> ()
    %cst_40 = arith.constant dense<0xFF800000> : vector<1x8xf32>
    %102 = vector.multi_reduction <maximumf>, %101, %cst_40 [2] : vector<1x8x8xf32> to vector<1x8xf32>
    %103 = vector.shape_cast %102 : vector<1x8xf32> to vector<1x8x1xf32>
    %104 = vector.broadcast %103 : vector<1x8x1xf32> to vector<1x8x8xf32>
    %105 = arith.subf %101, %104 : vector<1x8x8xf32>
    %106 = math.exp %105 : vector<1x8x8xf32>
    %cst_41 = arith.constant dense<0.000000e+00> : vector<1x8xf32>
    %107 = vector.multi_reduction <add>, %106, %cst_41 [2] : vector<1x8x8xf32> to vector<1x8xf32>
    %108 = vector.shape_cast %107 : vector<1x8xf32> to vector<1x8x1xf32>
    %109 = tpu.reciprocal %108 {approx = true} : vector<1x8x1xf32> -> vector<1x8x1xf32>
    %110 = vector.broadcast %109 : vector<1x8x1xf32> to vector<1x8x8xf32>
    %111 = arith.mulf %106, %110 : vector<1x8x8xf32>
    %112 = arith.truncf %111 : vector<1x8x8xf32> to vector<1x8x8xbf16>
    "tpu.trace_start"() <{level = 10 : i32, message = "bqk,bkd->bqd"}> : () -> ()
    %cst_42 = arith.constant dense<0.000000e+00> : vector<1x8x8xf32>
    %113 = tpu.matmul %112, %100, %cst_42 {dimension_numbers = #tpu.dot_dimension_numbers<[2], [1], [1], [2], [0, 0, 0, 1, 1, 2], [0], [0]>} : vector<1x8x8xbf16>, vector<1x8x8xbf16>, vector<1x8x8xf32> -> vector<1x8x8xf32>
    "tpu.trace_stop"() : () -> ()
    %114 = vector.shape_cast %113 : vector<1x8x8xf32> to vector<8x8xf32>
    %115 = arith.truncf %114 : vector<8x8xf32> to vector<8x8xbf16>
    %116 = tpu.concatenate %52, %73, %94, %115 in 1 : vector<8x8xbf16>, vector<8x8xbf16>, vector<8x8xbf16>, vector<8x8xbf16> -> vector<8x32xbf16>
    %c0_43 = arith.constant 0 : index
    %c0_44 = arith.constant 0 : index
    %117 = vector.load %arg6[%c0_43, %c0_44] : memref<32x32xbf16, #tpu.memory_space<vmem>>, vector<32x32xbf16>
    %cst_45 = arith.constant dense<0.000000e+00> : vector<8x32xf32>
    %118 = tpu.matmul %116, %117, %cst_45 {dimension_numbers = #tpu.dot_dimension_numbers<[1], [0], [0], [1], [0, 0, 1, 1], [], []>} : vector<8x32xbf16>, vector<32x32xbf16>, vector<8x32xf32> -> vector<8x32xf32>
    %c0_46 = arith.constant 0 : index
    %c0_47 = arith.constant 0 : index
    %119 = vector.load %arg7[%c0_46, %c0_47] : memref<1x32xf32, #tpu.memory_space<vmem>>, vector<1x32xf32>
    %120 = vector.broadcast %119 : vector<1x32xf32> to vector<8x32xf32>
    %121 = arith.addf %118, %120 : vector<8x32xf32>
    %122 = vector.shape_cast %121 : vector<8x32xf32> to vector<1x8x32xf32>
    %c0_48 = arith.constant 0 : index
    %c0_49 = arith.constant 0 : index
    %c0_50 = arith.constant 0 : index
    %123 = vector.load %arg8[%c0_48, %c0_49, %c0_50] : memref<1x8x32xf32, #tpu.memory_space<vmem>>, vector<1x8x32xf32>
    tpu.vector_store %arg8[%c0_48, %c0_49, %c0_50], %122 {strides = array<i32>} : memref<1x8x32xf32, #tpu.memory_space<vmem>>, vector<1x8x32xf32>,
    return
  }
  func.func @transform_0(%arg0: i32) -> (i32, i32, i32) {
    %c0_i32 = arith.constant 0 : i32
    %c0_i32_0 = arith.constant 0 : i32
    %c0_i32_1 = arith.constant 0 : i32
    return %arg0, %c0_i32, %c0_i32_0 : i32, i32, i32
  }
  func.func @transform_1(%arg0: i32) -> (i32, i32, i32) {
    %c0_i32 = arith.constant 0 : i32
    %c0_i32_0 = arith.constant 0 : i32
    %c0_i32_1 = arith.constant 0 : i32
    return %arg0, %c0_i32, %c0_i32_0 : i32, i32, i32
  }
  func.func @transform_2(%arg0: i32) -> (i32, i32, i32) {
    %c0_i32 = arith.constant 0 : i32
    %c0_i32_0 = arith.constant 0 : i32
    %c0_i32_1 = arith.constant 0 : i32
    return %arg0, %c0_i32, %c0_i32_0 : i32, i32, i32
  }
  func.func @transform_3(%arg0: i32) -> (i32, i32, i32) {
    %c0_i32 = arith.constant 0 : i32
    %c0_i32_0 = arith.constant 0 : i32
    %c0_i32_1 = arith.constant 0 : i32
    %c0_i32_2 = arith.constant 0 : i32
    return %c0_i32, %c0_i32_0, %c0_i32_1 : i32, i32, i32
  }
  func.func @transform_4(%arg0: i32) -> (i32, i32, i32) {
    %c0_i32 = arith.constant 0 : i32
    %c0_i32_0 = arith.constant 0 : i32
    %c0_i32_1 = arith.constant 0 : i32
    %c0_i32_2 = arith.constant 0 : i32
    return %c0_i32, %c0_i32_0, %c0_i32_1 : i32, i32, i32
  }
  func.func @transform_5(%arg0: i32) -> (i32, i32) {
    %c0_i32 = arith.constant 0 : i32
    %c0_i32_0 = arith.constant 0 : i32
    %c0_i32_1 = arith.constant 0 : i32
    return %c0_i32, %c0_i32_0 : i32, i32
  }
  func.func @transform_6(%arg0: i32) -> (i32, i32) {
    %c0_i32 = arith.constant 0 : i32
    %c0_i32_0 = arith.constant 0 : i32
    %c0_i32_1 = arith.constant 0 : i32
    return %c0_i32, %c0_i32_0 : i32, i32
  }
  func.func @transform_7(%arg0: i32) -> (i32, i32, i32) {
    %c0_i32 = arith.constant 0 : i32
    %c0_i32_0 = arith.constant 0 : i32
    %c0_i32_1 = arith.constant 0 : i32
    return %arg0, %c0_i32, %c0_i32_0 : i32, i32, i32
  }
}

</mosaic_0001>

<llo_original>
// kernel: tpu_custom_call.1
$region0: #{tpu_custom_call.1}
  #allocation0 [shape = 'u32[]', space=smem, size = 0x4, offset = 0x4, fixed_abs, tag = 'smem constant byte address 0x4 - core index']
  #allocation1 [shape = 'u32[144,128]{1,0:T(1,128)}', space=vmem, size = 0x12000, scoped, tag = 'internal scratch']
  %s0 = inlined_call_operand.hbm [shape: bf16[2,8,32], index: 0, kind: input, shape index: {}]
  %s1 = inlined_call_operand.hbm [shape: bf16[2,8,32], index: 1, kind: input, shape index: {}]
  %s2 = inlined_call_operand.hbm [shape: bf16[2,8,32], index: 2, kind: input, shape index: {}]
  %s3 = inlined_call_operand.hbm [shape: bf16[3,32,32], index: 3, kind: input, shape index: {}]
  %s4 = inlined_call_operand.hbm [shape: f32[3,1,32], index: 4, kind: input, shape index: {}]
  %s5 = inlined_call_operand.vmem [shape: bf16[32,32], index: 5, kind: input, shape index: {}]
  %s6 = inlined_call_operand.vmem [shape: f32[1,32], index: 6, kind: input, shape index: {}]
  %s7 = inlined_call_operand.hbm [shape: f32[2,8,32], index: 7, kind: output, shape index: {}]
  %s8 = sld [smem:[#allocation0]]
  $region81: #{tpu_custom_call.1} parent=0
    _
  %s10 = ssub.s32 1, %s8
  %s11 = scalar_select 0, %s10, %s8
  $region1: #{tpu_custom_call.1} parent=0
    #allocation2 [shape = 'u8[4096]{0}', space=vmem, size = 0x1000, scoped, tag = 'input window, operand 0']
    #allocation3 [shape = 's32[2]{0}', space=sflag, size = 0x8, scoped, tag = 'scoped memory for tpu_custom_call.1']
    #allocation4 [shape = 's32[2]{0}', space=sflag, size = 0x8, scoped, tag = 'scoped memory for tpu_custom_call.1']
    #allocation5 [shape = 'u8[4096]{0}', space=vmem, size = 0x1000, scoped, tag = 'input window, operand 1']
    #allocation6 [shape = 's32[2]{0}', space=sflag, size = 0x8, scoped, tag = 'scoped memory for tpu_custom_call.1']
    #allocation7 [shape = 'u8[4096]{0}', space=vmem, size = 0x1000, scoped, tag = 'input window, operand 2']
    #allocation8 [shape = 'u8[24576]{0}', space=vmem, size = 0x6000, scoped, tag = 'input window, operand 3, single buffered']
    #allocation9 [shape = 's32[1]{0}', space=sflag, size = 0x4, scoped, tag = 'scoped memory for tpu_custom_call.1']
    #allocation10 [shape = 'u8[1536]{0}', space=vmem, size = 0x800, scoped, tag = 'input window, operand 4, single buffered']
    #allocation11 [shape = 'u8[8192]{0}', space=vmem, size = 0x2000, scoped, tag = 'output window, operand 0']
    %12 = vsyncpa [#allocation3], 0
    %s13 = scalar_lea.sflag [#allocation3], 1
    %14 = vsyncpa %s13, 0
    %15 = vsyncpa [#allocation6], 0
    %s16 = scalar_lea.sflag [#allocation6], 1
    %17 = vsyncpa %s16, 0
    %18 = vsyncpa [#allocation9], 0
    %19 = vsyncpa [#allocation4], 0
    %s20 = scalar_lea.sflag [#allocation4], 1
    %21 = vsyncpa %s20, 0
    loop: start=0, step=1, limit=4
    $region2: #{tpu_custom_call.1} parent=1 // loop_pre_header
      _
    $region3: #{tpu_custom_call.1} parent=1 // loop_header
      %s23 = sphi 0, %s27
      %p24 = scmp.ge.s32.totalorder %s23, 4
      %s33 = sphi 0, %s35
      %s36 = sphi 0, %s33
      %s37 = sphi 0, %s36
      %s53 = sphi 0, %s37
      %s59 = sphi 0, %s61
      %s62 = sphi 0, %s59
      %s63 = sphi 0, %s62
      %s79 = sphi 0, %s63
      %s85 = sphi 0, %s87
      %s88 = sphi 0, %s85
      %s89 = sphi 0, %s88
      %s105 = sphi 0, %s89
      %s109 = sphi 0, %s109
      %s111 = sphi 0, %s109
      %s112 = sphi 0, %s111
      %s126 = sphi 0, %s112
      %s130 = sphi 0, %s130
      %s132 = sphi 0, %s130
      %s133 = sphi 0, %s132
      %s147 = sphi 0, %s133
      %s151 = sphi 0, %s151
      %s153 = sphi 0, %s151
      %s154 = sphi 0, %s153
      %s168 = sphi 0, %s154
      %s172 = sphi 0, %s172
      %s174 = sphi 0, %s172
      %s175 = sphi 0, %s174
      %s189 = sphi 0, %s175
      %s195 = sphi 0, %s197
      %s198 = sphi 0, %s195
      %s199 = sphi 0, %s198
      %s215 = sphi 0, %s199
    $region4: #{tpu_custom_call.1} parent=1 // loop_header_branch
      %26 = sbr.rel (%p24) target = $region8
    $region5: #{tpu_custom_call.1} parent=1 // loop_body
      %s28 = ssub.s32 %s23, 1
      %s29 = ssub.s32 %s23, 2
      %s30 = sadd.s32 %s23, 1
      %s31 = ssub.s32 %s23, %s30
      %p32 = scmp.eq.s32.totalorder %s31, 0
      %s34 = sadd.s32 %s33, 1
      %s35 = scalar_select %p32, %s33, %s34
      %p38 = pneg %p32
      %p39 = scmp.eq.s32.totalorder %s23, 1
      %p40 = por %p38, %p39
      %p41 = scmp.ne.s32.totalorder %s33, %s36
      %p42 = scmp.eq.s32.totalorder %s23, 0
      %p43 = por %p41, %p42
      %p44 = scmp.ne.s32.totalorder %s33, %s36
      %p45 = scmp.eq.s32.totalorder %s28, 1
      %p46 = por %p44, %p45
      %p47 = scmp.ne.s32.totalorder %s36, %s37
      %p48 = scmp.eq.s32.totalorder %s28, 0
      %p49 = por %p47, %p48
      %p50 = scmp.ne.s32.totalorder %s36, %s37
      %p51 = scmp.eq.s32.totalorder %s29, 1
      %p52 = por %p50, %p51
      %p54 = scmp.ne.s32.totalorder %s37, %s53
      %p55 = scmp.eq.s32.totalorder %s29, 0
      %p56 = por %p54, %p55
      %s57 = ssub.s32 %s23, %s30
      %p58 = scmp.eq.s32.totalorder %s57, 0
      %s60 = sadd.s32 %s59, 1
      %s61 = scalar_select %p58, %s59, %s60
      %p64 = pneg %p58
      %p65 = scmp.eq.s32.totalorder %s23, 1
      %p66 = por %p64, %p65
      %p67 = scmp.ne.s32.totalorder %s59, %s62
      %p68 = scmp.eq.s32.totalorder %s23, 0
      %p69 = por %p67, %p68
      %p70 = scmp.ne.s32.totalorder %s59, %s62
      %p71 = scmp.eq.s32.totalorder %s28, 1
      %p72 = por %p70, %p71
      %p73 = scmp.ne.s32.totalorder %s62, %s63
      %p74 = scmp.eq.s32.totalorder %s28, 0
      %p75 = por %p73, %p74
      %p76 = scmp.ne.s32.totalorder %s62, %s63
      %p77 = scmp.eq.s32.totalorder %s29, 1
      %p78 = por %p76, %p77
      %p80 = scmp.ne.s32.totalorder %s63, %s79
      %p81 = scmp.eq.s32.totalorder %s29, 0
      %p82 = por %p80, %p81
      %s83 = ssub.s32 %s23, %s30
      %p84 = scmp.eq.s32.totalorder %s83, 0
      %s86 = sadd.s32 %s85, 1
      %s87 = scalar_select %p84, %s85, %s86
      %p90 = pneg %p84
      %p91 = scmp.eq.s32.totalorder %s23, 1
      %p92 = por %p90, %p91
      %p93 = scmp.ne.s32.totalorder %s85, %s88
      %p94 = scmp.eq.s32.totalorder %s23, 0
      %p95 = por %p93, %p94
      %p96 = scmp.ne.s32.totalorder %s85, %s88
      %p97 = scmp.eq.s32.totalorder %s28, 1
      %p98 = por %p96, %p97
      %p99 = scmp.ne.s32.totalorder %s88, %s89
      %p100 = scmp.eq.s32.totalorder %s28, 0
      %p101 = por %p99, %p100
      %p102 = scmp.ne.s32.totalorder %s88, %s89
      %p103 = scmp.eq.s32.totalorder %s29, 1
      %p104 = por %p102, %p103
      %p106 = scmp.ne.s32.totalorder %s89, %s105
      %p107 = scmp.eq.s32.totalorder %s29, 0
      %p108 = por %p106, %p107
      %s110 = sadd.s32 %s109, 1
      %p113 = scmp.eq.s32.totalorder %s23, 1
      %p114 = scmp.ne.s32.totalorder %s109, %s111
      %p115 = scmp.eq.s32.totalorder %s23, 0
      %p116 = por %p114, %p115
      %p117 = scmp.ne.s32.totalorder %s109, %s111
      %p118 = scmp.eq.s32.totalorder %s28, 1
      %p119 = por %p117, %p118
      %p120 = scmp.ne.s32.totalorder %s111, %s112
      %p121 = scmp.eq.s32.totalorder %s28, 0
      %p122 = por %p120, %p121
      %p123 = scmp.ne.s32.totalorder %s111, %s112
      %p124 = scmp.eq.s32.totalorder %s29, 1
      %p125 = por %p123, %p124
      %p127 = scmp.ne.s32.totalorder %s112, %s126
      %p128 = scmp.eq.s32.totalorder %s29, 0
      %p129 = por %p127, %p128
      %s131 = sadd.s32 %s130, 1
      %p134 = scmp.eq.s32.totalorder %s23, 1
      %p135 = scmp.ne.s32.totalorder %s130, %s132
      %p136 = scmp.eq.s32.totalorder %s23, 0
      %p137 = por %p135, %p136
      %p138 = scmp.ne.s32.totalorder %s130, %s132
      %p139 = scmp.eq.s32.totalorder %s28, 1
      %p140 = por %p138, %p139
      %p141 = scmp.ne.s32.totalorder %s132, %s133
      %p142 = scmp.eq.s32.totalorder %s28, 0
      %p143 = por %p141, %p142
      %p144 = scmp.ne.s32.totalorder %s132, %s133
      %p145 = scmp.eq.s32.totalorder %s29, 1
      %p146 = por %p144, %p145
      %p148 = scmp.ne.s32.totalorder %s133, %s147
      %p149 = scmp.eq.s32.totalorder %s29, 0
      %p150 = por %p148, %p149
      %s152 = sadd.s32 %s151, 1
      %p155 = scmp.eq.s32.totalorder %s23, 1
      %p156 = scmp.ne.s32.totalorder %s151, %s153
      %p157 = scmp.eq.s32.totalorder %s23, 0
      %p158 = por %p156, %p157
      %p159 = scmp.ne.s32.totalorder %s151, %s153
      %p160 = scmp.eq.s32.totalorder %s28, 1
      %p161 = por %p159, %p160
      %p162 = scmp.ne.s32.totalorder %s153, %s154
      %p163 = scmp.eq.s32.totalorder %s28, 0
      %p164 = por %p162, %p163
      %p165 = scmp.ne.s32.totalorder %s153, %s154
      %p166 = scmp.eq.s32.totalorder %s29, 1
      %p167 = por %p165, %p166
      %p169 = scmp.ne.s32.totalorder %s154, %s168
      %p170 = scmp.eq.s32.totalorder %s29, 0
      %p171 = por %p169, %p170
      %s173 = sadd.s32 %s172, 1
      %p176 = scmp.eq.s32.totalorder %s23, 1
      %p177 = scmp.ne.s32.totalorder %s172, %s174
      %p178 = scmp.eq.s32.totalorder %s23, 0
      %p179 = por %p177, %p178
      %p180 = scmp.ne.s32.totalorder %s172, %s174
      %p181 = scmp.eq.s32.totalorder %s28, 1
      %p182 = por %p180, %p181
      %p183 = scmp.ne.s32.totalorder %s174, %s175
      %p184 = scmp.eq.s32.totalorder %s28, 0
      %p185 = por %p183, %p184
      %p186 = scmp.ne.s32.totalorder %s174, %s175
      %p187 = scmp.eq.s32.totalorder %s29, 1
      %p188 = por %p186, %p187
      %p190 = scmp.ne.s32.totalorder %s175, %s189
      %p191 = scmp.eq.s32.totalorder %s29, 0
      %p192 = por %p190, %p191
      %s193 = ssub.s32 %s23, %s30
      %p194 = scmp.eq.s32.totalorder %s193, 0
      %s196 = sadd.s32 %s195, 1
      %s197 = scalar_select %p194, %s195, %s196
      %p200 = pneg %p194
      %p201 = scmp.eq.s32.totalorder %s23, 1
      %p202 = por %p200, %p201
      %p203 = scmp.ne.s32.totalorder %s195, %s198
      %p204 = scmp.eq.s32.totalorder %s23, 0
      %p205 = por %p203, %p204
      %p206 = scmp.ne.s32.totalorder %s195, %s198
      %p207 = scmp.eq.s32.totalorder %s28, 1
      %p208 = por %p206, %p207
      %p209 = scmp.ne.s32.totalorder %s198, %s199
      %p210 = scmp.eq.s32.totalorder %s28, 0
      %p211 = por %p209, %p210
      %p212 = scmp.ne.s32.totalorder %s198, %s199
      %p213 = scmp.eq.s32.totalorder %s29, 1
      %p214 = por %p212, %p213
      %p216 = scmp.ne.s32.totalorder %s199, %s215
      %p217 = scmp.eq.s32.totalorder %s29, 0
      %p218 = por %p216, %p217
      %p219 = scmp.le.s32.totalorder 1, %s23
      %p220 = scmp.lt.s32.totalorder %s23, 3
      %p221 = pnand %p219, %p220
      %p222 = pneg %p221
      // Predicated region
      $region9: #{tpu_custom_call.1} parent=5 // pred_check
        _
      $region10: #{tpu_custom_call.1} parent=5 // pred_check_branch
        %224 = sbr.rel (%p221) target = $region12
      $region11: #{tpu_custom_call.1} parent=5 // pred_region
        %s225 = ssub.s32 %s23, 1
        // Predicated region
        $region13: #{tpu_custom_call.1} parent=11 // pred_check
          %p226 = pneg %p122
        $region14: #{tpu_custom_call.1} parent=11 // pred_check_branch
          %228 = sbr.rel (%p226) target = $region16
        $region15: #{tpu_custom_call.1} parent=11 // pred_region
          %s230 = ssub.s32 768, 768
          %231 = vsyncadd [#allocation9], %s230
          %s232 = sshll.u32 [#allocation8], 4
          %s233 = int_to_ptr.vmem [resolvable:$true] %s232
          %238 = dma.hbm_to_vmem [thread:$0]  %s3, 768, %s233, [#allocation9], 64, 64, 4
        $region16: #{tpu_custom_call.1} parent=11 // pred_fallthru
          _
        // Predicated region
        $region17: #{tpu_custom_call.1} parent=11 // pred_check
          %p239 = pneg %p143
        $region18: #{tpu_custom_call.1} parent=11 // pred_check_branch
          %241 = sbr.rel (%p239) target = $region20
        $region19: #{tpu_custom_call.1} parent=11 // pred_region
          %s243 = ssub.s32 48, 48
          %244 = vsyncadd [#allocation9], %s243
          %s245 = sshll.u32 [#allocation10], 4
          %s246 = int_to_ptr.vmem [resolvable:$true] %s245
          %251 = dma.hbm_to_vmem [thread:$0]  %s4, 48, %s246, [#allocation9], 16, 16, 1
        $region20: #{tpu_custom_call.1} parent=11 // pred_fallthru
          _
        // Predicated region
        $region21: #{tpu_custom_call.1} parent=11 // pred_check
          %p252 = pneg %p164
        $region22: #{tpu_custom_call.1} parent=11 // pred_check_branch
          %254 = sbr.rel (%p252) target = $region24
        $region23: #{tpu_custom_call.1} parent=11 // pred_region
          _
        $region24: #{tpu_custom_call.1} parent=11 // pred_fallthru
          _
        // Predicated region
        $region25: #{tpu_custom_call.1} parent=11 // pred_check
          %p255 = pneg %p185
        $region26: #{tpu_custom_call.1} parent=11 // pred_check_branch
          %257 = sbr.rel (%p255) target = $region28
        $region27: #{tpu_custom_call.1} parent=11 // pred_region
          _
        $region28: #{tpu_custom_call.1} parent=11 // pred_fallthru
          _
      $region12: #{tpu_custom_call.1} parent=5 // pred_fallthru
        _
      %p258 = scmp.lt.s32.totalorder %s23, 2
      // Predicated region
      $region29: #{tpu_custom_call.1} parent=5 // pred_check
        %p259 = pneg %p258
      $region30: #{tpu_custom_call.1} parent=5 // pred_check_branch
        %261 = sbr.rel (%p259) target = $region32
      $region31: #{tpu_custom_call.1} parent=5 // pred_region
        // Predicated region
        $region33: #{tpu_custom_call.1} parent=31 // pred_check
          %p262 = pneg %p43
        $region34: #{tpu_custom_call.1} parent=31 // pred_check_branch
          %264 = sbr.rel (%p262) target = $region36
        $region35: #{tpu_custom_call.1} parent=31 // pred_region
          %s265 = sand.u32 %s33, 1
          %s266 = scalar_lea.sflag [#allocation3], %s265
          %s267 = sand.u32 %s33, 1
          %s268 = smul.addr %s267, 4
          %s269 = scalar_lea.vmem [#allocation2], %s268
          %s271 = ssub.s32 64, 64
          %272 = vsyncadd %s266, %s271
          %s273 = smul.addr %s23, 64
          %s274 = scalar_lea.hbm %s0, %s273
          %s276 = sshll.u32 %s269, 4
          %s277 = int_to_ptr.vmem [resolvable:$true] %s276
          %279 = dma.hbm_to_vmem [thread:$0]  %s274, 64, %s277, %s266
        $region36: #{tpu_custom_call.1} parent=31 // pred_fallthru
          _
        // Predicated region
        $region37: #{tpu_custom_call.1} parent=31 // pred_check
          %p280 = pneg %p69
        $region38: #{tpu_custom_call.1} parent=31 // pred_check_branch
          %282 = sbr.rel (%p280) target = $region40
        $region39: #{tpu_custom_call.1} parent=31 // pred_region
          %s283 = sand.u32 %s23, 1
          %s284 = scalar_lea.sflag [#allocation6], %s283
          %s285 = sand.u32 %s59, 1
          %s286 = smul.addr %s285, 4
          %s287 = scalar_lea.vmem [#allocation5], %s286
          %s289 = ssub.s32 64, 64
          %290 = vsyncadd %s284, %s289
          %s291 = smul.addr %s23, 64
          %s292 = scalar_lea.hbm %s1, %s291
          %s294 = sshll.u32 %s287, 4
          %s295 = int_to_ptr.vmem [resolvable:$true] %s294
          %297 = dma.hbm_to_vmem [thread:$0]  %s292, 64, %s295, %s284
        $region40: #{tpu_custom_call.1} parent=31 // pred_fallthru
          _
        // Predicated region
        $region41: #{tpu_custom_call.1} parent=31 // pred_check
          %p298 = pneg %p95
        $region42: #{tpu_custom_call.1} parent=31 // pred_check_branch
          %300 = sbr.rel (%p298) target = $region44
        $region43: #{tpu_custom_call.1} parent=31 // pred_region
          %s301 = sand.u32 %s23, 1
          %s302 = scalar_lea.sflag [#allocation6], %s301
          %s303 = sand.u32 %s85, 1
          %s304 = smul.addr %s303, 4
          %s305 = scalar_lea.vmem [#allocation7], %s304
          %s307 = ssub.s32 64, 64
          %308 = vsyncadd %s302, %s307
          %s309 = smul.addr %s23, 64
          %s310 = scalar_lea.hbm %s2, %s309
          %s312 = sshll.u32 %s305, 4
          %s313 = int_to_ptr.vmem [resolvable:$true] %s312
          %315 = dma.hbm_to_vmem [thread:$0]  %s310, 64, %s313, %s302
        $region44: #{tpu_custom_call.1} parent=31 // pred_fallthru
          _
      $region32: #{tpu_custom_call.1} parent=5 // pred_fallthru
        _
      %p316 = scmp.le.s32.totalorder 1, %s23
      %p317 = scmp.lt.s32.totalorder %s23, 3
      %p318 = pnand %p316, %p317
      %p319 = pneg %p318
      // Predicated region
      $region45: #{tpu_custom_call.1} parent=5 // pred_check
        _
      $region46: #{tpu_custom_call.1} parent=5 // pred_check_branch
        %321 = sbr.rel (%p318) target = $region48
      $region47: #{tpu_custom_call.1} parent=5 // pred_region
        %s322 = ssub.s32 %s23, 1
        %s323 = sand.u32 %s36, 1
        %s324 = scalar_lea.sflag [#allocation3], %s323
        %s325 = sand.u32 %s36, 1
        %s326 = smul.addr %s325, 4
        %s327 = scalar_lea.vmem [#allocation2], %s326
        // Predicated region
        $region49: #{tpu_custom_call.1} parent=47 // pred_check
          %p328 = pneg %p49
        $region50: #{tpu_custom_call.1} parent=47 // pred_check_branch
          %330 = sbr.rel (%p328) target = $region52
        $region51: #{tpu_custom_call.1} parent=47 // pred_region
          %331 = dma.done %s324, 64
        $region52: #{tpu_custom_call.1} parent=47 // pred_fallthru
          _
        %s332 = sand.u32 %s28, 1
        %s333 = scalar_lea.sflag [#allocation6], %s332
        %s334 = sand.u32 %s62, 1
        %s335 = smul.addr %s334, 4
        %s336 = scalar_lea.vmem [#allocation5], %s335
        // Predicated region
        $region53: #{tpu_custom_call.1} parent=47 // pred_check
          %p337 = pneg %p75
        $region54: #{tpu_custom_call.1} parent=47 // pred_check_branch
          %339 = sbr.rel (%p337) target = $region56
        $region55: #{tpu_custom_call.1} parent=47 // pred_region
          %340 = dma.done %s333, 64
        $region56: #{tpu_custom_call.1} parent=47 // pred_fallthru
          _
        %s341 = sand.u32 %s28, 1
        %s342 = scalar_lea.sflag [#allocation6], %s341
        %s343 = sand.u32 %s88, 1
        %s344 = smul.addr %s343, 4
        %s345 = scalar_lea.vmem [#allocation7], %s344
        // Predicated region
        $region57: #{tpu_custom_call.1} parent=47 // pred_check
          %p346 = pneg %p101
        $region58: #{tpu_custom_call.1} parent=47 // pred_check_branch
          %348 = sbr.rel (%p346) target = $region60
        $region59: #{tpu_custom_call.1} parent=47 // pred_region
          %349 = dma.done %s342, 64
        $region60: #{tpu_custom_call.1} parent=47 // pred_fallthru
          _
        // Predicated region
        $region61: #{tpu_custom_call.1} parent=47 // pred_check
          %p350 = pneg %p122
        $region62: #{tpu_custom_call.1} parent=47 // pred_check_branch
          %352 = sbr.rel (%p350) target = $region64
        $region63: #{tpu_custom_call.1} parent=47 // pred_region
          %353 = dma.done [#allocation9], 768
        $region64: #{tpu_custom_call.1} parent=47 // pred_fallthru
          _
        // Predicated region
        $region65: #{tpu_custom_call.1} parent=47 // pred_check
          %p354 = pneg %p143
        $region66: #{tpu_custom_call.1} parent=47 // pred_check_branch
          %356 = sbr.rel (%p354) target = $region68
        $region67: #{tpu_custom_call.1} parent=47 // pred_region
          %357 = dma.done [#allocation9], 48
        $region68: #{tpu_custom_call.1} parent=47 // pred_fallthru
          _
        %s358 = sand.u32 %s36, 1
        %s359 = scalar_lea.sflag [#allocation3], %s358
        %s360 = sand.u32 %s36, 1
        %s361 = smul.addr %s360, 4
        %s362 = scalar_lea.vmem [#allocation2], %s361
        %p363 = pneg %p49
        %p364 = pneg %p46
        %s365 = sand.u32 %s28, 1
        %s366 = scalar_lea.sflag [#allocation6], %s365
        %s367 = sand.u32 %s62, 1
        %s368 = smul.addr %s367, 4
        %s369 = scalar_lea.vmem [#allocation5], %s368
        %p370 = pneg %p75
        %p371 = pneg %p72
        %s372 = sand.u32 %s28, 1
        %s373 = scalar_lea.sflag [#allocation6], %s372
        %s374 = sand.u32 %s88, 1
        %s375 = smul.addr %s374, 4
        %s376 = scalar_lea.vmem [#allocation7], %s375
        %p377 = pneg %p101
        %p378 = pneg %p98
        %p379 = pneg %p122
        %p380 = pneg %p119
        %p381 = pneg %p143
        %p382 = pneg %p140
        %p383 = pneg %p164
        %p384 = pneg %p161
        %p385 = pneg %p185
        %p386 = pneg %p182
        %p387 = pneg %p211
        %p388 = pneg %p208
        %s389 = sand.u32 %s198, 1
        %s390 = scalar_lea.sflag [#allocation4], %s389
        %s391 = sand.u32 %s198, 1
        %s392 = smul.addr %s391, 8
        %s393 = scalar_lea.vmem [#allocation11], %s392
        %v395 = vld [vmem:[%s327] sm:$0xf]
        %v396 = vld [vmem:[%s336] sm:$0xf]
        %v397 = vld [vmem:[%s345] sm:$0xf]
        %v398 = vld [vmem:[#allocation8] sm:$0xf]
        %v399 = vld [vmem:[#allocation8 + $0x4] sm:$0xf]
        %v400 = vld [vmem:[#allocation8 + $0x8] sm:$0xf]
        %v401 = vld [vmem:[#allocation8 + $0xc] sm:$0xf]
        %v402 = vld [vmem:[#allocation10] sm:$0x1]
        %v404 = vlaneseq
        %v405 = vshrl.u32 %v404, 7
        %v406 = vsub.s32 0, %v405
        %v407 = vrot.slane %v402, %v406
        %v413 = vunpack.c.l.b16 %v398
        %v414 = vunpack.c.l.b16 %v399
        %v415 = vunpack.c.l.b16 %v400
        %v416 = vunpack.c.l.b16 %v401
        %v417 = vpack.c.b16 %v414, %v413
        %v418 = vpack.c.b16 %v416, %v415
        %vm421 = vcmask 261120
        %v423 = vsel %vm421, %v395, 0
        %425 = vmatprep.subr.bf16.mxu0 0
        %426 = vmatpush1.bf16.msra.mxu0 %v417
        %427 = vmatprep.subr.bf16.mxu0 0
        %428 = vmatpush1.bf16.msra.mxu0 %v418
        %429 = vmatprep.subr.bf16.mxu0 0
        %430 = vmatpush1.bf16.msra.mxu0 0
        %431 = vmatprep.subr.bf16.mxu0 0
        %432 = vmatpush1.bf16.msra.mxu0 0
        %433 = vmatprep.subr.bf16.mxu0 0
        %434 = vmatpush1.bf16.msra.mxu0 0
        %435 = vmatprep.subr.bf16.mxu0 0
        %436 = vmatpush1.bf16.msra.mxu0 0
        %437 = vmatprep.subr.bf16.mxu0 0
        %438 = vmatpush1.bf16.msra.mxu0 0
        %439 = vmatprep.subr.bf16.mxu0 0
        %440 = vmatpush1.bf16.msra.mxu0 0
        %441 = vmatprep.subr.bf16.mxu0 0
        %442 = vmatpush1.bf16.msra.mxu0 0
        %443 = vmatprep.subr.bf16.mxu0 0
        %444 = vmatpush1.bf16.msra.mxu0 0
        %445 = vmatprep.subr.bf16.mxu0 0
        %446 = vmatpush1.bf16.msra.mxu0 0
        %447 = vmatprep.subr.bf16.mxu0 0
        %448 = vmatpush1.bf16.msra.mxu0 0
        %449 = vmatprep.subr.bf16.mxu0 0
        %450 = vmatpush1.bf16.msra.mxu0 0
        %451 = vmatprep.subr.bf16.mxu0 0
        %452 = vmatpush1.bf16.msra.mxu0 0
        %453 = vmatprep.subr.bf16.mxu0 0
        %454 = vmatpush1.bf16.msra.mxu0 0
        %455 = vmatprep.subr.bf16.mxu0 0
        %456 = vmatpush1.bf16.msra.mxu0 0
        %457 = vmatprep.mubr.bf16.mxu0 0
        %458 = vmatmul.mubr.bf16.gmra.mrb[0].mxu0 %v423
        %v459 = vpop.f32.mrb[0].mxu0
        %v460 = vadd.f32 %v407, %v459
        %v461 = vpop.f32.mrb[0].mxu0
        %v462 = vpop.f32.mrb[0].mxu0
        %v463 = vpop.f32.mrb[0].mxu0
        %464 = vdwg.mxu0
        %s465 = scalar_lea.vmem [#allocation8], 16
        %v466 = vld [vmem:[%s465] sm:$0xf]
        %v467 = vld [vmem:[%s465 + $0x4] sm:$0xf]
        %v468 = vld [vmem:[%s465 + $0x8] sm:$0xf]
        %v469 = vld [vmem:[%s465 + $0xc] sm:$0xf]
        %s470 = scalar_lea.vmem [#allocation10], 1
        %v471 = vld [vmem:[%s470] sm:$0x1]
        %v473 = vlaneseq
        %v474 = vshrl.u32 %v473, 7
        %v475 = vsub.s32 0, %v474
        %v476 = vrot.slane %v471, %v475
        %v482 = vunpack.c.l.b16 %v466
        %v483 = vunpack.c.l.b16 %v467
        %v484 = vunpack.c.l.b16 %v468
        %v485 = vunpack.c.l.b16 %v469
        %v486 = vpack.c.b16 %v483, %v482
        %v487 = vpack.c.b16 %v485, %v484
        %v491 = vsel %vm421, %v396, 0
        %493 = vmatprep.subr.bf16.mxu0 0
        %494 = vmatpush1.bf16.msra.mxu0 %v486
        %495 = vmatprep.subr.bf16.mxu0 0
        %496 = vmatpush1.bf16.msra.mxu0 %v487
        %497 = vmatprep.subr.bf16.mxu0 0
        %498 = vmatpush1.bf16.msra.mxu0 0
        %499 = vmatprep.subr.bf16.mxu0 0
        %500 = vmatpush1.bf16.msra.mxu0 0
        %501 = vmatprep.subr.bf16.mxu0 0
        %502 = vmatpush1.bf16.msra.mxu0 0
        %503 = vmatprep.subr.bf16.mxu0 0
        %504 = vmatpush1.bf16.msra.mxu0 0
        %505 = vmatprep.subr.bf16.mxu0 0
        %506 = vmatpush1.bf16.msra.mxu0 0
        %507 = vmatprep.subr.bf16.mxu0 0
        %508 = vmatpush1.bf16.msra.mxu0 0
        %509 = vmatprep.subr.bf16.mxu0 0
        %510 = vmatpush1.bf16.msra.mxu0 0
        %511 = vmatprep.subr.bf16.mxu0 0
        %512 = vmatpush1.bf16.msra.mxu0 0
        %513 = vmatprep.subr.bf16.mxu0 0
        %514 = vmatpush1.bf16.msra.mxu0 0
        %515 = vmatprep.subr.bf16.mxu0 0
        %516 = vmatpush1.bf16.msra.mxu0 0
        %517 = vmatprep.subr.bf16.mxu0 0
        %518 = vmatpush1.bf16.msra.mxu0 0
        %519 = vmatprep.subr.bf16.mxu0 0
        %520 = vmatpush1.bf16.msra.mxu0 0
        %521 = vmatprep.subr.bf16.mxu0 0
        %522 = vmatpush1.bf16.msra.mxu0 0
        %523 = vmatprep.subr.bf16.mxu0 0
        %524 = vmatpush1.bf16.msra.mxu0 0
        %525 = vmatprep.mubr.bf16.mxu0 0
        %526 = vmatmul.mubr.bf16.gmra.mrb[0].mxu0 %v491
        %v527 = vpop.f32.mrb[0].mxu0
        %v528 = vadd.f32 %v476, %v527
        %v529 = vpop.f32.mrb[0].mxu0
        %v530 = vpop.f32.mrb[0].mxu0
        %v531 = vpop.f32.mrb[0].mxu0
        %532 = vdwg.mxu0
        %s533 = scalar_lea.vmem [#allocation8], 32
        %v534 = vld [vmem:[%s533] sm:$0xf]
        %v535 = vld [vmem:[%s533 + $0x4] sm:$0xf]
        %v536 = vld [vmem:[%s533 + $0x8] sm:$0xf]
        %v537 = vld [vmem:[%s533 + $0xc] sm:$0xf]
        %s538 = scalar_lea.vmem [#allocation10], 2
        %v539 = vld [vmem:[%s538] sm:$0x1]
        %v541 = vlaneseq
        %v542 = vshrl.u32 %v541, 7
        %v543 = vsub.s32 0, %v542
        %v544 = vrot.slane %v539, %v543
        %v550 = vunpack.c.l.b16 %v534
        %v551 = vunpack.c.l.b16 %v535
        %v552 = vunpack.c.l.b16 %v536
        %v553 = vunpack.c.l.b16 %v537
        %v554 = vpack.c.b16 %v551, %v550
        %v555 = vpack.c.b16 %v553, %v552
        %v559 = vsel %vm421, %v397, 0
        %561 = vmatprep.subr.bf16.mxu0 0
        %562 = vmatpush1.bf16.msra.mxu0 %v554
        %563 = vmatprep.subr.bf16.mxu0 0
        %564 = vmatpush1.bf16.msra.mxu0 %v555
        %565 = vmatprep.subr.bf16.mxu0 0
        %566 = vmatpush1.bf16.msra.mxu0 0
        %567 = vmatprep.subr.bf16.mxu0 0
        %568 = vmatpush1.bf16.msra.mxu0 0
        %569 = vmatprep.subr.bf16.mxu0 0
        %570 = vmatpush1.bf16.msra.mxu0 0
        %571 = vmatprep.subr.bf16.mxu0 0
        %572 = vmatpush1.bf16.msra.mxu0 0
        %573 = vmatprep.subr.bf16.mxu0 0
        %574 = vmatpush1.bf16.msra.mxu0 0
        %575 = vmatprep.subr.bf16.mxu0 0
        %576 = vmatpush1.bf16.msra.mxu0 0
        %577 = vmatprep.subr.bf16.mxu0 0
        %578 = vmatpush1.bf16.msra.mxu0 0
        %579 = vmatprep.subr.bf16.mxu0 0
        %580 = vmatpush1.bf16.msra.mxu0 0
        %581 = vmatprep.subr.bf16.mxu0 0
        %582 = vmatpush1.bf16.msra.mxu0 0
        %583 = vmatprep.subr.bf16.mxu0 0
        %584 = vmatpush1.bf16.msra.mxu0 0
        %585 = vmatprep.subr.bf16.mxu0 0
        %586 = vmatpush1.bf16.msra.mxu0 0
        %587 = vmatprep.subr.bf16.mxu0 0
        %588 = vmatpush1.bf16.msra.mxu0 0
        %589 = vmatprep.subr.bf16.mxu0 0
        %590 = vmatpush1.bf16.msra.mxu0 0
        %591 = vmatprep.subr.bf16.mxu0 0
        %592 = vmatpush1.bf16.msra.mxu0 0
        %593 = vmatprep.mubr.bf16.mxu0 0
        %594 = vmatmul.mubr.bf16.gmra.mrb[0].mxu0 %v559
        %v595 = vpop.f32.mrb[0].mxu0
        %v596 = vadd.f32 %v544, %v595
        %v597 = vpop.f32.mrb[0].mxu0
        %v598 = vpop.f32.mrb[0].mxu0
        %v599 = vpop.f32.mrb[0].mxu0
        %600 = vdwg.mxu0
        %v601 = vmul.f32 %v460, 0.35355338
        %v602 = vpack.c.bf16 %v601, %v601
        %v603 = vpack.c.bf16 %v528, %v528
        %v604 = vpack.c.bf16 %v596, %v596
        %vm605 = vcmask 64512
        %v607 = vsel %vm605, %v602, 0
        %v610 = vsel %vm605, %v603, 0
        %612 = vmatprep.subr.bf16.mxu0 0
        %613 = vmatpush1.bf16.xpose.msra.mxu0 %v610
        %614 = vmatprep.subr.bf16.mxu0 0
        %615 = vmatpush1.bf16.xpose.msra.mxu0 0
        %616 = vmatprep.subr.bf16.mxu0 0
        %617 = vmatpush1.bf16.xpose.msra.mxu0 0
        %618 = vmatprep.subr.bf16.mxu0 0
        %619 = vmatpush1.bf16.xpose.msra.mxu0 0
        %620 = vmatprep.subr.bf16.mxu0 0
        %621 = vmatpush1.bf16.xpose.msra.mxu0 0
        %622 = vmatprep.subr.bf16.mxu0 0
        %623 = vmatpush1.bf16.xpose.msra.mxu0 0
        %624 = vmatprep.subr.bf16.mxu0 0
        %625 = vmatpush1.bf16.xpose.msra.mxu0 0
        %626 = vmatprep.subr.bf16.mxu0 0
        %627 = vmatpush1.bf16.xpose.msra.mxu0 0
        %628 = vmatprep.subr.bf16.mxu0 0
        %629 = vmatpush1.bf16.xpose.msra.mxu0 0
        %630 = vmatprep.subr.bf16.mxu0 0
        %631 = vmatpush1.bf16.xpose.msra.mxu0 0
        %632 = vmatprep.subr.bf16.mxu0 0
        %633 = vmatpush1.bf16.xpose.msra.mxu0 0
        %634 = vmatprep.subr.bf16.mxu0 0
        %635 = vmatpush1.bf16.xpose.msra.mxu0 0
        %636 = vmatprep.subr.bf16.mxu0 0
        %637 = vmatpush1.bf16.xpose.msra.mxu0 0
        %638 = vmatprep.subr.bf16.mxu0 0
        %639 = vmatpush1.bf16.xpose.msra.mxu0 0
        %640 = vmatprep.subr.bf16.mxu0 0
        %641 = vmatpush1.bf16.xpose.msra.mxu0 0
        %642 = vmatprep.subr.bf16.mxu0 0
        %643 = vmatpush1.bf16.xpose.msra.mxu0 0
        %644 = vmatprep.mubr.bf16.mxu0 0
        %645 = vmatmul.mubr.bf16.gmra.mrb[0].mxu0 %v607
        %v646 = vpop.f32.mrb[0].mxu0
        %v647 = vadd.f32 0.0, %v646
        %v648 = vpop.f32.mrb[0].mxu0
        %v649 = vpop.f32.mrb[0].mxu0
        %v650 = vpop.f32.mrb[0].mxu0
        %651 = vdwg.mxu0
        %v652 = vsel %vm605, %v647, -inf
        %653 = vmax.xlane.f32.xlu0 %v652
        %v654 = vpop.xlane.xlu0 %653
        %v655 = vsub.f32 %v647, %v654
        %v656 = vmul.f32 %v655, 1.442695
        %v657 = vpow.pop %v656
        %v658 = vsel %vm605, %v657, 0.0
        %659 = vadd.xlane.f32.xlu0 %v658
        %v660 = vpop.xlane.xlu0 %659
        %v661 = vrcp.pop %v660
        %v662 = vmul.f32 %v657, %v661
        %v663 = vpack.c.bf16 %v662, %v662
        %v665 = vsel %vm605, %v663, 0
        %vm667 = vcmask 1043456
        %v669 = vsel %vm667, %v604, 0
        %671 = vmatprep.subr.bf16.mxu0 0
        %672 = vmatpush1.bf16.msra.mxu0 %v669
        %673 = vmatprep.subr.bf16.mxu0 0
        %674 = vmatpush1.bf16.msra.mxu0 0
        %675 = vmatprep.subr.bf16.mxu0 0
        %676 = vmatpush1.bf16.msra.mxu0 0
        %677 = vmatprep.subr.bf16.mxu0 0
        %678 = vmatpush1.bf16.msra.mxu0 0
        %679 = vmatprep.subr.bf16.mxu0 0
        %680 = vmatpush1.bf16.msra.mxu0 0
        %681 = vmatprep.subr.bf16.mxu0 0
        %682 = vmatpush1.bf16.msra.mxu0 0
        %683 = vmatprep.subr.bf16.mxu0 0
        %684 = vmatpush1.bf16.msra.mxu0 0
        %685 = vmatprep.subr.bf16.mxu0 0
        %686 = vmatpush1.bf16.msra.mxu0 0
        %687 = vmatprep.subr.bf16.mxu0 0
        %688 = vmatpush1.bf16.msra.mxu0 0
        %689 = vmatprep.subr.bf16.mxu0 0
        %690 = vmatpush1.bf16.msra.mxu0 0
        %691 = vmatprep.subr.bf16.mxu0 0
        %692 = vmatpush1.bf16.msra.mxu0 0
        %693 = vmatprep.subr.bf16.mxu0 0
        %694 = vmatpush1.bf16.msra.mxu0 0
        %695 = vmatprep.subr.bf16.mxu0 0
        %696 = vmatpush1.bf16.msra.mxu0 0
        %697 = vmatprep.subr.bf16.mxu0 0
        %698 = vmatpush1.bf16.msra.mxu0 0
        %699 = vmatprep.subr.bf16.mxu0 0
        %700 = vmatpush1.bf16.msra.mxu0 0
        %701 = vmatprep.subr.bf16.mxu0 0
        %702 = vmatpush1.bf16.msra.mxu0 0
        %703 = vmatprep.mubr.bf16.mxu0 0
        %704 = vmatmul.mubr.bf16.gmra.mrb[0].mxu0 %v665
        %v705 = vpop.f32.mrb[0].mxu0
        %v706 = vadd.f32 0.0, %v705
        %v707 = vpop.f32.mrb[0].mxu0
        %v708 = vpop.f32.mrb[0].mxu0
        %v709 = vpop.f32.mrb[0].mxu0
        %710 = vdwg.mxu0
        %v711 = vpack.c.bf16 %v706, %v706
        %713 = vrot.lane.b32.xlu0 %v602, 120
        %v714 = vpop.permute.xlu0 %713
        %716 = vrot.lane.b32.xlu0 %v603, 120
        %v717 = vpop.permute.xlu0 %716
        %v719 = vsel %vm605, %v714, 0
        %v722 = vsel %vm605, %v717, 0
        %724 = vmatprep.subr.bf16.mxu0 0
        %725 = vmatpush1.bf16.xpose.msra.mxu0 %v722
        %726 = vmatprep.subr.bf16.mxu0 0
        %727 = vmatpush1.bf16.xpose.msra.mxu0 0
        %728 = vmatprep.subr.bf16.mxu0 0
        %729 = vmatpush1.bf16.xpose.msra.mxu0 0
        %730 = vmatprep.subr.bf16.mxu0 0
        %731 = vmatpush1.bf16.xpose.msra.mxu0 0
        %732 = vmatprep.subr.bf16.mxu0 0
        %733 = vmatpush1.bf16.xpose.msra.mxu0 0
        %734 = vmatprep.subr.bf16.mxu0 0
        %735 = vmatpush1.bf16.xpose.msra.mxu0 0
        %736 = vmatprep.subr.bf16.mxu0 0
        %737 = vmatpush1.bf16.xpose.msra.mxu0 0
        %738 = vmatprep.subr.bf16.mxu0 0
        %739 = vmatpush1.bf16.xpose.msra.mxu0 0
        %740 = vmatprep.subr.bf16.mxu0 0
        %741 = vmatpush1.bf16.xpose.msra.mxu0 0
        %742 = vmatprep.subr.bf16.mxu0 0
        %743 = vmatpush1.bf16.xpose.msra.mxu0 0
        %744 = vmatprep.subr.bf16.mxu0 0
        %745 = vmatpush1.bf16.xpose.msra.mxu0 0
        %746 = vmatprep.subr.bf16.mxu0 0
        %747 = vmatpush1.bf16.xpose.msra.mxu0 0
        %748 = vmatprep.subr.bf16.mxu0 0
        %749 = vmatpush1.bf16.xpose.msra.mxu0 0
        %750 = vmatprep.subr.bf16.mxu0 0
        %751 = vmatpush1.bf16.xpose.msra.mxu0 0
        %752 = vmatprep.subr.bf16.mxu0 0
        %753 = vmatpush1.bf16.xpose.msra.mxu0 0
        %754 = vmatprep.subr.bf16.mxu0 0
        %755 = vmatpush1.bf16.xpose.msra.mxu0 0
        %756 = vmatprep.mubr.bf16.mxu0 0
        %757 = vmatmul.mubr.bf16.gmra.mrb[0].mxu0 %v719
        %v758 = vpop.f32.mrb[0].mxu0
        %v759 = vadd.f32 0.0, %v758
        %v760 = vpop.f32.mrb[0].mxu0
        %v761 = vpop.f32.mrb[0].mxu0
        %v762 = vpop.f32.mrb[0].mxu0
        %763 = vdwg.mxu0
        %v764 = vsel %vm605, %v759, -inf
        %765 = vmax.xlane.f32.xlu0 %v764
        %v766 = vpop.xlane.xlu0 %765
        %v767 = vsub.f32 %v759, %v766
        %v768 = vmul.f32 %v767, 1.442695
        %v769 = vpow.pop %v768
        %v770 = vsel %vm605, %v769, 0.0
        %771 = vadd.xlane.f32.xlu0 %v770
        %v772 = vpop.xlane.xlu0 %771
        %v773 = vrcp.pop %v772
        %v774 = vmul.f32 %v769, %v773
        %v775 = vpack.c.bf16 %v774, %v774
        %777 = vrot.lane.b32.xlu0 %v604, 120
        %v778 = vpop.permute.xlu0 %777
        %v780 = vsel %vm605, %v775, 0
        %v783 = vsel %vm667, %v778, 0
        %785 = vmatprep.subr.bf16.mxu0 0
        %786 = vmatpush1.bf16.msra.mxu0 %v783
        %787 = vmatprep.subr.bf16.mxu0 0
        %788 = vmatpush1.bf16.msra.mxu0 0
        %789 = vmatprep.subr.bf16.mxu0 0
        %790 = vmatpush1.bf16.msra.mxu0 0
        %791 = vmatprep.subr.bf16.mxu0 0
        %792 = vmatpush1.bf16.msra.mxu0 0
        %793 = vmatprep.subr.bf16.mxu0 0
        %794 = vmatpush1.bf16.msra.mxu0 0
        %795 = vmatprep.subr.bf16.mxu0 0
        %796 = vmatpush1.bf16.msra.mxu0 0
        %797 = vmatprep.subr.bf16.mxu0 0
        %798 = vmatpush1.bf16.msra.mxu0 0
        %799 = vmatprep.subr.bf16.mxu0 0
        %800 = vmatpush1.bf16.msra.mxu0 0
        %801 = vmatprep.subr.bf16.mxu0 0
        %802 = vmatpush1.bf16.msra.mxu0 0
        %803 = vmatprep.subr.bf16.mxu0 0
        %804 = vmatpush1.bf16.msra.mxu0 0
        %805 = vmatprep.subr.bf16.mxu0 0
        %806 = vmatpush1.bf16.msra.mxu0 0
        %807 = vmatprep.subr.bf16.mxu0 0
        %808 = vmatpush1.bf16.msra.mxu0 0
        %809 = vmatprep.subr.bf16.mxu0 0
        %810 = vmatpush1.bf16.msra.mxu0 0
        %811 = vmatprep.subr.bf16.mxu0 0
        %812 = vmatpush1.bf16.msra.mxu0 0
        %813 = vmatprep.subr.bf16.mxu0 0
        %814 = vmatpush1.bf16.msra.mxu0 0
        %815 = vmatprep.subr.bf16.mxu0 0
        %816 = vmatpush1.bf16.msra.mxu0 0
        %817 = vmatprep.mubr.bf16.mxu0 0
        %818 = vmatmul.mubr.bf16.gmra.mrb[0].mxu0 %v780
        %v819 = vpop.f32.mrb[0].mxu0
        %v820 = vadd.f32 0.0, %v819
        %v821 = vpop.f32.mrb[0].mxu0
        %v822 = vpop.f32.mrb[0].mxu0
        %v823 = vpop.f32.mrb[0].mxu0
        %824 = vdwg.mxu0
        %v825 = vpack.c.bf16 %v820, %v820
        %826 = vrot.lane.b32.xlu0 %v602, 112
        %v827 = vpop.permute.xlu0 %826
        %828 = vrot.lane.b32.xlu0 %v603, 112
        %v829 = vpop.permute.xlu0 %828
        %v831 = vsel %vm605, %v827, 0
        %v834 = vsel %vm605, %v829, 0
        %836 = vmatprep.subr.bf16.mxu0 0
        %837 = vmatpush1.bf16.xpose.msra.mxu0 %v834
        %838 = vmatprep.subr.bf16.mxu0 0
        %839 = vmatpush1.bf16.xpose.msra.mxu0 0
        %840 = vmatprep.subr.bf16.mxu0 0
        %841 = vmatpush1.bf16.xpose.msra.mxu0 0
        %842 = vmatprep.subr.bf16.mxu0 0
        %843 = vmatpush1.bf16.xpose.msra.mxu0 0
        %844 = vmatprep.subr.bf16.mxu0 0
        %845 = vmatpush1.bf16.xpose.msra.mxu0 0
        %846 = vmatprep.subr.bf16.mxu0 0
        %847 = vmatpush1.bf16.xpose.msra.mxu0 0
        %848 = vmatprep.subr.bf16.mxu0 0
        %849 = vmatpush1.bf16.xpose.msra.mxu0 0
        %850 = vmatprep.subr.bf16.mxu0 0
        %851 = vmatpush1.bf16.xpose.msra.mxu0 0
        %852 = vmatprep.subr.bf16.mxu0 0
        %853 = vmatpush1.bf16.xpose.msra.mxu0 0
        %854 = vmatprep.subr.bf16.mxu0 0
        %855 = vmatpush1.bf16.xpose.msra.mxu0 0
        %856 = vmatprep.subr.bf16.mxu0 0
        %857 = vmatpush1.bf16.xpose.msra.mxu0 0
        %858 = vmatprep.subr.bf16.mxu0 0
        %859 = vmatpush1.bf16.xpose.msra.mxu0 0
        %860 = vmatprep.subr.bf16.mxu0 0
        %861 = vmatpush1.bf16.xpose.msra.mxu0 0
        %862 = vmatprep.subr.bf16.mxu0 0
        %863 = vmatpush1.bf16.xpose.msra.mxu0 0
        %864 = vmatprep.subr.bf16.mxu0 0
        %865 = vmatpush1.bf16.xpose.msra.mxu0 0
        %866 = vmatprep.subr.bf16.mxu0 0
        %867 = vmatpush1.bf16.xpose.msra.mxu0 0
        %868 = vmatprep.mubr.bf16.mxu0 0
        %869 = vmatmul.mubr.bf16.gmra.mrb[0].mxu0 %v831
        %v870 = vpop.f32.mrb[0].mxu0
        %v871 = vadd.f32 0.0, %v870
        %v872 = vpop.f32.mrb[0].mxu0
        %v873 = vpop.f32.mrb[0].mxu0
        %v874 = vpop.f32.mrb[0].mxu0
        %875 = vdwg.mxu0
        %v876 = vsel %vm605, %v871, -inf
        %877 = vmax.xlane.f32.xlu0 %v876
        %v878 = vpop.xlane.xlu0 %877
        %v879 = vsub.f32 %v871, %v878
        %v880 = vmul.f32 %v879, 1.442695
        %v881 = vpow.pop %v880
        %v882 = vsel %vm605, %v881, 0.0
        %883 = vadd.xlane.f32.xlu0 %v882
        %v884 = vpop.xlane.xlu0 %883
        %v885 = vrcp.pop %v884
        %v886 = vmul.f32 %v881, %v885
        %v887 = vpack.c.bf16 %v886, %v886
        %888 = vrot.lane.b32.xlu0 %v604, 112
        %v889 = vpop.permute.xlu0 %888
        %v891 = vsel %vm605, %v887, 0
        %v894 = vsel %vm667, %v889, 0
        %896 = vmatprep.subr.bf16.mxu0 0
        %897 = vmatpush1.bf16.msra.mxu0 %v894
        %898 = vmatprep.subr.bf16.mxu0 0
        %899 = vmatpush1.bf16.msra.mxu0 0
        %900 = vmatprep.subr.bf16.mxu0 0
        %901 = vmatpush1.bf16.msra.mxu0 0
        %902 = vmatprep.subr.bf16.mxu0 0
        %903 = vmatpush1.bf16.msra.mxu0 0
        %904 = vmatprep.subr.bf16.mxu0 0
        %905 = vmatpush1.bf16.msra.mxu0 0
        %906 = vmatprep.subr.bf16.mxu0 0
        %907 = vmatpush1.bf16.msra.mxu0 0
        %908 = vmatprep.subr.bf16.mxu0 0
        %909 = vmatpush1.bf16.msra.mxu0 0
        %910 = vmatprep.subr.bf16.mxu0 0
        %911 = vmatpush1.bf16.msra.mxu0 0
        %912 = vmatprep.subr.bf16.mxu0 0
        %913 = vmatpush1.bf16.msra.mxu0 0
        %914 = vmatprep.subr.bf16.mxu0 0
        %915 = vmatpush1.bf16.msra.mxu0 0
        %916 = vmatprep.subr.bf16.mxu0 0
        %917 = vmatpush1.bf16.msra.mxu0 0
        %918 = vmatprep.subr.bf16.mxu0 0
        %919 = vmatpush1.bf16.msra.mxu0 0
        %920 = vmatprep.subr.bf16.mxu0 0
        %921 = vmatpush1.bf16.msra.mxu0 0
        %922 = vmatprep.subr.bf16.mxu0 0
        %923 = vmatpush1.bf16.msra.mxu0 0
        %924 = vmatprep.subr.bf16.mxu0 0
        %925 = vmatpush1.bf16.msra.mxu0 0
        %926 = vmatprep.subr.bf16.mxu0 0
        %927 = vmatpush1.bf16.msra.mxu0 0
        %928 = vmatprep.mubr.bf16.mxu0 0
        %929 = vmatmul.mubr.bf16.gmra.mrb[0].mxu0 %v891
        %v930 = vpop.f32.mrb[0].mxu0
        %v931 = vadd.f32 0.0, %v930
        %v932 = vpop.f32.mrb[0].mxu0
        %v933 = vpop.f32.mrb[0].mxu0
        %v934 = vpop.f32.mrb[0].mxu0
        %935 = vdwg.mxu0
        %v936 = vpack.c.bf16 %v931, %v931
        %937 = vrot.lane.b32.xlu0 %v602, 104
        %v938 = vpop.permute.xlu0 %937
        %939 = vrot.lane.b32.xlu0 %v603, 104
        %v940 = vpop.permute.xlu0 %939
        %v942 = vsel %vm605, %v938, 0
        %v945 = vsel %vm605, %v940, 0
        %947 = vmatprep.subr.bf16.mxu0 0
        %948 = vmatpush1.bf16.xpose.msra.mxu0 %v945
        %949 = vmatprep.subr.bf16.mxu0 0
        %950 = vmatpush1.bf16.xpose.msra.mxu0 0
        %951 = vmatprep.subr.bf16.mxu0 0
        %952 = vmatpush1.bf16.xpose.msra.mxu0 0
        %953 = vmatprep.subr.bf16.mxu0 0
        %954 = vmatpush1.bf16.xpose.msra.mxu0 0
        %955 = vmatprep.subr.bf16.mxu0 0
        %956 = vmatpush1.bf16.xpose.msra.mxu0 0
        %957 = vmatprep.subr.bf16.mxu0 0
        %958 = vmatpush1.bf16.xpose.msra.mxu0 0
        %959 = vmatprep.subr.bf16.mxu0 0
        %960 = vmatpush1.bf16.xpose.msra.mxu0 0
        %961 = vmatprep.subr.bf16.mxu0 0
        %962 = vmatpush1.bf16.xpose.msra.mxu0 0
        %963 = vmatprep.subr.bf16.mxu0 0
        %964 = vmatpush1.bf16.xpose.msra.mxu0 0
        %965 = vmatprep.subr.bf16.mxu0 0
        %966 = vmatpush1.bf16.xpose.msra.mxu0 0
        %967 = vmatprep.subr.bf16.mxu0 0
        %968 = vmatpush1.bf16.xpose.msra.mxu0 0
        %969 = vmatprep.subr.bf16.mxu0 0
        %970 = vmatpush1.bf16.xpose.msra.mxu0 0
        %971 = vmatprep.subr.bf16.mxu0 0
        %972 = vmatpush1.bf16.xpose.msra.mxu0 0
        %973 = vmatprep.subr.bf16.mxu0 0
        %974 = vmatpush1.bf16.xpose.msra.mxu0 0
        %975 = vmatprep.subr.bf16.mxu0 0
        %976 = vmatpush1.bf16.xpose.msra.mxu0 0
        %977 = vmatprep.subr.bf16.mxu0 0
        %978 = vmatpush1.bf16.xpose.msra.mxu0 0
        %979 = vmatprep.mubr.bf16.mxu0 0
        %980 = vmatmul.mubr.bf16.gmra.mrb[0].mxu0 %v942
        %v981 = vpop.f32.mrb[0].mxu0
        %v982 = vadd.f32 0.0, %v981
        %v983 = vpop.f32.mrb[0].mxu0
        %v984 = vpop.f32.mrb[0].mxu0
        %v985 = vpop.f32.mrb[0].mxu0
        %986 = vdwg.mxu0
        %v987 = vsel %vm605, %v982, -inf
        %988 = vmax.xlane.f32.xlu0 %v987
        %v989 = vpop.xlane.xlu0 %988
        %v990 = vsub.f32 %v982, %v989
        %v991 = vmul.f32 %v990, 1.442695
        %v992 = vpow.pop %v991
        %v993 = vsel %vm605, %v992, 0.0
        %994 = vadd.xlane.f32.xlu0 %v993
        %v995 = vpop.xlane.xlu0 %994
        %v996 = vrcp.pop %v995
        %v997 = vmul.f32 %v992, %v996
        %v998 = vpack.c.bf16 %v997, %v997
        %999 = vrot.lane.b32.xlu0 %v604, 104
        %v1000 = vpop.permute.xlu0 %999
        %v1002 = vsel %vm605, %v998, 0
        %v1005 = vsel %vm667, %v1000, 0
        %1007 = vmatprep.subr.bf16.mxu0 0
        %1008 = vmatpush1.bf16.msra.mxu0 %v1005
        %1009 = vmatprep.subr.bf16.mxu0 0
        %1010 = vmatpush1.bf16.msra.mxu0 0
        %1011 = vmatprep.subr.bf16.mxu0 0
        %1012 = vmatpush1.bf16.msra.mxu0 0
        %1013 = vmatprep.subr.bf16.mxu0 0
        %1014 = vmatpush1.bf16.msra.mxu0 0
        %1015 = vmatprep.subr.bf16.mxu0 0
        %1016 = vmatpush1.bf16.msra.mxu0 0
        %1017 = vmatprep.subr.bf16.mxu0 0
        %1018 = vmatpush1.bf16.msra.mxu0 0
        %1019 = vmatprep.subr.bf16.mxu0 0
        %1020 = vmatpush1.bf16.msra.mxu0 0
        %1021 = vmatprep.subr.bf16.mxu0 0
        %1022 = vmatpush1.bf16.msra.mxu0 0
        %1023 = vmatprep.subr.bf16.mxu0 0
        %1024 = vmatpush1.bf16.msra.mxu0 0
        %1025 = vmatprep.subr.bf16.mxu0 0
        %1026 = vmatpush1.bf16.msra.mxu0 0
        %1027 = vmatprep.subr.bf16.mxu0 0
        %1028 = vmatpush1.bf16.msra.mxu0 0
        %1029 = vmatprep.subr.bf16.mxu0 0
        %1030 = vmatpush1.bf16.msra.mxu0 0
        %1031 = vmatprep.subr.bf16.mxu0 0
        %1032 = vmatpush1.bf16.msra.mxu0 0
        %1033 = vmatprep.subr.bf16.mxu0 0
        %1034 = vmatpush1.bf16.msra.mxu0 0
        %1035 = vmatprep.subr.bf16.mxu0 0
        %1036 = vmatpush1.bf16.msra.mxu0 0
        %1037 = vmatprep.subr.bf16.mxu0 0
        %1038 = vmatpush1.bf16.msra.mxu0 0
        %1039 = vmatprep.mubr.bf16.mxu0 0
        %1040 = vmatmul.mubr.bf16.gmra.mrb[0].mxu0 %v1002
        %v1041 = vpop.f32.mrb[0].mxu0
        %v1042 = vadd.f32 0.0, %v1041
        %v1043 = vpop.f32.mrb[0].mxu0
        %v1044 = vpop.f32.mrb[0].mxu0
        %v1045 = vpop.f32.mrb[0].mxu0
        %1046 = vdwg.mxu0
        %v1047 = vpack.c.bf16 %v1042, %v1042
        %1049 = vrot.lane.b32.xlu0 %v825, 8
        %v1050 = vpop.permute.xlu0 %1049
        %1052 = vrot.lane.b32.xlu0 %v936, 16
        %v1053 = vpop.permute.xlu0 %1052
        %1055 = vrot.lane.b32.xlu0 %v1047, 24
        %v1056 = vpop.permute.xlu0 %1055
        %v1059 = vsel %vm605, %v711, %v1050
        %vm1060 = vcmask 130048
        %v1062 = vsel %vm1060, %v1059, %v1053
        %vm1063 = vcmask 195584
        %v1065 = vsel %vm1063, %v1062, %v1056
        %v1066 = vld [vmem:[%s5] sm:$0xf]
        %v1067 = vld [vmem:[%s5 + $0x4] sm:$0xf]
        %v1068 = vld [vmem:[%s5 + $0x8] sm:$0xf]
        %v1069 = vld [vmem:[%s5 + $0xc] sm:$0xf]
        %v1070 = vld [vmem:[%s6] sm:$0x1]
        %v1072 = vlaneseq
        %v1073 = vshrl.u32 %v1072, 7
        %v1074 = vsub.s32 0, %v1073
        %v1075 = vrot.slane %v1070, %v1074
        %v1081 = vunpack.c.l.b16 %v1066
        %v1082 = vunpack.c.l.b16 %v1067
        %v1083 = vunpack.c.l.b16 %v1068
        %v1084 = vunpack.c.l.b16 %v1069
        %v1085 = vpack.c.b16 %v1082, %v1081
        %v1086 = vpack.c.b16 %v1084, %v1083
        %v1089 = vsel %vm421, %v1065, 0
        %1091 = vmatprep.subr.bf16.mxu0 0
        %1092 = vmatpush1.bf16.msra.mxu0 %v1085
        %1093 = vmatprep.subr.bf16.mxu0 0
        %1094 = vmatpush1.bf16.msra.mxu0 %v1086
        %1095 = vmatprep.subr.bf16.mxu0 0
        %1096 = vmatpush1.bf16.msra.mxu0 0
        %1097 = vmatprep.subr.bf16.mxu0 0
        %1098 = vmatpush1.bf16.msra.mxu0 0
        %1099 = vmatprep.subr.bf16.mxu0 0
        %1100 = vmatpush1.bf16.msra.mxu0 0
        %1101 = vmatprep.subr.bf16.mxu0 0
        %1102 = vmatpush1.bf16.msra.mxu0 0
        %1103 = vmatprep.subr.bf16.mxu0 0
        %1104 = vmatpush1.bf16.msra.mxu0 0
        %1105 = vmatprep.subr.bf16.mxu0 0
        %1106 = vmatpush1.bf16.msra.mxu0 0
        %1107 = vmatprep.subr.bf16.mxu0 0
        %1108 = vmatpush1.bf16.msra.mxu0 0
        %1109 = vmatprep.subr.bf16.mxu0 0
        %1110 = vmatpush1.bf16.msra.mxu0 0
        %1111 = vmatprep.subr.bf16.mxu0 0
        %1112 = vmatpush1.bf16.msra.mxu0 0
        %1113 = vmatprep.subr.bf16.mxu0 0
        %1114 = vmatpush1.bf16.msra.mxu0 0
        %1115 = vmatprep.subr.bf16.mxu0 0
        %1116 = vmatpush1.bf16.msra.mxu0 0
        %1117 = vmatprep.subr.bf16.mxu0 0
        %1118 = vmatpush1.bf16.msra.mxu0 0
        %1119 = vmatprep.subr.bf16.mxu0 0
        %1120 = vmatpush1.bf16.msra.mxu0 0
        %1121 = vmatprep.subr.bf16.mxu0 0
        %1122 = vmatpush1.bf16.msra.mxu0 0
        %1123 = vmatprep.mubr.bf16.mxu0 0
        %1124 = vmatmul.mubr.bf16.gmra.mrb[0].mxu0 %v1089
        %v1125 = vpop.f32.mrb[0].mxu0
        %v1126 = vadd.f32 %v1075, %v1125
        %v1127 = vpop.f32.mrb[0].mxu0
        %v1128 = vpop.f32.mrb[0].mxu0
        %v1129 = vpop.f32.mrb[0].mxu0
        %1130 = vdwg.mxu0
        %1131 = vst.msk [vmem:[%s393] sm:$0xff] %vm421, %v1126
        %s1132 = sand.u32 %s198, 1
        %s1133 = scalar_lea.sflag [#allocation4], %s1132
        %s1134 = sand.u32 %s198, 1
        %s1135 = smul.addr %s1134, 8
        %s1136 = scalar_lea.vmem [#allocation11], %s1135
        // Predicated region
        $region69: #{tpu_custom_call.1} parent=47 // pred_check
          %p1137 = pneg %p208
        $region70: #{tpu_custom_call.1} parent=47 // pred_check_branch
          %1139 = sbr.rel (%p1137) target = $region72
        $region71: #{tpu_custom_call.1} parent=47 // pred_region
          %s1141 = ssub.s32 128, 128
          %1142 = vsyncadd %s1133, %s1141
          %s1143 = smul.addr %s28, 128
          %s1144 = scalar_lea.hbm %s7, %s1143
          %s1146 = sshll.u32 %s1136, 4
          %s1147 = int_to_ptr.vmem [resolvable:$true] %s1146
          %1149 = dma.vmem_to_hbm [thread:$0]  %s1147, 128, %s1144, %s1133
        $region72: #{tpu_custom_call.1} parent=47 // pred_fallthru
          _
      $region48: #{tpu_custom_call.1} parent=5 // pred_fallthru
        _
      %p1150 = scmp.le.s32.totalorder 2, %s23
      // Predicated region
      $region73: #{tpu_custom_call.1} parent=5 // pred_check
        %p1151 = pneg %p1150
      $region74: #{tpu_custom_call.1} parent=5 // pred_check_branch
        %1153 = sbr.rel (%p1151) target = $region76
      $region75: #{tpu_custom_call.1} parent=5 // pred_region
        %s1154 = ssub.s32 %s23, 2
        // Predicated region
        $region77: #{tpu_custom_call.1} parent=75 // pred_check
          %p1155 = pneg %p214
        $region78: #{tpu_custom_call.1} parent=75 // pred_check_branch
          %1157 = sbr.rel (%p1155) target = $region80
        $region79: #{tpu_custom_call.1} parent=75 // pred_region
          %s1158 = sand.u32 %s199, 1
          %s1159 = scalar_lea.sflag [#allocation4], %s1158
          %s1160 = sand.u32 %s199, 1
          %s1161 = smul.addr %s1160, 8
          %s1162 = scalar_lea.vmem [#allocation11], %s1161
          %1163 = dma.done %s1159, 128
        $region80: #{tpu_custom_call.1} parent=75 // pred_fallthru
          _
      $region76: #{tpu_custom_call.1} parent=5 // pred_fallthru
        _
    $region6: #{tpu_custom_call.1} parent=1 // loop_footer
      %s27 = sadd.s32 1, %s23
    $region7: #{tpu_custom_call.1} parent=1 // loop_footer_branch
      %22 = sbr.rel target = $region3
    $region8: #{tpu_custom_call.1} parent=1 // loop_exit
      _
    %1164 = vsyncpa [#allocation3], 1
    %s1165 = scalar_lea.sflag [#allocation3], 1
    %1166 = vsyncpa %s1165, 1
    %1167 = vsyncpa [#allocation6], 1
    %s1168 = scalar_lea.sflag [#allocation6], 1
    %1169 = vsyncpa %s1168, 1
    %1170 = vsyncpa [#allocation9], 1
    %1171 = vsyncpa [#allocation4], 1
    %s1172 = scalar_lea.sflag [#allocation4], 1
    %1173 = vsyncpa %s1172, 1

// kernel: tpu_custom_call.1
$region0: #{tpu_custom_call.1}
  #allocation0 [shape = 'u32[]', space=smem, size = 0x4, offset = 0x4, fixed_abs, tag = 'smem constant byte address 0x4 - core index']
  #allocation1 [shape = 'u32[144,128]{1,0:T(1,128)}', space=vmem, size = 0x12000, scoped, tag = 'internal scratch']
  %s0 = inlined_call_operand.hbm [shape: bf16[2,8,32], index: 0, kind: input, shape index: {}]
  %s1 = inlined_call_operand.hbm [shape: bf16[2,8,32], index: 1, kind: input, shape index: {}]
  %s2 = inlined_call_operand.hbm [shape: bf16[2,8,32], index: 2, kind: input, shape index: {}]
  %s3 = inlined_call_operand.hbm [shape: bf16[3,32,32], index: 3, kind: input, shape index: {}]
  %s4 = inlined_call_operand.hbm [shape: f32[3,1,32], index: 4, kind: input, shape index: {}]
  %s5 = inlined_call_operand.vmem [shape: bf16[32,32], index: 5, kind: input, shape index: {}]
  %s6 = inlined_call_operand.vmem [shape: f32[1,32], index: 6, kind: input, shape index: {}]
  %s7 = inlined_call_operand.hbm [shape: f32[2,8,32], index: 7, kind: output, shape index: {}]
  %s8 = sld [smem:[#allocation0]]
  $region81: #{tpu_custom_call.1} parent=0
    _
  %s10 = ssub.s32 1, %s8
  %s11 = scalar_select 0, %s10, %s8
  $region1: #{tpu_custom_call.1} parent=0
    #allocation2 [shape = 'u8[4096]{0}', space=vmem, size = 0x1000, scoped, tag = 'input window, operand 0']
    #allocation3 [shape = 's32[2]{0}', space=sflag, size = 0x8, scoped, tag = 'scoped memory for tpu_custom_call.1']
    #allocation4 [shape = 's32[2]{0}', space=sflag, size = 0x8, scoped, tag = 'scoped memory for tpu_custom_call.1']
    #allocation5 [shape = 'u8[4096]{0}', space=vmem, size = 0x1000, scoped, tag = 'input window, operand 1']
    #allocation6 [shape = 's32[2]{0}', space=sflag, size = 0x8, scoped, tag = 'scoped memory for tpu_custom_call.1']
    #allocation7 [shape = 'u8[4096]{0}', space=vmem, size = 0x1000, scoped, tag = 'input window, operand 2']
    #allocation8 [shape = 'u8[24576]{0}', space=vmem, size = 0x6000, scoped, tag = 'input window, operand 3, single buffered']
    #allocation9 [shape = 's32[1]{0}', space=sflag, size = 0x4, scoped, tag = 'scoped memory for tpu_custom_call.1']
    #allocation10 [shape = 'u8[1536]{0}', space=vmem, size = 0x800, scoped, tag = 'input window, operand 4, single buffered']
    #allocation11 [shape = 'u8[8192]{0}', space=vmem, size = 0x2000, scoped, tag = 'output window, operand 0']
    %12 = vsyncpa [#allocation3], 0
    %s13 = scalar_lea.sflag [#allocation3], 1
    %14 = vsyncpa %s13, 0
    %15 = vsyncpa [#allocation6], 0
    %s16 = scalar_lea.sflag [#allocation6], 1
    %17 = vsyncpa %s16, 0
    %18 = vsyncpa [#allocation9], 0
    %19 = vsyncpa [#allocation4], 0
    %s20 = scalar_lea.sflag [#allocation4], 1
    %21 = vsyncpa %s20, 0
    loop: start=0, step=1, limit=4
    $region2: #{tpu_custom_call.1} parent=1 // loop_pre_header
      _
    $region3: #{tpu_custom_call.1} parent=1 // loop_header
      %s23 = sphi 0, %s27
      %p24 = scmp.ge.s32.totalorder %s23, 4
      %s33 = sphi 0, %s35
      %s36 = sphi 0, %s33
      %s37 = sphi 0, %s36
      %s53 = sphi 0, %s37
      %s59 = sphi 0, %s61
      %s62 = sphi 0, %s59
      %s63 = sphi 0, %s62
      %s79 = sphi 0, %s63
      %s85 = sphi 0, %s87
      %s88 = sphi 0, %s85
      %s89 = sphi 0, %s88
      %s105 = sphi 0, %s89
      %s109 = sphi 0, %s109
      %s111 = sphi 0, %s109
      %s112 = sphi 0, %s111
      %s126 = sphi 0, %s112
      %s130 = sphi 0, %s130
      %s132 = sphi 0, %s130
      %s133 = sphi 0, %s132
      %s147 = sphi 0, %s133
      %s151 = sphi 0, %s151
      %s153 = sphi 0, %s151
      %s154 = sphi 0, %s153
      %s168 = sphi 0, %s154
      %s172 = sphi 0, %s172
      %s174 = sphi 0, %s172
      %s175 = sphi 0, %s174
      %s189 = sphi 0, %s175
      %s195 = sphi 0, %s197
      %s198 = sphi 0, %s195
      %s199 = sphi 0, %s198
      %s215 = sphi 0, %s199
    $region4: #{tpu_custom_call.1} parent=1 // loop_header_branch
      %26 = sbr.rel (%p24) target = $region8
    $region5: #{tpu_custom_call.1} parent=1 // loop_body
      %s28 = ssub.s32 %s23, 1
      %s29 = ssub.s32 %s23, 2
      %s30 = sadd.s32 %s23, 1
      %s31 = ssub.s32 %s23, %s30
      %p32 = scmp.eq.s32.totalorder %s31, 0
      %s34 = sadd.s32 %s33, 1
      %s35 = scalar_select %p32, %s33, %s34
      %p38 = pneg %p32
      %p39 = scmp.eq.s32.totalorder %s23, 1
      %p40 = por %p38, %p39
      %p41 = scmp.ne.s32.totalorder %s33, %s36
      %p42 = scmp.eq.s32.totalorder %s23, 0
      %p43 = por %p41, %p42
      %p44 = scmp.ne.s32.totalorder %s33, %s36
      %p45 = scmp.eq.s32.totalorder %s28, 1
      %p46 = por %p44, %p45
      %p47 = scmp.ne.s32.totalorder %s36, %s37
      %p48 = scmp.eq.s32.totalorder %s28, 0
      %p49 = por %p47, %p48
      %p50 = scmp.ne.s32.totalorder %s36, %s37
      %p51 = scmp.eq.s32.totalorder %s29, 1
      %p52 = por %p50, %p51
      %p54 = scmp.ne.s32.totalorder %s37, %s53
      %p55 = scmp.eq.s32.totalorder %s29, 0
      %p56 = por %p54, %p55
      %s57 = ssub.s32 %s23, %s30
      %p58 = scmp.eq.s32.totalorder %s57, 0
      %s60 = sadd.s32 %s59, 1
      %s61 = scalar_select %p58, %s59, %s60
      %p64 = pneg %p58
      %p65 = scmp.eq.s32.totalorder %s23, 1
      %p66 = por %p64, %p65
      %p67 = scmp.ne.s32.totalorder %s59, %s62
      %p68 = scmp.eq.s32.totalorder %s23, 0
      %p69 = por %p67, %p68
      %p70 = scmp.ne.s32.totalorder %s59, %s62
      %p71 = scmp.eq.s32.totalorder %s28, 1
      %p72 = por %p70, %p71
      %p73 = scmp.ne.s32.totalorder %s62, %s63
      %p74 = scmp.eq.s32.totalorder %s28, 0
      %p75 = por %p73, %p74
      %p76 = scmp.ne.s32.totalorder %s62, %s63
      %p77 = scmp.eq.s32.totalorder %s29, 1
      %p78 = por %p76, %p77
      %p80 = scmp.ne.s32.totalorder %s63, %s79
      %p81 = scmp.eq.s32.totalorder %s29, 0
      %p82 = por %p80, %p81
      %s83 = ssub.s32 %s23, %s30
      %p84 = scmp.eq.s32.totalorder %s83, 0
      %s86 = sadd.s32 %s85, 1
      %s87 = scalar_select %p84, %s85, %s86
      %p90 = pneg %p84
      %p91 = scmp.eq.s32.totalorder %s23, 1
      %p92 = por %p90, %p91
      %p93 = scmp.ne.s32.totalorder %s85, %s88
      %p94 = scmp.eq.s32.totalorder %s23, 0
      %p95 = por %p93, %p94
      %p96 = scmp.ne.s32.totalorder %s85, %s88
      %p97 = scmp.eq.s32.totalorder %s28, 1
      %p98 = por %p96, %p97
      %p99 = scmp.ne.s32.totalorder %s88, %s89
      %p100 = scmp.eq.s32.totalorder %s28, 0
      %p101 = por %p99, %p100
      %p102 = scmp.ne.s32.totalorder %s88, %s89
      %p103 = scmp.eq.s32.totalorder %s29, 1
      %p104 = por %p102, %p103
      %p106 = scmp.ne.s32.totalorder %s89, %s105
      %p107 = scmp.eq.s32.totalorder %s29, 0
      %p108 = por %p106, %p107
      %s110 = sadd.s32 %s109, 1
      %p113 = scmp.eq.s32.totalorder %s23, 1
      %p114 = scmp.ne.s32.totalorder %s109, %s111
      %p115 = scmp.eq.s32.totalorder %s23, 0
      %p116 = por %p114, %p115
      %p117 = scmp.ne.s32.totalorder %s109, %s111
      %p118 = scmp.eq.s32.totalorder %s28, 1
      %p119 = por %p117, %p118
      %p120 = scmp.ne.s32.totalorder %s111, %s112
      %p121 = scmp.eq.s32.totalorder %s28, 0
      %p122 = por %p120, %p121
      %p123 = scmp.ne.s32.totalorder %s111, %s112
      %p124 = scmp.eq.s32.totalorder %s29, 1
      %p125 = por %p123, %p124
      %p127 = scmp.ne.s32.totalorder %s112, %s126
      %p128 = scmp.eq.s32.totalorder %s29, 0
      %p129 = por %p127, %p128
      %s131 = sadd.s32 %s130, 1
      %p134 = scmp.eq.s32.totalorder %s23, 1
      %p135 = scmp.ne.s32.totalorder %s130, %s132
      %p136 = scmp.eq.s32.totalorder %s23, 0
      %p137 = por %p135, %p136
      %p138 = scmp.ne.s32.totalorder %s130, %s132
      %p139 = scmp.eq.s32.totalorder %s28, 1
      %p140 = por %p138, %p139
      %p141 = scmp.ne.s32.totalorder %s132, %s133
      %p142 = scmp.eq.s32.totalorder %s28, 0
      %p143 = por %p141, %p142
      %p144 = scmp.ne.s32.totalorder %s132, %s133
      %p145 = scmp.eq.s32.totalorder %s29, 1
      %p146 = por %p144, %p145
      %p148 = scmp.ne.s32.totalorder %s133, %s147
      %p149 = scmp.eq.s32.totalorder %s29, 0
      %p150 = por %p148, %p149
      %s152 = sadd.s32 %s151, 1
      %p155 = scmp.eq.s32.totalorder %s23, 1
      %p156 = scmp.ne.s32.totalorder %s151, %s153
      %p157 = scmp.eq.s32.totalorder %s23, 0
      %p158 = por %p156, %p157
      %p159 = scmp.ne.s32.totalorder %s151, %s153
      %p160 = scmp.eq.s32.totalorder %s28, 1
      %p161 = por %p159, %p160
      %p162 = scmp.ne.s32.totalorder %s153, %s154
      %p163 = scmp.eq.s32.totalorder %s28, 0
      %p164 = por %p162, %p163
      %p165 = scmp.ne.s32.totalorder %s153, %s154
      %p166 = scmp.eq.s32.totalorder %s29, 1
      %p167 = por %p165, %p166
      %p169 = scmp.ne.s32.totalorder %s154, %s168
      %p170 = scmp.eq.s32.totalorder %s29, 0
      %p171 = por %p169, %p170
      %s173 = sadd.s32 %s172, 1
      %p176 = scmp.eq.s32.totalorder %s23, 1
      %p177 = scmp.ne.s32.totalorder %s172, %s174
      %p178 = scmp.eq.s32.totalorder %s23, 0
      %p179 = por %p177, %p178
      %p180 = scmp.ne.s32.totalorder %s172, %s174
      %p181 = scmp.eq.s32.totalorder %s28, 1
      %p182 = por %p180, %p181
      %p183 = scmp.ne.s32.totalorder %s174, %s175
      %p184 = scmp.eq.s32.totalorder %s28, 0
      %p185 = por %p183, %p184
      %p186 = scmp.ne.s32.totalorder %s174, %s175
      %p187 = scmp.eq.s32.totalorder %s29, 1
      %p188 = por %p186, %p187
      %p190 = scmp.ne.s32.totalorder %s175, %s189
      %p191 = scmp.eq.s32.totalorder %s29, 0
      %p192 = por %p190, %p191
      %s193 = ssub.s32 %s23, %s30
      %p194 = scmp.eq.s32.totalorder %s193, 0
      %s196 = sadd.s32 %s195, 1
      %s197 = scalar_select %p194, %s195, %s196
      %p200 = pneg %p194
      %p201 = scmp.eq.s32.totalorder %s23, 1
      %p202 = por %p200, %p201
      %p203 = scmp.ne.s32.totalorder %s195, %s198
      %p204 = scmp.eq.s32.totalorder %s23, 0
      %p205 = por %p203, %p204
      %p206 = scmp.ne.s32.totalorder %s195, %s198
      %p207 = scmp.eq.s32.totalorder %s28, 1
      %p208 = por %p206, %p207
      %p209 = scmp.ne.s32.totalorder %s198, %s199
      %p210 = scmp.eq.s32.totalorder %s28, 0
      %p211 = por %p209, %p210
      %p212 = scmp.ne.s32.totalorder %s198, %s199
      %p213 = scmp.eq.s32.totalorder %s29, 1
      %p214 = por %p212, %p213
      %p216 = scmp.ne.s32.totalorder %s199, %s215
      %p217 = scmp.eq.s32.totalorder %s29, 0
      %p218 = por %p216, %p217
      %p219 = scmp.le.s32.totalorder 1, %s23
      %p220 = scmp.lt.s32.totalorder %s23, 3
      %p221 = pnand %p219, %p220
      %p222 = pneg %p221
      // Predicated region
      $region9: #{tpu_custom_call.1} parent=5 // pred_check
        _
      $region10: #{tpu_custom_call.1} parent=5 // pred_check_branch
        %224 = sbr.rel (%p221) target = $region12
      $region11: #{tpu_custom_call.1} parent=5 // pred_region
        %s225 = ssub.s32 %s23, 1
        // Predicated region
        $region13: #{tpu_custom_call.1} parent=11 // pred_check
          %p226 = pneg %p122
        $region14: #{tpu_custom_call.1} parent=11 // pred_check_branch
          %228 = sbr.rel (%p226) target = $region16
        $region15: #{tpu_custom_call.1} parent=11 // pred_region
          %s230 = ssub.s32 768, 768
          %231 = vsyncadd [#allocation9], %s230
          %s232 = sshll.u32 [#allocation8], 4
          %s233 = int_to_ptr.vmem [resolvable:$true] %s232
          %238 = dma.hbm_to_vmem [thread:$0]  %s3, 768, %s233, [#allocation9], 64, 64, 4
        $region16: #{tpu_custom_call.1} parent=11 // pred_fallthru
          _
        // Predicated region
        $region17: #{tpu_custom_call.1} parent=11 // pred_check
          %p239 = pneg %p143
        $region18: #{tpu_custom_call.1} parent=11 // pred_check_branch
          %241 = sbr.rel (%p239) target = $region20
        $region19: #{tpu_custom_call.1} parent=11 // pred_region
          %s243 = ssub.s32 48, 48
          %244 = vsyncadd [#allocation9], %s243
          %s245 = sshll.u32 [#allocation10], 4
          %s246 = int_to_ptr.vmem [resolvable:$true] %s245
          %251 = dma.hbm_to_vmem [thread:$0]  %s4, 48, %s246, [#allocation9], 16, 16, 1
        $region20: #{tpu_custom_call.1} parent=11 // pred_fallthru
          _
        // Predicated region
        $region21: #{tpu_custom_call.1} parent=11 // pred_check
          %p252 = pneg %p164
        $region22: #{tpu_custom_call.1} parent=11 // pred_check_branch
          %254 = sbr.rel (%p252) target = $region24
        $region23: #{tpu_custom_call.1} parent=11 // pred_region
          _
        $region24: #{tpu_custom_call.1} parent=11 // pred_fallthru
          _
        // Predicated region
        $region25: #{tpu_custom_call.1} parent=11 // pred_check
          %p255 = pneg %p185
        $region26: #{tpu_custom_call.1} parent=11 // pred_check_branch
          %257 = sbr.rel (%p255) target = $region28
        $region27: #{tpu_custom_call.1} parent=11 // pred_region
          _
        $region28: #{tpu_custom_call.1} parent=11 // pred_fallthru
          _
      $region12: #{tpu_custom_call.1} parent=5 // pred_fallthru
        _
      %p258 = scmp.lt.s32.totalorder %s23, 2
      // Predicated region
      $region29: #{tpu_custom_call.1} parent=5 // pred_check
        %p259 = pneg %p258
      $region30: #{tpu_custom_call.1} parent=5 // pred_check_branch
        %261 = sbr.rel (%p259) target = $region32
      $region31: #{tpu_custom_call.1} parent=5 // pred_region
        // Predicated region
        $region33: #{tpu_custom_call.1} parent=31 // pred_check
          %p262 = pneg %p43
        $region34: #{tpu_custom_call.1} parent=31 // pred_check_branch
          %264 = sbr.rel (%p262) target = $region36
        $region35: #{tpu_custom_call.1} parent=31 // pred_region
          %s265 = sand.u32 %s33, 1
          %s266 = scalar_lea.sflag [#allocation3], %s265
          %s267 = sand.u32 %s33, 1
          %s268 = smul.addr %s267, 4
          %s269 = scalar_lea.vmem [#allocation2], %s268
          %s271 = ssub.s32 64, 64
          %272 = vsyncadd %s266, %s271
          %s273 = smul.addr %s23, 64
          %s274 = scalar_lea.hbm %s0, %s273
          %s276 = sshll.u32 %s269, 4
          %s277 = int_to_ptr.vmem [resolvable:$true] %s276
          %279 = dma.hbm_to_vmem [thread:$0]  %s274, 64, %s277, %s266
        $region36: #{tpu_custom_call.1} parent=31 // pred_fallthru
          _
        // Predicated region
        $region37: #{tpu_custom_call.1} parent=31 // pred_check
          %p280 = pneg %p69
        $region38: #{tpu_custom_call.1} parent=31 // pred_check_branch
          %282 = sbr.rel (%p280) target = $region40
        $region39: #{tpu_custom_call.1} parent=31 // pred_region
          %s283 = sand.u32 %s23, 1
          %s284 = scalar_lea.sflag [#allocation6], %s283
          %s285 = sand.u32 %s59, 1
          %s286 = smul.addr %s285, 4
          %s287 = scalar_lea.vmem [#allocation5], %s286
          %s289 = ssub.s32 64, 64
          %290 = vsyncadd %s284, %s289
          %s291 = smul.addr %s23, 64
          %s292 = scalar_lea.hbm %s1, %s291
          %s294 = sshll.u32 %s287, 4
          %s295 = int_to_ptr.vmem [resolvable:$true] %s294
          %297 = dma.hbm_to_vmem [thread:$0]  %s292, 64, %s295, %s284
        $region40: #{tpu_custom_call.1} parent=31 // pred_fallthru
          _
        // Predicated region
        $region41: #{tpu_custom_call.1} parent=31 // pred_check
          %p298 = pneg %p95
        $region42: #{tpu_custom_call.1} parent=31 // pred_check_branch
          %300 = sbr.rel (%p298) target = $region44
        $region43: #{tpu_custom_call.1} parent=31 // pred_region
          %s301 = sand.u32 %s23, 1
          %s302 = scalar_lea.sflag [#allocation6], %s301
          %s303 = sand.u32 %s85, 1
          %s304 = smul.addr %s303, 4
          %s305 = scalar_lea.vmem [#allocation7], %s304
          %s307 = ssub.s32 64, 64
          %308 = vsyncadd %s302, %s307
          %s309 = smul.addr %s23, 64
          %s310 = scalar_lea.hbm %s2, %s309
          %s312 = sshll.u32 %s305, 4
          %s313 = int_to_ptr.vmem [resolvable:$true] %s312
          %315 = dma.hbm_to_vmem [thread:$0]  %s310, 64, %s313, %s302
        $region44: #{tpu_custom_call.1} parent=31 // pred_fallthru
          _
      $region32: #{tpu_custom_call.1} parent=5 // pred_fallthru
        _
      %p316 = scmp.le.s32.totalorder 1, %s23
      %p317 = scmp.lt.s32.totalorder %s23, 3
      %p318 = pnand %p316, %p317
      %p319 = pneg %p318
      // Predicated region
      $region45: #{tpu_custom_call.1} parent=5 // pred_check
        _
      $region46: #{tpu_custom_call.1} parent=5 // pred_check_branch
        %321 = sbr.rel (%p318) target = $region48
      $region47: #{tpu_custom_call.1} parent=5 // pred_region
        %s322 = ssub.s32 %s23, 1
        %s323 = sand.u32 %s36, 1
        %s324 = scalar_lea.sflag [#allocation3], %s323
        %s325 = sand.u32 %s36, 1
        %s326 = smul.addr %s325, 4
        %s327 = scalar_lea.vmem [#allocation2], %s326
        // Predicated region
        $region49: #{tpu_custom_call.1} parent=47 // pred_check
          %p328 = pneg %p49
        $region50: #{tpu_custom_call.1} parent=47 // pred_check_branch
          %330 = sbr.rel (%p328) target = $region52
        $region51: #{tpu_custom_call.1} parent=47 // pred_region
          %331 = dma.done %s324, 64
        $region52: #{tpu_custom_call.1} parent=47 // pred_fallthru
          _
        %s332 = sand.u32 %s28, 1
        %s333 = scalar_lea.sflag [#allocation6], %s332
        %s334 = sand.u32 %s62, 1
        %s335 = smul.addr %s334, 4
        %s336 = scalar_lea.vmem [#allocation5], %s335
        // Predicated region
        $region53: #{tpu_custom_call.1} parent=47 // pred_check
          %p337 = pneg %p75
        $region54: #{tpu_custom_call.1} parent=47 // pred_check_branch
          %339 = sbr.rel (%p337) target = $region56
        $region55: #{tpu_custom_call.1} parent=47 // pred_region
          %340 = dma.done %s333, 64
        $region56: #{tpu_custom_call.1} parent=47 // pred_fallthru
          _
        %s341 = sand.u32 %s28, 1
        %s342 = scalar_lea.sflag [#allocation6], %s341
        %s343 = sand.u32 %s88, 1
        %s344 = smul.addr %s343, 4
        %s345 = scalar_lea.vmem [#allocation7], %s344
        // Predicated region
        $region57: #{tpu_custom_call.1} parent=47 // pred_check
          %p346 = pneg %p101
        $region58: #{tpu_custom_call.1} parent=47 // pred_check_branch
          %348 = sbr.rel (%p346) target = $region60
        $region59: #{tpu_custom_call.1} parent=47 // pred_region
          %349 = dma.done %s342, 64
        $region60: #{tpu_custom_call.1} parent=47 // pred_fallthru
          _
        // Predicated region
        $region61: #{tpu_custom_call.1} parent=47 // pred_check
          %p350 = pneg %p122
        $region62: #{tpu_custom_call.1} parent=47 // pred_check_branch
          %352 = sbr.rel (%p350) target = $region64
        $region63: #{tpu_custom_call.1} parent=47 // pred_region
          %353 = dma.done [#allocation9], 768
        $region64: #{tpu_custom_call.1} parent=47 // pred_fallthru
          _
        // Predicated region
        $region65: #{tpu_custom_call.1} parent=47 // pred_check
          %p354 = pneg %p143
        $region66: #{tpu_custom_call.1} parent=47 // pred_check_branch
          %356 = sbr.rel (%p354) target = $region68
        $region67: #{tpu_custom_call.1} parent=47 // pred_region
          %357 = dma.done [#allocation9], 48
        $region68: #{tpu_custom_call.1} parent=47 // pred_fallthru
          _
        %s358 = sand.u32 %s36, 1
        %s359 = scalar_lea.sflag [#allocation3], %s358
        %s360 = sand.u32 %s36, 1
        %s361 = smul.addr %s360, 4
        %s362 = scalar_lea.vmem [#allocation2], %s361
        %p363 = pneg %p49
        %p364 = pneg %p46
        %s365 = sand.u32 %s28, 1
        %s366 = scalar_lea.sflag [#allocation6], %s365
        %s367 = sand.u32 %s62, 1
        %s368 = smul.addr %s367, 4
        %s369 = scalar_lea.vmem [#allocation5], %s368
        %p370 = pneg %p75
        %p371 = pneg %p72
        %s372 = sand.u32 %s28, 1
        %s373 = scalar_lea.sflag [#allocation6], %s372
        %s374 = sand.u32 %s88, 1
        %s375 = smul.addr %s374, 4
        %s376 = scalar_lea.vmem [#allocation7], %s375
        %p377 = pneg %p101
        %p378 = pneg %p98
        %p379 = pneg %p122
        %p380 = pneg %p119
        %p381 = pneg %p143
        %p382 = pneg %p140
        %p383 = pneg %p164
        %p384 = pneg %p161
        %p385 = pneg %p185
        %p386 = pneg %p182
        %p387 = pneg %p211
        %p388 = pneg %p208
        %s389 = sand.u32 %s198, 1
        %s390 = scalar_lea.sflag [#allocation4], %s389
        %s391 = sand.u32 %s198, 1
        %s392 = smul.addr %s391, 8
        %s393 = scalar_lea.vmem [#allocation11], %s392
        %v395 = vld [vmem:[%s327] sm:$0xf]
        %v396 = vld [vmem:[%s336] sm:$0xf]
        %v397 = vld [vmem:[%s345] sm:$0xf]
        %v398 = vld [vmem:[#allocation8] sm:$0xf]
        %v399 = vld [vmem:[#allocation8 + $0x4] sm:$0xf]
        %v400 = vld [vmem:[#allocation8 + $0x8] sm:$0xf]
        %v401 = vld [vmem:[#allocation8 + $0xc] sm:$0xf]
        %v402 = vld [vmem:[#allocation10] sm:$0x1]
        %v404 = vlaneseq
        %v405 = vshrl.u32 %v404, 7
        %v406 = vsub.s32 0, %v405
        %v407 = vrot.slane %v402, %v406
        %v413 = vunpack.c.l.b16 %v398
        %v414 = vunpack.c.l.b16 %v399
        %v415 = vunpack.c.l.b16 %v400
        %v416 = vunpack.c.l.b16 %v401
        %v417 = vpack.c.b16 %v414, %v413
        %v418 = vpack.c.b16 %v416, %v415
        %vm421 = vcmask 261120
        %v423 = vsel %vm421, %v395, 0
        %425 = vmatprep.subr.bf16.mxu0 0
        %426 = vmatpush1.bf16.msra.mxu0 %v417
        %427 = vmatprep.subr.bf16.mxu0 0
        %428 = vmatpush1.bf16.msra.mxu0 %v418
        %429 = vmatprep.subr.bf16.mxu0 0
        %430 = vmatpush1.bf16.msra.mxu0 0
        %431 = vmatprep.subr.bf16.mxu0 0
        %432 = vmatpush1.bf16.msra.mxu0 0
        %433 = vmatprep.subr.bf16.mxu0 0
        %434 = vmatpush1.bf16.msra.mxu0 0
        %435 = vmatprep.subr.bf16.mxu0 0
        %436 = vmatpush1.bf16.msra.mxu0 0
        %437 = vmatprep.subr.bf16.mxu0 0
        %438 = vmatpush1.bf16.msra.mxu0 0
        %439 = vmatprep.subr.bf16.mxu0 0
        %440 = vmatpush1.bf16.msra.mxu0 0
        %441 = vmatprep.subr.bf16.mxu0 0
        %442 = vmatpush1.bf16.msra.mxu0 0
        %443 = vmatprep.subr.bf16.mxu0 0
        %444 = vmatpush1.bf16.msra.mxu0 0
        %445 = vmatprep.subr.bf16.mxu0 0
        %446 = vmatpush1.bf16.msra.mxu0 0
        %447 = vmatprep.subr.bf16.mxu0 0
        %448 = vmatpush1.bf16.msra.mxu0 0
        %449 = vmatprep.subr.bf16.mxu0 0
        %450 = vmatpush1.bf16.msra.mxu0 0
        %451 = vmatprep.subr.bf16.mxu0 0
        %452 = vmatpush1.bf16.msra.mxu0 0
        %453 = vmatprep.subr.bf16.mxu0 0
        %454 = vmatpush1.bf16.msra.mxu0 0
        %455 = vmatprep.subr.bf16.mxu0 0
        %456 = vmatpush1.bf16.msra.mxu0 0
        %457 = vmatprep.mubr.bf16.mxu0 0
        %458 = vmatmul.mubr.bf16.gmra.mrb[0].mxu0 %v423
        %v459 = vpop.f32.mrb[0].mxu0
        %v460 = vadd.f32 %v407, %v459
        %v461 = vpop.f32.mrb[0].mxu0
        %v462 = vpop.f32.mrb[0].mxu0
        %v463 = vpop.f32.mrb[0].mxu0
        %464 = vdwg.mxu0
        %s465 = scalar_lea.vmem [#allocation8], 16
        %v466 = vld [vmem:[%s465] sm:$0xf]
        %v467 = vld [vmem:[%s465 + $0x4] sm:$0xf]
        %v468 = vld [vmem:[%s465 + $0x8] sm:$0xf]
        %v469 = vld [vmem:[%s465 + $0xc] sm:$0xf]
        %s470 = scalar_lea.vmem [#allocation10], 1
        %v471 = vld [vmem:[%s470] sm:$0x1]
        %v473 = vlaneseq
        %v474 = vshrl.u32 %v473, 7
        %v475 = vsub.s32 0, %v474
        %v476 = vrot.slane %v471, %v475
        %v482 = vunpack.c.l.b16 %v466
        %v483 = vunpack.c.l.b16 %v467
        %v484 = vunpack.c.l.b16 %v468
        %v485 = vunpack.c.l.b16 %v469
        %v486 = vpack.c.b16 %v483, %v482
        %v487 = vpack.c.b16 %v485, %v484
        %v491 = vsel %vm421, %v396, 0
        %493 = vmatprep.subr.bf16.mxu0 0
        %494 = vmatpush1.bf16.msra.mxu0 %v486
        %495 = vmatprep.subr.bf16.mxu0 0
        %496 = vmatpush1.bf16.msra.mxu0 %v487
        %497 = vmatprep.subr.bf16.mxu0 0
        %498 = vmatpush1.bf16.msra.mxu0 0
        %499 = vmatprep.subr.bf16.mxu0 0
        %500 = vmatpush1.bf16.msra.mxu0 0
        %501 = vmatprep.subr.bf16.mxu0 0
        %502 = vmatpush1.bf16.msra.mxu0 0
        %503 = vmatprep.subr.bf16.mxu0 0
        %504 = vmatpush1.bf16.msra.mxu0 0
        %505 = vmatprep.subr.bf16.mxu0 0
        %506 = vmatpush1.bf16.msra.mxu0 0
        %507 = vmatprep.subr.bf16.mxu0 0
        %508 = vmatpush1.bf16.msra.mxu0 0
        %509 = vmatprep.subr.bf16.mxu0 0
        %510 = vmatpush1.bf16.msra.mxu0 0
        %511 = vmatprep.subr.bf16.mxu0 0
        %512 = vmatpush1.bf16.msra.mxu0 0
        %513 = vmatprep.subr.bf16.mxu0 0
        %514 = vmatpush1.bf16.msra.mxu0 0
        %515 = vmatprep.subr.bf16.mxu0 0
        %516 = vmatpush1.bf16.msra.mxu0 0
        %517 = vmatprep.subr.bf16.mxu0 0
        %518 = vmatpush1.bf16.msra.mxu0 0
        %519 = vmatprep.subr.bf16.mxu0 0
        %520 = vmatpush1.bf16.msra.mxu0 0
        %521 = vmatprep.subr.bf16.mxu0 0
        %522 = vmatpush1.bf16.msra.mxu0 0
        %523 = vmatprep.subr.bf16.mxu0 0
        %524 = vmatpush1.bf16.msra.mxu0 0
        %525 = vmatprep.mubr.bf16.mxu0 0
        %526 = vmatmul.mubr.bf16.gmra.mrb[0].mxu0 %v491
        %v527 = vpop.f32.mrb[0].mxu0
        %v528 = vadd.f32 %v476, %v527
        %v529 = vpop.f32.mrb[0].mxu0
        %v530 = vpop.f32.mrb[0].mxu0
        %v531 = vpop.f32.mrb[0].mxu0
        %532 = vdwg.mxu0
        %s533 = scalar_lea.vmem [#allocation8], 32
        %v534 = vld [vmem:[%s533] sm:$0xf]
        %v535 = vld [vmem:[%s533 + $0x4] sm:$0xf]
        %v536 = vld [vmem:[%s533 + $0x8] sm:$0xf]
        %v537 = vld [vmem:[%s533 + $0xc] sm:$0xf]
        %s538 = scalar_lea.vmem [#allocation10], 2
        %v539 = vld [vmem:[%s538] sm:$0x1]
        %v541 = vlaneseq
        %v542 = vshrl.u32 %v541, 7
        %v543 = vsub.s32 0, %v542
        %v544 = vrot.slane %v539, %v543
        %v550 = vunpack.c.l.b16 %v534
        %v551 = vunpack.c.l.b16 %v535
        %v552 = vunpack.c.l.b16 %v536
        %v553 = vunpack.c.l.b16 %v537
        %v554 = vpack.c.b16 %v551, %v550
        %v555 = vpack.c.b16 %v553, %v552
        %v559 = vsel %vm421, %v397, 0
        %561 = vmatprep.subr.bf16.mxu0 0
        %562 = vmatpush1.bf16.msra.mxu0 %v554
        %563 = vmatprep.subr.bf16.mxu0 0
        %564 = vmatpush1.bf16.msra.mxu0 %v555
        %565 = vmatprep.subr.bf16.mxu0 0
        %566 = vmatpush1.bf16.msra.mxu0 0
        %567 = vmatprep.subr.bf16.mxu0 0
        %568 = vmatpush1.bf16.msra.mxu0 0
        %569 = vmatprep.subr.bf16.mxu0 0
        %570 = vmatpush1.bf16.msra.mxu0 0
        %571 = vmatprep.subr.bf16.mxu0 0
        %572 = vmatpush1.bf16.msra.mxu0 0
        %573 = vmatprep.subr.bf16.mxu0 0
        %574 = vmatpush1.bf16.msra.mxu0 0
        %575 = vmatprep.subr.bf16.mxu0 0
        %576 = vmatpush1.bf16.msra.mxu0 0
        %577 = vmatprep.subr.bf16.mxu0 0
        %578 = vmatpush1.bf16.msra.mxu0 0
        %579 = vmatprep.subr.bf16.mxu0 0
        %580 = vmatpush1.bf16.msra.mxu0 0
        %581 = vmatprep.subr.bf16.mxu0 0
        %582 = vmatpush1.bf16.msra.mxu0 0
        %583 = vmatprep.subr.bf16.mxu0 0
        %584 = vmatpush1.bf16.msra.mxu0 0
        %585 = vmatprep.subr.bf16.mxu0 0
        %586 = vmatpush1.bf16.msra.mxu0 0
        %587 = vmatprep.subr.bf16.mxu0 0
        %588 = vmatpush1.bf16.msra.mxu0 0
        %589 = vmatprep.subr.bf16.mxu0 0
        %590 = vmatpush1.bf16.msra.mxu0 0
        %591 = vmatprep.subr.bf16.mxu0 0
        %592 = vmatpush1.bf16.msra.mxu0 0
        %593 = vmatprep.mubr.bf16.mxu0 0
        %594 = vmatmul.mubr.bf16.gmra.mrb[0].mxu0 %v559
        %v595 = vpop.f32.mrb[0].mxu0
        %v596 = vadd.f32 %v544, %v595
        %v597 = vpop.f32.mrb[0].mxu0
        %v598 = vpop.f32.mrb[0].mxu0
        %v599 = vpop.f32.mrb[0].mxu0
        %600 = vdwg.mxu0
        %v601 = vmul.f32 %v460, 0.35355338
        %v602 = vpack.c.bf16 %v601, %v601
        %v603 = vpack.c.bf16 %v528, %v528
        %v604 = vpack.c.bf16 %v596, %v596
        %vm605 = vcmask 64512
        %v607 = vsel %vm605, %v602, 0
        %v610 = vsel %vm605, %v603, 0
        %612 = vmatprep.subr.bf16.mxu0 0
        %613 = vmatpush1.bf16.xpose.msra.mxu0 %v610
        %614 = vmatprep.subr.bf16.mxu0 0
        %615 = vmatpush1.bf16.xpose.msra.mxu0 0
        %616 = vmatprep.subr.bf16.mxu0 0
        %617 = vmatpush1.bf16.xpose.msra.mxu0 0
        %618 = vmatprep.subr.bf16.mxu0 0
        %619 = vmatpush1.bf16.xpose.msra.mxu0 0
        %620 = vmatprep.subr.bf16.mxu0 0
        %621 = vmatpush1.bf16.xpose.msra.mxu0 0
        %622 = vmatprep.subr.bf16.mxu0 0
        %623 = vmatpush1.bf16.xpose.msra.mxu0 0
        %624 = vmatprep.subr.bf16.mxu0 0
        %625 = vmatpush1.bf16.xpose.msra.mxu0 0
        %626 = vmatprep.subr.bf16.mxu0 0
        %627 = vmatpush1.bf16.xpose.msra.mxu0 0
        %628 = vmatprep.subr.bf16.mxu0 0
        %629 = vmatpush1.bf16.xpose.msra.mxu0 0
        %630 = vmatprep.subr.bf16.mxu0 0
        %631 = vmatpush1.bf16.xpose.msra.mxu0 0
        %632 = vmatprep.subr.bf16.mxu0 0
        %633 = vmatpush1.bf16.xpose.msra.mxu0 0
        %634 = vmatprep.subr.bf16.mxu0 0
        %635 = vmatpush1.bf16.xpose.msra.mxu0 0
        %636 = vmatprep.subr.bf16.mxu0 0
        %637 = vmatpush1.bf16.xpose.msra.mxu0 0
        %638 = vmatprep.subr.bf16.mxu0 0
        %639 = vmatpush1.bf16.xpose.msra.mxu0 0
        %640 = vmatprep.subr.bf16.mxu0 0
        %641 = vmatpush1.bf16.xpose.msra.mxu0 0
        %642 = vmatprep.subr.bf16.mxu0 0
        %643 = vmatpush1.bf16.xpose.msra.mxu0 0
        %644 = vmatprep.mubr.bf16.mxu0 0
        %645 = vmatmul.mubr.bf16.gmra.mrb[0].mxu0 %v607
        %v646 = vpop.f32.mrb[0].mxu0
        %v647 = vadd.f32 0.0, %v646
        %v648 = vpop.f32.mrb[0].mxu0
        %v649 = vpop.f32.mrb[0].mxu0
        %v650 = vpop.f32.mrb[0].mxu0
        %651 = vdwg.mxu0
        %v652 = vsel %vm605, %v647, -inf
        %653 = vmax.xlane.f32.xlu0 %v652
        %v654 = vpop.xlane.xlu0 %653
        %v655 = vsub.f32 %v647, %v654
        %v656 = vmul.f32 %v655, 1.442695
        %v657 = vpow.pop %v656
        %v658 = vsel %vm605, %v657, 0.0
        %659 = vadd.xlane.f32.xlu0 %v658
        %v660 = vpop.xlane.xlu0 %659
        %v661 = vrcp.pop %v660
        %v662 = vmul.f32 %v657, %v661
        %v663 = vpack.c.bf16 %v662, %v662
        %v665 = vsel %vm605, %v663, 0
        %vm667 = vcmask 1043456
        %v669 = vsel %vm667, %v604, 0
        %671 = vmatprep.subr.bf16.mxu0 0
        %672 = vmatpush1.bf16.msra.mxu0 %v669
        %673 = vmatprep.subr.bf16.mxu0 0
        %674 = vmatpush1.bf16.msra.mxu0 0
        %675 = vmatprep.subr.bf16.mxu0 0
        %676 = vmatpush1.bf16.msra.mxu0 0
        %677 = vmatprep.subr.bf16.mxu0 0
        %678 = vmatpush1.bf16.msra.mxu0 0
        %679 = vmatprep.subr.bf16.mxu0 0
        %680 = vmatpush1.bf16.msra.mxu0 0
        %681 = vmatprep.subr.bf16.mxu0 0
        %682 = vmatpush1.bf16.msra.mxu0 0
        %683 = vmatprep.subr.bf16.mxu0 0
        %684 = vmatpush1.bf16.msra.mxu0 0
        %685 = vmatprep.subr.bf16.mxu0 0
        %686 = vmatpush1.bf16.msra.mxu0 0
        %687 = vmatprep.subr.bf16.mxu0 0
        %688 = vmatpush1.bf16.msra.mxu0 0
        %689 = vmatprep.subr.bf16.mxu0 0
        %690 = vmatpush1.bf16.msra.mxu0 0
        %691 = vmatprep.subr.bf16.mxu0 0
        %692 = vmatpush1.bf16.msra.mxu0 0
        %693 = vmatprep.subr.bf16.mxu0 0
        %694 = vmatpush1.bf16.msra.mxu0 0
        %695 = vmatprep.subr.bf16.mxu0 0
        %696 = vmatpush1.bf16.msra.mxu0 0
        %697 = vmatprep.subr.bf16.mxu0 0
        %698 = vmatpush1.bf16.msra.mxu0 0
        %699 = vmatprep.subr.bf16.mxu0 0
        %700 = vmatpush1.bf16.msra.mxu0 0
        %701 = vmatprep.subr.bf16.mxu0 0
        %702 = vmatpush1.bf16.msra.mxu0 0
        %703 = vmatprep.mubr.bf16.mxu0 0
        %704 = vmatmul.mubr.bf16.gmra.mrb[0].mxu0 %v665
        %v705 = vpop.f32.mrb[0].mxu0
        %v706 = vadd.f32 0.0, %v705
        %v707 = vpop.f32.mrb[0].mxu0
        %v708 = vpop.f32.mrb[0].mxu0
        %v709 = vpop.f32.mrb[0].mxu0
        %710 = vdwg.mxu0
        %v711 = vpack.c.bf16 %v706, %v706
        %713 = vrot.lane.b32.xlu0 %v602, 120
        %v714 = vpop.permute.xlu0 %713
        %716 = vrot.lane.b32.xlu0 %v603, 120
        %v717 = vpop.permute.xlu0 %716
        %v719 = vsel %vm605, %v714, 0
        %v722 = vsel %vm605, %v717, 0
        %724 = vmatprep.subr.bf16.mxu0 0
        %725 = vmatpush1.bf16.xpose.msra.mxu0 %v722
        %726 = vmatprep.subr.bf16.mxu0 0
        %727 = vmatpush1.bf16.xpose.msra.mxu0 0
        %728 = vmatprep.subr.bf16.mxu0 0
        %729 = vmatpush1.bf16.xpose.msra.mxu0 0
        %730 = vmatprep.subr.bf16.mxu0 0
        %731 = vmatpush1.bf16.xpose.msra.mxu0 0
        %732 = vmatprep.subr.bf16.mxu0 0
        %733 = vmatpush1.bf16.xpose.msra.mxu0 0
        %734 = vmatprep.subr.bf16.mxu0 0
        %735 = vmatpush1.bf16.xpose.msra.mxu0 0
        %736 = vmatprep.subr.bf16.mxu0 0
        %737 = vmatpush1.bf16.xpose.msra.mxu0 0
        %738 = vmatprep.subr.bf16.mxu0 0
        %739 = vmatpush1.bf16.xpose.msra.mxu0 0
        %740 = vmatprep.subr.bf16.mxu0 0
        %741 = vmatpush1.bf16.xpose.msra.mxu0 0
        %742 = vmatprep.subr.bf16.mxu0 0
        %743 = vmatpush1.bf16.xpose.msra.mxu0 0
        %744 = vmatprep.subr.bf16.mxu0 0
        %745 = vmatpush1.bf16.xpose.msra.mxu0 0
        %746 = vmatprep.subr.bf16.mxu0 0
        %747 = vmatpush1.bf16.xpose.msra.mxu0 0
        %748 = vmatprep.subr.bf16.mxu0 0
        %749 = vmatpush1.bf16.xpose.msra.mxu0 0
        %750 = vmatprep.subr.bf16.mxu0 0
        %751 = vmatpush1.bf16.xpose.msra.mxu0 0
        %752 = vmatprep.subr.bf16.mxu0 0
        %753 = vmatpush1.bf16.xpose.msra.mxu0 0
        %754 = vmatprep.subr.bf16.mxu0 0
        %755 = vmatpush1.bf16.xpose.msra.mxu0 0
        %756 = vmatprep.mubr.bf16.mxu0 0
        %757 = vmatmul.mubr.bf16.gmra.mrb[0].mxu0 %v719
        %v758 = vpop.f32.mrb[0].mxu0
        %v759 = vadd.f32 0.0, %v758
        %v760 = vpop.f32.mrb[0].mxu0
        %v761 = vpop.f32.mrb[0].mxu0
        %v762 = vpop.f32.mrb[0].mxu0
        %763 = vdwg.mxu0
        %v764 = vsel %vm605, %v759, -inf
        %765 = vmax.xlane.f32.xlu0 %v764
        %v766 = vpop.xlane.xlu0 %765
        %v767 = vsub.f32 %v759, %v766
        %v768 = vmul.f32 %v767, 1.442695
        %v769 = vpow.pop %v768
        %v770 = vsel %vm605, %v769, 0.0
        %771 = vadd.xlane.f32.xlu0 %v770
        %v772 = vpop.xlane.xlu0 %771
        %v773 = vrcp.pop %v772
        %v774 = vmul.f32 %v769, %v773
        %v775 = vpack.c.bf16 %v774, %v774
        %777 = vrot.lane.b32.xlu0 %v604, 120
        %v778 = vpop.permute.xlu0 %777
        %v780 = vsel %vm605, %v775, 0
        %v783 = vsel %vm667, %v778, 0
        %785 = vmatprep.subr.bf16.mxu0 0
        %786 = vmatpush1.bf16.msra.mxu0 %v783
        %787 = vmatprep.subr.bf16.mxu0 0
        %788 = vmatpush1.bf16.msra.mxu0 0
        %789 = vmatprep.subr.bf16.mxu0 0
        %790 = vmatpush1.bf16.msra.mxu0 0
        %791 = vmatprep.subr.bf16.mxu0 0
        %792 = vmatpush1.bf16.msra.mxu0 0
        %793 = vmatprep.subr.bf16.mxu0 0
        %794 = vmatpush1.bf16.msra.mxu0 0
        %795 = vmatprep.subr.bf16.mxu0 0
        %796 = vmatpush1.bf16.msra.mxu0 0
        %797 = vmatprep.subr.bf16.mxu0 0
        %798 = vmatpush1.bf16.msra.mxu0 0
        %799 = vmatprep.subr.bf16.mxu0 0
        %800 = vmatpush1.bf16.msra.mxu0 0
        %801 = vmatprep.subr.bf16.mxu0 0
        %802 = vmatpush1.bf16.msra.mxu0 0
        %803 = vmatprep.subr.bf16.mxu0 0
        %804 = vmatpush1.bf16.msra.mxu0 0
        %805 = vmatprep.subr.bf16.mxu0 0
        %806 = vmatpush1.bf16.msra.mxu0 0
        %807 = vmatprep.subr.bf16.mxu0 0
        %808 = vmatpush1.bf16.msra.mxu0 0
        %809 = vmatprep.subr.bf16.mxu0 0
        %810 = vmatpush1.bf16.msra.mxu0 0
        %811 = vmatprep.subr.bf16.mxu0 0
        %812 = vmatpush1.bf16.msra.mxu0 0
        %813 = vmatprep.subr.bf16.mxu0 0
        %814 = vmatpush1.bf16.msra.mxu0 0
        %815 = vmatprep.subr.bf16.mxu0 0
        %816 = vmatpush1.bf16.msra.mxu0 0
        %817 = vmatprep.mubr.bf16.mxu0 0
        %818 = vmatmul.mubr.bf16.gmra.mrb[0].mxu0 %v780
        %v819 = vpop.f32.mrb[0].mxu0
        %v820 = vadd.f32 0.0, %v819
        %v821 = vpop.f32.mrb[0].mxu0
        %v822 = vpop.f32.mrb[0].mxu0
        %v823 = vpop.f32.mrb[0].mxu0
        %824 = vdwg.mxu0
        %v825 = vpack.c.bf16 %v820, %v820
        %826 = vrot.lane.b32.xlu0 %v602, 112
        %v827 = vpop.permute.xlu0 %826
        %828 = vrot.lane.b32.xlu0 %v603, 112
        %v829 = vpop.permute.xlu0 %828
        %v831 = vsel %vm605, %v827, 0
        %v834 = vsel %vm605, %v829, 0
        %836 = vmatprep.subr.bf16.mxu0 0
        %837 = vmatpush1.bf16.xpose.msra.mxu0 %v834
        %838 = vmatprep.subr.bf16.mxu0 0
        %839 = vmatpush1.bf16.xpose.msra.mxu0 0
        %840 = vmatprep.subr.bf16.mxu0 0
        %841 = vmatpush1.bf16.xpose.msra.mxu0 0
        %842 = vmatprep.subr.bf16.mxu0 0
        %843 = vmatpush1.bf16.xpose.msra.mxu0 0
        %844 = vmatprep.subr.bf16.mxu0 0
        %845 = vmatpush1.bf16.xpose.msra.mxu0 0
        %846 = vmatprep.subr.bf16.mxu0 0
        %847 = vmatpush1.bf16.xpose.msra.mxu0 0
        %848 = vmatprep.subr.bf16.mxu0 0
        %849 = vmatpush1.bf16.xpose.msra.mxu0 0
        %850 = vmatprep.subr.bf16.mxu0 0
        %851 = vmatpush1.bf16.xpose.msra.mxu0 0
        %852 = vmatprep.subr.bf16.mxu0 0
        %853 = vmatpush1.bf16.xpose.msra.mxu0 0
        %854 = vmatprep.subr.bf16.mxu0 0
        %855 = vmatpush1.bf16.xpose.msra.mxu0 0
        %856 = vmatprep.subr.bf16.mxu0 0
        %857 = vmatpush1.bf16.xpose.msra.mxu0 0
        %858 = vmatprep.subr.bf16.mxu0 0
        %859 = vmatpush1.bf16.xpose.msra.mxu0 0
        %860 = vmatprep.subr.bf16.mxu0 0
        %861 = vmatpush1.bf16.xpose.msra.mxu0 0
        %862 = vmatprep.subr.bf16.mxu0 0
        %863 = vmatpush1.bf16.xpose.msra.mxu0 0
        %864 = vmatprep.subr.bf16.mxu0 0
        %865 = vmatpush1.bf16.xpose.msra.mxu0 0
        %866 = vmatprep.subr.bf16.mxu0 0
        %867 = vmatpush1.bf16.xpose.msra.mxu0 0
        %868 = vmatprep.mubr.bf16.mxu0 0
        %869 = vmatmul.mubr.bf16.gmra.mrb[0].mxu0 %v831
        %v870 = vpop.f32.mrb[0].mxu0
        %v871 = vadd.f32 0.0, %v870
        %v872 = vpop.f32.mrb[0].mxu0
        %v873 = vpop.f32.mrb[0].mxu0
        %v874 = vpop.f32.mrb[0].mxu0
        %875 = vdwg.mxu0
        %v876 = vsel %vm605, %v871, -inf
        %877 = vmax.xlane.f32.xlu0 %v876
        %v878 = vpop.xlane.xlu0 %877
        %v879 = vsub.f32 %v871, %v878
        %v880 = vmul.f32 %v879, 1.442695
        %v881 = vpow.pop %v880
        %v882 = vsel %vm605, %v881, 0.0
        %883 = vadd.xlane.f32.xlu0 %v882
        %v884 = vpop.xlane.xlu0 %883
        %v885 = vrcp.pop %v884
        %v886 = vmul.f32 %v881, %v885
        %v887 = vpack.c.bf16 %v886, %v886
        %888 = vrot.lane.b32.xlu0 %v604, 112
        %v889 = vpop.permute.xlu0 %888
        %v891 = vsel %vm605, %v887, 0
        %v894 = vsel %vm667, %v889, 0
        %896 = vmatprep.subr.bf16.mxu0 0
        %897 = vmatpush1.bf16.msra.mxu0 %v894
        %898 = vmatprep.subr.bf16.mxu0 0
        %899 = vmatpush1.bf16.msra.mxu0 0
        %900 = vmatprep.subr.bf16.mxu0 0
        %901 = vmatpush1.bf16.msra.mxu0 0
        %902 = vmatprep.subr.bf16.mxu0 0
        %903 = vmatpush1.bf16.msra.mxu0 0
        %904 = vmatprep.subr.bf16.mxu0 0
        %905 = vmatpush1.bf16.msra.mxu0 0
        %906 = vmatprep.subr.bf16.mxu0 0
        %907 = vmatpush1.bf16.msra.mxu0 0
        %908 = vmatprep.subr.bf16.mxu0 0
        %909 = vmatpush1.bf16.msra.mxu0 0
        %910 = vmatprep.subr.bf16.mxu0 0
        %911 = vmatpush1.bf16.msra.mxu0 0
        %912 = vmatprep.subr.bf16.mxu0 0
        %913 = vmatpush1.bf16.msra.mxu0 0
        %914 = vmatprep.subr.bf16.mxu0 0
        %915 = vmatpush1.bf16.msra.mxu0 0
        %916 = vmatprep.subr.bf16.mxu0 0
        %917 = vmatpush1.bf16.msra.mxu0 0
        %918 = vmatprep.subr.bf16.mxu0 0
        %919 = vmatpush1.bf16.msra.mxu0 0
        %920 = vmatprep.subr.bf16.mxu0 0
        %921 = vmatpush1.bf16.msra.mxu0 0
        %922 = vmatprep.subr.bf16.mxu0 0
        %923 = vmatpush1.bf16.msra.mxu0 0
        %924 = vmatprep.subr.bf16.mxu0 0
        %925 = vmatpush1.bf16.msra.mxu0 0
        %926 = vmatprep.subr.bf16.mxu0 0
        %927 = vmatpush1.bf16.msra.mxu0 0
        %928 = vmatprep.mubr.bf16.mxu0 0
        %929 = vmatmul.mubr.bf16.gmra.mrb[0].mxu0 %v891
        %v930 = vpop.f32.mrb[0].mxu0
        %v931 = vadd.f32 0.0, %v930
        %v932 = vpop.f32.mrb[0].mxu0
        %v933 = vpop.f32.mrb[0].mxu0
        %v934 = vpop.f32.mrb[0].mxu0
        %935 = vdwg.mxu0
        %v936 = vpack.c.bf16 %v931, %v931
        %937 = vrot.lane.b32.xlu0 %v602, 104
        %v938 = vpop.permute.xlu0 %937
        %939 = vrot.lane.b32.xlu0 %v603, 104
        %v940 = vpop.permute.xlu0 %939
        %v942 = vsel %vm605, %v938, 0
        %v945 = vsel %vm605, %v940, 0
        %947 = vmatprep.subr.bf16.mxu0 0
        %948 = vmatpush1.bf16.xpose.msra.mxu0 %v945
        %949 = vmatprep.subr.bf16.mxu0 0
        %950 = vmatpush1.bf16.xpose.msra.mxu0 0
        %951 = vmatprep.subr.bf16.mxu0 0
        %952 = vmatpush1.bf16.xpose.msra.mxu0 0
        %953 = vmatprep.subr.bf16.mxu0 0
        %954 = vmatpush1.bf16.xpose.msra.mxu0 0
        %955 = vmatprep.subr.bf16.mxu0 0
        %956 = vmatpush1.bf16.xpose.msra.mxu0 0
        %957 = vmatprep.subr.bf16.mxu0 0
        %958 = vmatpush1.bf16.xpose.msra.mxu0 0
        %959 = vmatprep.subr.bf16.mxu0 0
        %960 = vmatpush1.bf16.xpose.msra.mxu0 0
        %961 = vmatprep.subr.bf16.mxu0 0
        %962 = vmatpush1.bf16.xpose.msra.mxu0 0
        %963 = vmatprep.subr.bf16.mxu0 0
        %964 = vmatpush1.bf16.xpose.msra.mxu0 0
        %965 = vmatprep.subr.bf16.mxu0 0
        %966 = vmatpush1.bf16.xpose.msra.mxu0 0
        %967 = vmatprep.subr.bf16.mxu0 0
        %968 = vmatpush1.bf16.xpose.msra.mxu0 0
        %969 = vmatprep.subr.bf16.mxu0 0
        %970 = vmatpush1.bf16.xpose.msra.mxu0 0
        %971 = vmatprep.subr.bf16.mxu0 0
        %972 = vmatpush1.bf16.xpose.msra.mxu0 0
        %973 = vmatprep.subr.bf16.mxu0 0
        %974 = vmatpush1.bf16.xpose.msra.mxu0 0
        %975 = vmatprep.subr.bf16.mxu0 0
        %976 = vmatpush1.bf16.xpose.msra.mxu0 0
        %977 = vmatprep.subr.bf16.mxu0 0
        %978 = vmatpush1.bf16.xpose.msra.mxu0 0
        %979 = vmatprep.mubr.bf16.mxu0 0
        %980 = vmatmul.mubr.bf16.gmra.mrb[0].mxu0 %v942
        %v981 = vpop.f32.mrb[0].mxu0
        %v982 = vadd.f32 0.0, %v981
        %v983 = vpop.f32.mrb[0].mxu0
        %v984 = vpop.f32.mrb[0].mxu0
        %v985 = vpop.f32.mrb[0].mxu0
        %986 = vdwg.mxu0
        %v987 = vsel %vm605, %v982, -inf
        %988 = vmax.xlane.f32.xlu0 %v987
        %v989 = vpop.xlane.xlu0 %988
        %v990 = vsub.f32 %v982, %v989
        %v991 = vmul.f32 %v990, 1.442695
        %v992 = vpow.pop %v991
        %v993 = vsel %vm605, %v992, 0.0
        %994 = vadd.xlane.f32.xlu0 %v993
        %v995 = vpop.xlane.xlu0 %994
        %v996 = vrcp.pop %v995
        %v997 = vmul.f32 %v992, %v996
        %v998 = vpack.c.bf16 %v997, %v997
        %999 = vrot.lane.b32.xlu0 %v604, 104
        %v1000 = vpop.permute.xlu0 %999
        %v1002 = vsel %vm605, %v998, 0
        %v1005 = vsel %vm667, %v1000, 0
        %1007 = vmatprep.subr.bf16.mxu0 0
        %1008 = vmatpush1.bf16.msra.mxu0 %v1005
        %1009 = vmatprep.subr.bf16.mxu0 0
        %1010 = vmatpush1.bf16.msra.mxu0 0
        %1011 = vmatprep.subr.bf16.mxu0 0
        %1012 = vmatpush1.bf16.msra.mxu0 0
        %1013 = vmatprep.subr.bf16.mxu0 0
        %1014 = vmatpush1.bf16.msra.mxu0 0
        %1015 = vmatprep.subr.bf16.mxu0 0
        %1016 = vmatpush1.bf16.msra.mxu0 0
        %1017 = vmatprep.subr.bf16.mxu0 0
        %1018 = vmatpush1.bf16.msra.mxu0 0
        %1019 = vmatprep.subr.bf16.mxu0 0
        %1020 = vmatpush1.bf16.msra.mxu0 0
        %1021 = vmatprep.subr.bf16.mxu0 0
        %1022 = vmatpush1.bf16.msra.mxu0 0
        %1023 = vmatprep.subr.bf16.mxu0 0
        %1024 = vmatpush1.bf16.msra.mxu0 0
        %1025 = vmatprep.subr.bf16.mxu0 0
        %1026 = vmatpush1.bf16.msra.mxu0 0
        %1027 = vmatprep.subr.bf16.mxu0 0
        %1028 = vmatpush1.bf16.msra.mxu0 0
        %1029 = vmatprep.subr.bf16.mxu0 0
        %1030 = vmatpush1.bf16.msra.mxu0 0
        %1031 = vmatprep.subr.bf16.mxu0 0
        %1032 = vmatpush1.bf16.msra.mxu0 0
        %1033 = vmatprep.subr.bf16.mxu0 0
        %1034 = vmatpush1.bf16.msra.mxu0 0
        %1035 = vmatprep.subr.bf16.mxu0 0
        %1036 = vmatpush1.bf16.msra.mxu0 0
        %1037 = vmatprep.subr.bf16.mxu0 0
        %1038 = vmatpush1.bf16.msra.mxu0 0
        %1039 = vmatprep.mubr.bf16.mxu0 0
        %1040 = vmatmul.mubr.bf16.gmra.mrb[0].mxu0 %v1002
        %v1041 = vpop.f32.mrb[0].mxu0
        %v1042 = vadd.f32 0.0, %v1041
        %v1043 = vpop.f32.mrb[0].mxu0
        %v1044 = vpop.f32.mrb[0].mxu0
        %v1045 = vpop.f32.mrb[0].mxu0
        %1046 = vdwg.mxu0
        %v1047 = vpack.c.bf16 %v1042, %v1042
        %1049 = vrot.lane.b32.xlu0 %v825, 8
        %v1050 = vpop.permute.xlu0 %1049
        %1052 = vrot.lane.b32.xlu0 %v936, 16
        %v1053 = vpop.permute.xlu0 %1052
        %1055 = vrot.lane.b32.xlu0 %v1047, 24
        %v1056 = vpop.permute.xlu0 %1055
        %v1059 = vsel %vm605, %v711, %v1050
        %vm1060 = vcmask 130048
        %v1062 = vsel %vm1060, %v1059, %v1053
        %vm1063 = vcmask 195584
        %v1065 = vsel %vm1063, %v1062, %v1056
        %v1066 = vld [vmem:[%s5] sm:$0xf]
        %v1067 = vld [vmem:[%s5 + $0x4] sm:$0xf]
        %v1068 = vld [vmem:[%s5 + $0x8] sm:$0xf]
        %v1069 = vld [vmem:[%s5 + $0xc] sm:$0xf]
        %v1070 = vld [vmem:[%s6] sm:$0x1]
        %v1072 = vlaneseq
        %v1073 = vshrl.u32 %v1072, 7
        %v1074 = vsub.s32 0, %v1073
        %v1075 = vrot.slane %v1070, %v1074
        %v1081 = vunpack.c.l.b16 %v1066
        %v1082 = vunpack.c.l.b16 %v1067
        %v1083 = vunpack.c.l.b16 %v1068
        %v1084 = vunpack.c.l.b16 %v1069
        %v1085 = vpack.c.b16 %v1082, %v1081
        %v1086 = vpack.c.b16 %v1084, %v1083
        %v1089 = vsel %vm421, %v1065, 0
        %1091 = vmatprep.subr.bf16.mxu0 0
        %1092 = vmatpush1.bf16.msra.mxu0 %v1085
        %1093 = vmatprep.subr.bf16.mxu0 0
        %1094 = vmatpush1.bf16.msra.mxu0 %v1086
        %1095 = vmatprep.subr.bf16.mxu0 0
        %1096 = vmatpush1.bf16.msra.mxu0 0
        %1097 = vmatprep.subr.bf16.mxu0 0
        %1098 = vmatpush1.bf16.msra.mxu0 0
        %1099 = vmatprep.subr.bf16.mxu0 0
        %1100 = vmatpush1.bf16.msra.mxu0 0
        %1101 = vmatprep.subr.bf16.mxu0 0
        %1102 = vmatpush1.bf16.msra.mxu0 0
        %1103 = vmatprep.subr.bf16.mxu0 0
        %1104 = vmatpush1.bf16.msra.mxu0 0
        %1105 = vmatprep.subr.bf16.mxu0 0
        %1106 = vmatpush1.bf16.msra.mxu0 0
        %1107 = vmatprep.subr.bf16.mxu0 0
        %1108 = vmatpush1.bf16.msra.mxu0 0
        %1109 = vmatprep.subr.bf16.mxu0 0
        %1110 = vmatpush1.bf16.msra.mxu0 0
        %1111 = vmatprep.subr.bf16.mxu0 0
        %1112 = vmatpush1.bf16.msra.mxu0 0
        %1113 = vmatprep.subr.bf16.mxu0 0
        %1114 = vmatpush1.bf16.msra.mxu0 0
        %1115 = vmatprep.subr.bf16.mxu0 0
        %1116 = vmatpush1.bf16.msra.mxu0 0
        %1117 = vmatprep.subr.bf16.mxu0 0
        %1118 = vmatpush1.bf16.msra.mxu0 0
        %1119 = vmatprep.subr.bf16.mxu0 0
        %1120 = vmatpush1.bf16.msra.mxu0 0
        %1121 = vmatprep.subr.bf16.mxu0 0
        %1122 = vmatpush1.bf16.msra.mxu0 0
        %1123 = vmatprep.mubr.bf16.mxu0 0
        %1124 = vmatmul.mubr.bf16.gmra.mrb[0].mxu0 %v1089
        %v1125 = vpop.f32.mrb[0].mxu0
        %v1126 = vadd.f32 %v1075, %v1125
        %v1127 = vpop.f32.mrb[0].mxu0
        %v1128 = vpop.f32.mrb[0].mxu0
        %v1129 = vpop.f32.mrb[0].mxu0
        %1130 = vdwg.mxu0
        %1131 = vst.msk [vmem:[%s393] sm:$0xff] %vm421, %v1126
        %s1132 = sand.u32 %s198, 1
        %s1133 = scalar_lea.sflag [#allocation4], %s1132
        %s1134 = sand.u32 %s198, 1
        %s1135 = smul.addr %s1134, 8
        %s1136 = scalar_lea.vmem [#allocation11], %s1135
        // Predicated region
        $region69: #{tpu_custom_call.1} parent=47 // pred_check
          %p1137 = pneg %p208
        $region70: #{tpu_custom_call.1} parent=47 // pred_check_branch
          %1139 = sbr.rel (%p1137) target = $region72
        $region71: #{tpu_custom_call.1} parent=47 // pred_region
          %s1141 = ssub.s32 128, 128
          %1142 = vsyncadd %s1133, %s1141
          %s1143 = smul.addr %s28, 128
          %s1144 = scalar_lea.hbm %s7, %s1143
          %s1146 = sshll.u32 %s1136, 4
          %s1147 = int_to_ptr.vmem [resolvable:$true] %s1146
          %1149 = dma.vmem_to_hbm [thread:$0]  %s1147, 128, %s1144, %s1133
        $region72: #{tpu_custom_call.1} parent=47 // pred_fallthru
          _
      $region48: #{tpu_custom_call.1} parent=5 // pred_fallthru
        _
      %p1150 = scmp.le.s32.totalorder 2, %s23
      // Predicated region
      $region73: #{tpu_custom_call.1} parent=5 // pred_check
        %p1151 = pneg %p1150
      $region74: #{tpu_custom_call.1} parent=5 // pred_check_branch
        %1153 = sbr.rel (%p1151) target = $region76
      $region75: #{tpu_custom_call.1} parent=5 // pred_region
        %s1154 = ssub.s32 %s23, 2
        // Predicated region
        $region77: #{tpu_custom_call.1} parent=75 // pred_check
          %p1155 = pneg %p214
        $region78: #{tpu_custom_call.1} parent=75 // pred_check_branch
          %1157 = sbr.rel (%p1155) target = $region80
        $region79: #{tpu_custom_call.1} parent=75 // pred_region
          %s1158 = sand.u32 %s199, 1
          %s1159 = scalar_lea.sflag [#allocation4], %s1158
          %s1160 = sand.u32 %s199, 1
          %s1161 = smul.addr %s1160, 8
          %s1162 = scalar_lea.vmem [#allocation11], %s1161
          %1163 = dma.done %s1159, 128
        $region80: #{tpu_custom_call.1} parent=75 // pred_fallthru
          _
      $region76: #{tpu_custom_call.1} parent=5 // pred_fallthru
        _
    $region6: #{tpu_custom_call.1} parent=1 // loop_footer
      %s27 = sadd.s32 1, %s23
    $region7: #{tpu_custom_call.1} parent=1 // loop_footer_branch
      %22 = sbr.rel target = $region3
    $region8: #{tpu_custom_call.1} parent=1 // loop_exit
      _
    %1164 = vsyncpa [#allocation3], 1
    %s1165 = scalar_lea.sflag [#allocation3], 1
    %1166 = vsyncpa %s1165, 1
    %1167 = vsyncpa [#allocation6], 1
    %s1168 = scalar_lea.sflag [#allocation6], 1
    %1169 = vsyncpa %s1168, 1
    %1170 = vsyncpa [#allocation9], 1
    %1171 = vsyncpa [#allocation4], 1
    %s1172 = scalar_lea.sflag [#allocation4], 1
    %1173 = vsyncpa %s1172, 1

</llo_original>
